<compile_context>
chip_gen: v7x
topology: tpu7x:2x2x1
jax: 0.10.0
libtpu: 0.0.40
codegen_flags: <defaults>
</compile_context>

<pallas_src>
import functools

import jax
import jax.numpy as jnp
from jax.experimental import pallas as pl
from jax.experimental.pallas import tpu as pltpu

HAND_CLASS = 85

# ---------------- model hyperparameters (small, consistent with the module) ----
NUM_CLASS = 16
NUM_SEGMENTS = 4          # main TSN segments
HAND_SEGMENTS = 2         # hand TSN segments (fixed to 2 in JointTSN)
IMG_FEATURE_DIM = 256
FEATURE_DIM = 2048        # resnet101 fc.in_features (collapsed away at init)
BOTTLENECK = 512          # TRN RelationModule bottleneck
H = W = 16
CIN = 3                   # RGB, new_length = 1 -> sample_len = 3
K_IN = CIN * H * W        # flattened frame size = 768

# lane-dense padded logit widths (zero-padded weight columns, sliced in wrapper)
NUM_CLASS_PAD = 128       # >= NUM_CLASS, multiple of 128
HS_PAD = 256              # >= HAND_CLASS*2 (=170), multiple of 128


# ---------------------------- fused Pallas kernel --------------------------------
def _joint_tsn_kernel(
        xm_ref, xh_ref,                                   # tile of frames (bf16)
        wm_ref, bm_ref, wh_ref, bh_ref,                   # collapsed feature heads
        w1m_ref, b1m_ref, w2m_ref, b2m_ref,               # main RelationModule
        w1h_ref, b1h_ref, w2h_ref, b2h_ref,               # hand RelationModule (class)
        w1hs_ref, b1hs_ref, w2hs_ref, b2hs_ref,           # handshape RelationModule
        wat_ref, wab_ref, bagg_ref,                       # agg_classifier (split)
        agg_ref, hs_ref,                                  # outputs
        *, tile_b):
    """One grid step == TILE_B videos (4 main frames + 2 hand clips x 2 frames each).

    Row layouts inside the tile (all contiguous, sublane-aligned):
      xm_ref: (4*T, 768)  rows = [seg0 videos | seg1 videos | seg2 | seg3]
      xh_ref: (4*T, 768)  rows = [seg0-clip0 | seg0-clip1 | seg1-clip0 | seg1-clip1]
    """
    f32, bf16 = jnp.float32, jnp.bfloat16
    T = tile_b

    # ---- main branch: collapsed backbone+new_fc, then RelationModule(256,4,16) ----
    rm = jnp.maximum(
        jnp.dot(xm_ref[...], wm_ref[...], preferred_element_type=f32) + bm_ref[...],
        0.0).astype(bf16)                                              # (4T, 256)
    # Linear over concatenated segments == sum of per-segment matmuls.
    h = jnp.dot(rm[0:T], w1m_ref[0], preferred_element_type=f32)
    for s in range(1, NUM_SEGMENTS):
        h = h + jnp.dot(rm[s * T:(s + 1) * T], w1m_ref[s],
                        preferred_element_type=f32)
    h = h + b1m_ref[...]                                               # (T, 512)
    out_main = jnp.dot(jnp.maximum(h, 0.0).astype(bf16), w2m_ref[...],
                       preferred_element_type=f32) + b2m_ref[...]      # (T, 128)

    # ---- hand branch: features for all 2T clips at once ----
    rh = jnp.maximum(
        jnp.dot(xh_ref[...], wh_ref[...], preferred_element_type=f32) + bh_ref[...],
        0.0).astype(bf16)                                              # (4T, 256)
    rh0 = rh[0:2 * T]            # segment 0 of every clip (clip0 videos | clip1 videos)
    rh1 = rh[2 * T:4 * T]        # segment 1 of every clip

    def relation2(w1_ref, b1_ref, w2_ref, b2_ref):
        hh = (jnp.dot(rh0, w1_ref[0], preferred_element_type=f32)
              + jnp.dot(rh1, w1_ref[1], preferred_element_type=f32)
              + b1_ref[...])                                           # (2T, 512)
        return jnp.dot(jnp.maximum(hh, 0.0).astype(bf16), w2_ref[...],
                       preferred_element_type=f32) + b2_ref[...]

    o2 = relation2(w1h_ref, b1h_ref, w2h_ref, b2h_ref)                 # (2T, 128)
    hs = relation2(w1hs_ref, b1hs_ref, w2hs_ref, b2hs_ref)             # (2T, 256)

    # ---- AvgPool1d(k=2) over the two adjacent hand clips of each video ----
    pooled = 0.5 * (o2[0:T] + o2[T:2 * T])                             # (T, 128)

    # ---- agg_classifier: ReLU(concat(main, pooled)) -> Linear(2C, C), split ----
    agg_ref[...] = (jnp.dot(jnp.maximum(out_main, 0.0).astype(bf16), wat_ref[...],
                            preferred_element_type=f32)
                    + jnp.dot(jnp.maximum(pooled, 0.0).astype(bf16), wab_ref[...],
                              preferred_element_type=f32)
                    + bagg_ref[...])                                   # (T, 128)
    hs_ref[...] = hs                                                   # (2T, 256)


# ---------------------------- parameters ----------------------------------------
def init_params(key):
    f32, bf16 = jnp.float32, jnp.bfloat16
    ks = jax.random.split(key, 18)

    def dense(k, shape, scale):
        return scale * jax.random.normal(k, shape, f32)

    def pad_cols(a, width):
        return jnp.pad(a, ((0, 0), (0, width - a.shape[1])))

    # backbone stub (flatten+linear -> 2048) and new_fc (2048 -> 256, std=0.001, bias 0)
    w_feat_m = dense(ks[0], (K_IN, FEATURE_DIM), 0.02)
    b_feat_m = jnp.zeros((1, FEATURE_DIM), f32)
    w_fc_m = dense(ks[1], (FEATURE_DIM, IMG_FEATURE_DIM), 0.001)
    b_fc_m = jnp.zeros((1, IMG_FEATURE_DIM), f32)
    w_feat_h = dense(ks[2], (K_IN, FEATURE_DIM), 0.02)
    b_feat_h = jnp.zeros((1, FEATURE_DIM), f32)
    w_fc_h = dense(ks[3], (FEATURE_DIM, IMG_FEATURE_DIM), 0.001)
    b_fc_h = jnp.zeros((1, IMG_FEATURE_DIM), f32)

    p = {}
    # exact collapse: (x@Wf + bf)@Wp + bp == x@(Wf@Wp) + (bf@Wp + bp)
    p["w_m"] = (w_feat_m @ w_fc_m).astype(bf16)          # (768, 256) bf16
    p["b_m"] = b_feat_m @ w_fc_m + b_fc_m                # (1, 256) f32
    p["w_h"] = (w_feat_h @ w_fc_h).astype(bf16)
    p["b_h"] = b_feat_h @ w_fc_h + b_fc_h

    # main consensus: RelationModule(256, NUM_SEGMENTS, NUM_CLASS); w1 stored per segment
    p["w1_m"] = dense(ks[4], (NUM_SEGMENTS * IMG_FEATURE_DIM, BOTTLENECK), 0.02).reshape(
        NUM_SEGMENTS, IMG_FEATURE_DIM, BOTTLENECK).astype(bf16)
    p["b1_m"] = dense(ks[5], (1, BOTTLENECK), 0.01)
    p["w2_m"] = pad_cols(dense(ks[6], (BOTTLENECK, NUM_CLASS), 0.02), NUM_CLASS_PAD).astype(bf16)
    p["b2_m"] = pad_cols(dense(ks[7], (1, NUM_CLASS), 0.01), NUM_CLASS_PAD)

    # hand consensus: RelationModule(256, 2, NUM_CLASS), lane-padded to 128
    p["w1_h"] = dense(ks[8], (HAND_SEGMENTS * IMG_FEATURE_DIM, BOTTLENECK), 0.02).reshape(
        HAND_SEGMENTS, IMG_FEATURE_DIM, BOTTLENECK).astype(bf16)
    p["b1_h"] = dense(ks[9], (1, BOTTLENECK), 0.01)
    p["w2_h"] = pad_cols(dense(ks[10], (BOTTLENECK, NUM_CLASS), 0.02), NUM_CLASS_PAD).astype(bf16)
    p["b2_h"] = pad_cols(dense(ks[11], (1, NUM_CLASS), 0.01), NUM_CLASS_PAD)

    # handshape consensus: RelationModule(256, 2, HAND_CLASS*2), lane-padded to 256
    p["w1_hs"] = dense(ks[12], (HAND_SEGMENTS * IMG_FEATURE_DIM, BOTTLENECK), 0.02).reshape(
        HAND_SEGMENTS, IMG_FEATURE_DIM, BOTTLENECK).astype(bf16)
    p["b1_hs"] = dense(ks[13], (1, BOTTLENECK), 0.01)
    p["w2_hs"] = pad_cols(dense(ks[14], (BOTTLENECK, HAND_CLASS * 2), 0.02), HS_PAD).astype(bf16)
    p["b2_hs"] = pad_cols(dense(ks[15], (1, HAND_CLASS * 2), 0.01), HS_PAD)

    # agg_classifier: ReLU + Linear(2*NUM_CLASS, NUM_CLASS); split into main / pooled-hand
    # halves and zero-padded to (128, 128) so all intermediates stay lane/sublane dense.
    w_agg = dense(ks[16], (2 * NUM_CLASS, NUM_CLASS), 0.02)
    b_agg = dense(ks[17], (1, NUM_CLASS), 0.01)
    w_top = jnp.zeros((NUM_CLASS_PAD, NUM_CLASS_PAD), f32)
    w_top = w_top.at[:NUM_CLASS, :NUM_CLASS].set(w_agg[:NUM_CLASS])
    w_bot = jnp.zeros((NUM_CLASS_PAD, NUM_CLASS_PAD), f32)
    w_bot = w_bot.at[:NUM_CLASS, :NUM_CLASS].set(w_agg[NUM_CLASS:])
    p["w_agg_top"] = w_top.astype(bf16)    # multiplies ReLU(main-branch logits)
    p["w_agg_bot"] = w_bot.astype(bf16)    # multiplies ReLU(pooled hand logits)
    p["b_agg"] = pad_cols(b_agg, NUM_CLASS_PAD)
    return p


# ---------------------------- forward --------------------------------------------
def _const_spec(shape):
    nd = len(shape)
    return pl.BlockSpec(shape, lambda t, _nd=nd: (0,) * _nd)   # resident across grid


def joint_tsn_forward(params, x, x_hand, tile_b=None):
    B = x.shape[0]
    assert x_hand.shape[0] == 2 * B   # two hand clips per video, adjacent in batch axis
    bf16 = jnp.bfloat16

    # TILE_B: multiple of 8 (sublane alignment), capped at 64 (M ~ 256 in the
    # feature-head matmuls on v6e/v7x).  Batch is zero-padded up to a multiple.
    if tile_b is None:
        tile_b = max(8, min(64, ((B + 7) // 8) * 8))
    n_tiles = -(-B // tile_b)
    b_pad = n_tiles * tile_b

    # main frames: (B, 12, H, W) -> (B, seg, 768) -> tile-major, segment-major rows
    xm = x.reshape(B, NUM_SEGMENTS, K_IN)
    xm = jnp.pad(xm, ((0, b_pad - B), (0, 0), (0, 0)))
    xm = xm.reshape(n_tiles, tile_b, NUM_SEGMENTS, K_IN).transpose(0, 2, 1, 3)
    xm = xm.reshape(n_tiles * NUM_SEGMENTS * tile_b, K_IN).astype(bf16)

    # hand frames: (2B, 6, H, W) -> (B, clip, seg, 768) -> tile-major [seg][clip][video]
    xh = x_hand.reshape(B, 2, HAND_SEGMENTS, K_IN)
    xh = jnp.pad(xh, ((0, b_pad - B), (0, 0), (0, 0), (0, 0)))
    xh = xh.reshape(n_tiles, tile_b, 2, HAND_SEGMENTS, K_IN).transpose(0, 3, 2, 1, 4)
    xh = xh.reshape(n_tiles * 2 * HAND_SEGMENTS * tile_b, K_IN).astype(bf16)

    weight_names = ["w_m", "b_m", "w_h", "b_h",
                    "w1_m", "b1_m", "w2_m", "b2_m",
                    "w1_h", "b1_h", "w2_h", "b2_h",
                    "w1_hs", "b1_hs", "w2_hs", "b2_hs",
                    "w_agg_top", "w_agg_bot", "b_agg"]
    weights = [params[n] for n in weight_names]

    in_specs = (
        [pl.BlockSpec((NUM_SEGMENTS * tile_b, K_IN), lambda t: (t, 0)),
         pl.BlockSpec((2 * HAND_SEGMENTS * tile_b, K_IN), lambda t: (t, 0))]
        + [_const_spec(w.shape) for w in weights])
    out_specs = [
        pl.BlockSpec((tile_b, NUM_CLASS_PAD), lambda t: (t, 0)),
        pl.BlockSpec((2 * tile_b, HS_PAD), lambda t: (t, 0)),
    ]
    out_shape = (jax.ShapeDtypeStruct((b_pad, NUM_CLASS_PAD), jnp.float32),
                 jax.ShapeDtypeStruct((2 * b_pad, HS_PAD), jnp.float32))

    agg_pad, hs_pad = pl.pallas_call(
        functools.partial(_joint_tsn_kernel, tile_b=tile_b),
        grid=(n_tiles,),                               # one tile of videos per step
        in_specs=in_specs,
        out_specs=out_specs,
        out_shape=out_shape,
        compiler_params=pltpu.CompilerParams(
            dimension_semantics=("parallel",),         # both TCs on v7x when n_tiles >= 2
            vmem_limit_bytes=32 * 1024 * 1024),        # ~10 MB used; fits v5e/v6e/v7x
    )(xm, xh, *weights)

    # main output: slice off batch pad and zero lane-pad columns
    out = agg_pad[:B, :NUM_CLASS]

    # handshape output: per tile rows are [clip0 videos | clip1 videos]; restore
    # PyTorch ordering (row 2b + clip) with a cheap wrapper-side reorder.
    hs = hs_pad.reshape(n_tiles, 2, tile_b, HS_PAD).transpose(0, 2, 1, 3)
    hs = hs.reshape(2 * b_pad, HS_PAD)
    out_handshape = hs[:2 * B, :HAND_CLASS * 2]

    # .squeeze(1) in the module is a no-op here (NUM_CLASS != 1, HAND_CLASS*2 != 1)
    return out, out_handshape


if __name__ == "__main__":
    key = jax.random.PRNGKey(0)
    kp, kx, kh = jax.random.split(key, 3)
    params = init_params(kp)

    B = 2
    x = jax.random.normal(kx, (B, NUM_SEGMENTS * CIN, H, W), jnp.float32)            # (2, 12, 16, 16)
    x_hand = jax.random.normal(kh, (2 * B, HAND_SEGMENTS * CIN, H, W), jnp.float32)  # (4, 6, 16, 16)

    fwd = jax.jit(joint_tsn_forward)
    out, out_handshape = fwd(params, x, x_hand)
    jax.block_until_ready((out, out_handshape))

    assert out.shape == (B, NUM_CLASS)
    assert out_handshape.shape == (2 * B, HAND_CLASS * 2)
    assert bool(jnp.all(jnp.isfinite(out)))
    assert bool(jnp.all(jnp.isfinite(out_handshape)))
    print("KERNEL_OK")
</pallas_src>

<mosaic_0001>
module attributes {stable_mosaic.version = 11 : i64} {
  func.func @_joint_tsn_kernel(%arg0: i32, %arg1: memref<32x768xbf16, #tpu.memory_space<vmem>>, %arg2: memref<32x768xbf16, #tpu.memory_space<vmem>>, %arg3: memref<768x256xbf16, #tpu.memory_space<vmem>>, %arg4: memref<1x256xf32, #tpu.memory_space<vmem>>, %arg5: memref<768x256xbf16, #tpu.memory_space<vmem>>, %arg6: memref<1x256xf32, #tpu.memory_space<vmem>>, %arg7: memref<4x256x512xbf16, #tpu.memory_space<vmem>>, %arg8: memref<1x512xf32, #tpu.memory_space<vmem>>, %arg9: memref<512x128xbf16, #tpu.memory_space<vmem>>, %arg10: memref<1x128xf32, #tpu.memory_space<vmem>>, %arg11: memref<2x256x512xbf16, #tpu.memory_space<vmem>>, %arg12: memref<1x512xf32, #tpu.memory_space<vmem>>, %arg13: memref<512x128xbf16, #tpu.memory_space<vmem>>, %arg14: memref<1x128xf32, #tpu.memory_space<vmem>>, %arg15: memref<2x256x512xbf16, #tpu.memory_space<vmem>>, %arg16: memref<1x512xf32, #tpu.memory_space<vmem>>, %arg17: memref<512x256xbf16, #tpu.memory_space<vmem>>, %arg18: memref<1x256xf32, #tpu.memory_space<vmem>>, %arg19: memref<128x128xbf16, #tpu.memory_space<vmem>>, %arg20: memref<128x128xbf16, #tpu.memory_space<vmem>>, %arg21: memref<1x128xf32, #tpu.memory_space<vmem>>, %arg22: memref<8x128xf32, #tpu.memory_space<vmem>>, %arg23: memref<16x256xf32, #tpu.memory_space<vmem>>) attributes {dimension_semantics = [#tpu.dimension_semantics<parallel>], iteration_bounds = array<i64: 1>, scalar_prefetch = 0 : i64, scratch_operands = 0 : i64, tpu.core_type = #tpu.core_type<tc>, window_params = [{transform_indices = @transform_0, window_bounds = array<i64: 32, 768>}, {transform_indices = @transform_1, window_bounds = array<i64: 32, 768>}, {pipeline_mode = #tpu.pipeline_mode<synchronous>, transform_indices = @transform_2, window_bounds = array<i64: 768, 256>}, {pipeline_mode = #tpu.pipeline_mode<synchronous>, transform_indices = @transform_3, window_bounds = array<i64: 1, 256>}, {pipeline_mode = #tpu.pipeline_mode<synchronous>, transform_indices = @transform_4, window_bounds = array<i64: 768, 256>}, {pipeline_mode = #tpu.pipeline_mode<synchronous>, transform_indices = @transform_5, window_bounds = array<i64: 1, 256>}, {pipeline_mode = #tpu.pipeline_mode<synchronous>, transform_indices = @transform_6, window_bounds = array<i64: 4, 256, 512>}, {pipeline_mode = #tpu.pipeline_mode<synchronous>, transform_indices = @transform_7, window_bounds = array<i64: 1, 512>}, {pipeline_mode = #tpu.pipeline_mode<synchronous>, transform_indices = @transform_8, window_bounds = array<i64: 512, 128>}, {pipeline_mode = #tpu.pipeline_mode<synchronous>, transform_indices = @transform_9, window_bounds = array<i64: 1, 128>}, {pipeline_mode = #tpu.pipeline_mode<synchronous>, transform_indices = @transform_10, window_bounds = array<i64: 2, 256, 512>}, {pipeline_mode = #tpu.pipeline_mode<synchronous>, transform_indices = @transform_11, window_bounds = array<i64: 1, 512>}, {pipeline_mode = #tpu.pipeline_mode<synchronous>, transform_indices = @transform_12, window_bounds = array<i64: 512, 128>}, {pipeline_mode = #tpu.pipeline_mode<synchronous>, transform_indices = @transform_13, window_bounds = array<i64: 1, 128>}, {pipeline_mode = #tpu.pipeline_mode<synchronous>, transform_indices = @transform_14, window_bounds = array<i64: 2, 256, 512>}, {pipeline_mode = #tpu.pipeline_mode<synchronous>, transform_indices = @transform_15, window_bounds = array<i64: 1, 512>}, {pipeline_mode = #tpu.pipeline_mode<synchronous>, transform_indices = @transform_16, window_bounds = array<i64: 512, 256>}, {pipeline_mode = #tpu.pipeline_mode<synchronous>, transform_indices = @transform_17, window_bounds = array<i64: 1, 256>}, {pipeline_mode = #tpu.pipeline_mode<synchronous>, transform_indices = @transform_18, window_bounds = array<i64: 128, 128>}, {pipeline_mode = #tpu.pipeline_mode<synchronous>, transform_indices = @transform_19, window_bounds = array<i64: 128, 128>}, {pipeline_mode = #tpu.pipeline_mode<synchronous>, transform_indices = @transform_20, window_bounds = array<i64: 1, 128>}, {transform_indices = @transform_21, window_bounds = array<i64: 8, 128>}, {transform_indices = @transform_22, window_bounds = array<i64: 16, 256>}]} {
    %c0 = arith.constant 0 : index
    %c0_0 = arith.constant 0 : index
    %0 = vector.load %arg1[%c0, %c0_0] : memref<32x768xbf16, #tpu.memory_space<vmem>>, vector<32x768xbf16>
    %c0_1 = arith.constant 0 : index
    %c0_2 = arith.constant 0 : index
    %1 = vector.load %arg3[%c0_1, %c0_2] : memref<768x256xbf16, #tpu.memory_space<vmem>>, vector<768x256xbf16>
    %cst = arith.constant dense<0.000000e+00> : vector<32x256xf32>
    %2 = tpu.matmul %0, %1, %cst {dimension_numbers = #tpu.dot_dimension_numbers<[1], [0], [0], [1], [0, 0, 1, 1], [], []>} : vector<32x768xbf16>, vector<768x256xbf16>, vector<32x256xf32> -> vector<32x256xf32>
    %c0_3 = arith.constant 0 : index
    %c0_4 = arith.constant 0 : index
    %3 = vector.load %arg4[%c0_3, %c0_4] : memref<1x256xf32, #tpu.memory_space<vmem>>, vector<1x256xf32>
    %4 = vector.broadcast %3 : vector<1x256xf32> to vector<32x256xf32>
    %5 = arith.addf %2, %4 : vector<32x256xf32>
    %cst_5 = arith.constant 0.000000e+00 : f32
    %6 = vector.broadcast %cst_5 : f32 to vector<32x256xf32>
    %7 = arith.maximumf %5, %6 : vector<32x256xf32>
    %8 = arith.truncf %7 : vector<32x256xf32> to vector<32x256xbf16>
    %9 = vector.extract_strided_slice %8 {offsets = [0, 0], sizes = [8, 256], strides = [1, 1]} : vector<32x256xbf16> to vector<8x256xbf16>
    %c0_6 = arith.constant 0 : index
    %c0_7 = arith.constant 0 : index
    %c0_8 = arith.constant 0 : index
    %10 = vector.load %arg7[%c0_6, %c0_7, %c0_8] : memref<4x256x512xbf16, #tpu.memory_space<vmem>>, vector<1x256x512xbf16>
    %11 = vector.shape_cast %10 : vector<1x256x512xbf16> to vector<256x512xbf16>
    %cst_9 = arith.constant dense<0.000000e+00> : vector<8x512xf32>
    %12 = tpu.matmul %9, %11, %cst_9 {dimension_numbers = #tpu.dot_dimension_numbers<[1], [0], [0], [1], [0, 0, 1, 1], [], []>} : vector<8x256xbf16>, vector<256x512xbf16>, vector<8x512xf32> -> vector<8x512xf32>
    %13 = vector.extract_strided_slice %8 {offsets = [8, 0], sizes = [8, 256], strides = [1, 1]} : vector<32x256xbf16> to vector<8x256xbf16>
    %c1 = arith.constant 1 : index
    %c0_10 = arith.constant 0 : index
    %c0_11 = arith.constant 0 : index
    %14 = vector.load %arg7[%c1, %c0_10, %c0_11] : memref<4x256x512xbf16, #tpu.memory_space<vmem>>, vector<1x256x512xbf16>
    %15 = vector.shape_cast %14 : vector<1x256x512xbf16> to vector<256x512xbf16>
    %cst_12 = arith.constant dense<0.000000e+00> : vector<8x512xf32>
    %16 = tpu.matmul %13, %15, %cst_12 {dimension_numbers = #tpu.dot_dimension_numbers<[1], [0], [0], [1], [0, 0, 1, 1], [], []>} : vector<8x256xbf16>, vector<256x512xbf16>, vector<8x512xf32> -> vector<8x512xf32>
    %17 = arith.addf %12, %16 : vector<8x512xf32>
    %18 = vector.extract_strided_slice %8 {offsets = [16, 0], sizes = [8, 256], strides = [1, 1]} : vector<32x256xbf16> to vector<8x256xbf16>
    %c2 = arith.constant 2 : index
    %c0_13 = arith.constant 0 : index
    %c0_14 = arith.constant 0 : index
    %19 = vector.load %arg7[%c2, %c0_13, %c0_14] : memref<4x256x512xbf16, #tpu.memory_space<vmem>>, vector<1x256x512xbf16>
    %20 = vector.shape_cast %19 : vector<1x256x512xbf16> to vector<256x512xbf16>
    %cst_15 = arith.constant dense<0.000000e+00> : vector<8x512xf32>
    %21 = tpu.matmul %18, %20, %cst_15 {dimension_numbers = #tpu.dot_dimension_numbers<[1], [0], [0], [1], [0, 0, 1, 1], [], []>} : vector<8x256xbf16>, vector<256x512xbf16>, vector<8x512xf32> -> vector<8x512xf32>
    %22 = arith.addf %17, %21 : vector<8x512xf32>
    %23 = vector.extract_strided_slice %8 {offsets = [24, 0], sizes = [8, 256], strides = [1, 1]} : vector<32x256xbf16> to vector<8x256xbf16>
    %c3 = arith.constant 3 : index
    %c0_16 = arith.constant 0 : index
    %c0_17 = arith.constant 0 : index
    %24 = vector.load %arg7[%c3, %c0_16, %c0_17] : memref<4x256x512xbf16, #tpu.memory_space<vmem>>, vector<1x256x512xbf16>
    %25 = vector.shape_cast %24 : vector<1x256x512xbf16> to vector<256x512xbf16>
    %cst_18 = arith.constant dense<0.000000e+00> : vector<8x512xf32>
    %26 = tpu.matmul %23, %25, %cst_18 {dimension_numbers = #tpu.dot_dimension_numbers<[1], [0], [0], [1], [0, 0, 1, 1], [], []>} : vector<8x256xbf16>, vector<256x512xbf16>, vector<8x512xf32> -> vector<8x512xf32>
    %27 = arith.addf %22, %26 : vector<8x512xf32>
    %c0_19 = arith.constant 0 : index
    %c0_20 = arith.constant 0 : index
    %28 = vector.load %arg8[%c0_19, %c0_20] : memref<1x512xf32, #tpu.memory_space<vmem>>, vector<1x512xf32>
    %29 = vector.broadcast %28 : vector<1x512xf32> to vector<8x512xf32>
    %30 = arith.addf %27, %29 : vector<8x512xf32>
    %cst_21 = arith.constant 0.000000e+00 : f32
    %31 = vector.broadcast %cst_21 : f32 to vector<8x512xf32>
    %32 = arith.maximumf %30, %31 : vector<8x512xf32>
    %33 = arith.truncf %32 : vector<8x512xf32> to vector<8x512xbf16>
    %c0_22 = arith.constant 0 : index
    %c0_23 = arith.constant 0 : index
    %34 = vector.load %arg9[%c0_22, %c0_23] : memref<512x128xbf16, #tpu.memory_space<vmem>>, vector<512x128xbf16>
    %cst_24 = arith.constant dense<0.000000e+00> : vector<8x128xf32>
    %35 = tpu.matmul %33, %34, %cst_24 {dimension_numbers = #tpu.dot_dimension_numbers<[1], [0], [0], [1], [0, 0, 1, 1], [], []>} : vector<8x512xbf16>, vector<512x128xbf16>, vector<8x128xf32> -> vector<8x128xf32>
    %c0_25 = arith.constant 0 : index
    %c0_26 = arith.constant 0 : index
    %36 = vector.load %arg10[%c0_25, %c0_26] : memref<1x128xf32, #tpu.memory_space<vmem>>, vector<1x128xf32>
    %37 = vector.broadcast %36 : vector<1x128xf32> to vector<8x128xf32>
    %38 = arith.addf %35, %37 : vector<8x128xf32>
    %c0_27 = arith.constant 0 : index
    %c0_28 = arith.constant 0 : index
    %39 = vector.load %arg2[%c0_27, %c0_28] : memref<32x768xbf16, #tpu.memory_space<vmem>>, vector<32x768xbf16>
    %c0_29 = arith.constant 0 : index
    %c0_30 = arith.constant 0 : index
    %40 = vector.load %arg5[%c0_29, %c0_30] : memref<768x256xbf16, #tpu.memory_space<vmem>>, vector<768x256xbf16>
    %cst_31 = arith.constant dense<0.000000e+00> : vector<32x256xf32>
    %41 = tpu.matmul %39, %40, %cst_31 {dimension_numbers = #tpu.dot_dimension_numbers<[1], [0], [0], [1], [0, 0, 1, 1], [], []>} : vector<32x768xbf16>, vector<768x256xbf16>, vector<32x256xf32> -> vector<32x256xf32>
    %c0_32 = arith.constant 0 : index
    %c0_33 = arith.constant 0 : index
    %42 = vector.load %arg6[%c0_32, %c0_33] : memref<1x256xf32, #tpu.memory_space<vmem>>, vector<1x256xf32>
    %43 = vector.broadcast %42 : vector<1x256xf32> to vector<32x256xf32>
    %44 = arith.addf %41, %43 : vector<32x256xf32>
    %cst_34 = arith.constant 0.000000e+00 : f32
    %45 = vector.broadcast %cst_34 : f32 to vector<32x256xf32>
    %46 = arith.maximumf %44, %45 : vector<32x256xf32>
    %47 = arith.truncf %46 : vector<32x256xf32> to vector<32x256xbf16>
    %48 = vector.extract_strided_slice %47 {offsets = [0, 0], sizes = [16, 256], strides = [1, 1]} : vector<32x256xbf16> to vector<16x256xbf16>
    %49 = vector.extract_strided_slice %47 {offsets = [16, 0], sizes = [16, 256], strides = [1, 1]} : vector<32x256xbf16> to vector<16x256xbf16>
    %c0_35 = arith.constant 0 : index
    %c0_36 = arith.constant 0 : index
    %c0_37 = arith.constant 0 : index
    %50 = vector.load %arg11[%c0_35, %c0_36, %c0_37] : memref<2x256x512xbf16, #tpu.memory_space<vmem>>, vector<1x256x512xbf16>
    %51 = vector.shape_cast %50 : vector<1x256x512xbf16> to vector<256x512xbf16>
    %cst_38 = arith.constant dense<0.000000e+00> : vector<16x512xf32>
    %52 = tpu.matmul %48, %51, %cst_38 {dimension_numbers = #tpu.dot_dimension_numbers<[1], [0], [0], [1], [0, 0, 1, 1], [], []>} : vector<16x256xbf16>, vector<256x512xbf16>, vector<16x512xf32> -> vector<16x512xf32>
    %c1_39 = arith.constant 1 : index
    %c0_40 = arith.constant 0 : index
    %c0_41 = arith.constant 0 : index
    %53 = vector.load %arg11[%c1_39, %c0_40, %c0_41] : memref<2x256x512xbf16, #tpu.memory_space<vmem>>, vector<1x256x512xbf16>
    %54 = vector.shape_cast %53 : vector<1x256x512xbf16> to vector<256x512xbf16>
    %cst_42 = arith.constant dense<0.000000e+00> : vector<16x512xf32>
    %55 = tpu.matmul %49, %54, %cst_42 {dimension_numbers = #tpu.dot_dimension_numbers<[1], [0], [0], [1], [0, 0, 1, 1], [], []>} : vector<16x256xbf16>, vector<256x512xbf16>, vector<16x512xf32> -> vector<16x512xf32>
    %56 = arith.addf %52, %55 : vector<16x512xf32>
    %c0_43 = arith.constant 0 : index
    %c0_44 = arith.constant 0 : index
    %57 = vector.load %arg12[%c0_43, %c0_44] : memref<1x512xf32, #tpu.memory_space<vmem>>, vector<1x512xf32>
    %58 = vector.broadcast %57 : vector<1x512xf32> to vector<16x512xf32>
    %59 = arith.addf %56, %58 : vector<16x512xf32>
    %cst_45 = arith.constant 0.000000e+00 : f32
    %60 = vector.broadcast %cst_45 : f32 to vector<16x512xf32>
    %61 = arith.maximumf %59, %60 : vector<16x512xf32>
    %62 = arith.truncf %61 : vector<16x512xf32> to vector<16x512xbf16>
    %c0_46 = arith.constant 0 : index
    %c0_47 = arith.constant 0 : index
    %63 = vector.load %arg13[%c0_46, %c0_47] : memref<512x128xbf16, #tpu.memory_space<vmem>>, vector<512x128xbf16>
    %cst_48 = arith.constant dense<0.000000e+00> : vector<16x128xf32>
    %64 = tpu.matmul %62, %63, %cst_48 {dimension_numbers = #tpu.dot_dimension_numbers<[1], [0], [0], [1], [0, 0, 1, 1], [], []>} : vector<16x512xbf16>, vector<512x128xbf16>, vector<16x128xf32> -> vector<16x128xf32>
    %c0_49 = arith.constant 0 : index
    %c0_50 = arith.constant 0 : index
    %65 = vector.load %arg14[%c0_49, %c0_50] : memref<1x128xf32, #tpu.memory_space<vmem>>, vector<1x128xf32>
    %66 = vector.broadcast %65 : vector<1x128xf32> to vector<16x128xf32>
    %67 = arith.addf %64, %66 : vector<16x128xf32>
    %c0_51 = arith.constant 0 : index
    %c0_52 = arith.constant 0 : index
    %c0_53 = arith.constant 0 : index
    %68 = vector.load %arg15[%c0_51, %c0_52, %c0_53] : memref<2x256x512xbf16, #tpu.memory_space<vmem>>, vector<1x256x512xbf16>
    %69 = vector.shape_cast %68 : vector<1x256x512xbf16> to vector<256x512xbf16>
    %cst_54 = arith.constant dense<0.000000e+00> : vector<16x512xf32>
    %70 = tpu.matmul %48, %69, %cst_54 {dimension_numbers = #tpu.dot_dimension_numbers<[1], [0], [0], [1], [0, 0, 1, 1], [], []>} : vector<16x256xbf16>, vector<256x512xbf16>, vector<16x512xf32> -> vector<16x512xf32>
    %c1_55 = arith.constant 1 : index
    %c0_56 = arith.constant 0 : index
    %c0_57 = arith.constant 0 : index
    %71 = vector.load %arg15[%c1_55, %c0_56, %c0_57] : memref<2x256x512xbf16, #tpu.memory_space<vmem>>, vector<1x256x512xbf16>
    %72 = vector.shape_cast %71 : vector<1x256x512xbf16> to vector<256x512xbf16>
    %cst_58 = arith.constant dense<0.000000e+00> : vector<16x512xf32>
    %73 = tpu.matmul %49, %72, %cst_58 {dimension_numbers = #tpu.dot_dimension_numbers<[1], [0], [0], [1], [0, 0, 1, 1], [], []>} : vector<16x256xbf16>, vector<256x512xbf16>, vector<16x512xf32> -> vector<16x512xf32>
    %74 = arith.addf %70, %73 : vector<16x512xf32>
    %c0_59 = arith.constant 0 : index
    %c0_60 = arith.constant 0 : index
    %75 = vector.load %arg16[%c0_59, %c0_60] : memref<1x512xf32, #tpu.memory_space<vmem>>, vector<1x512xf32>
    %76 = vector.broadcast %75 : vector<1x512xf32> to vector<16x512xf32>
    %77 = arith.addf %74, %76 : vector<16x512xf32>
    %cst_61 = arith.constant 0.000000e+00 : f32
    %78 = vector.broadcast %cst_61 : f32 to vector<16x512xf32>
    %79 = arith.maximumf %77, %78 : vector<16x512xf32>
    %80 = arith.truncf %79 : vector<16x512xf32> to vector<16x512xbf16>
    %c0_62 = arith.constant 0 : index
    %c0_63 = arith.constant 0 : index
    %81 = vector.load %arg17[%c0_62, %c0_63] : memref<512x256xbf16, #tpu.memory_space<vmem>>, vector<512x256xbf16>
    %cst_64 = arith.constant dense<0.000000e+00> : vector<16x256xf32>
    %82 = tpu.matmul %80, %81, %cst_64 {dimension_numbers = #tpu.dot_dimension_numbers<[1], [0], [0], [1], [0, 0, 1, 1], [], []>} : vector<16x512xbf16>, vector<512x256xbf16>, vector<16x256xf32> -> vector<16x256xf32>
    %c0_65 = arith.constant 0 : index
    %c0_66 = arith.constant 0 : index
    %83 = vector.load %arg18[%c0_65, %c0_66] : memref<1x256xf32, #tpu.memory_space<vmem>>, vector<1x256xf32>
    %84 = vector.broadcast %83 : vector<1x256xf32> to vector<16x256xf32>
    %85 = arith.addf %82, %84 : vector<16x256xf32>
    %86 = vector.extract_strided_slice %67 {offsets = [0, 0], sizes = [8, 128], strides = [1, 1]} : vector<16x128xf32> to vector<8x128xf32>
    %87 = vector.extract_strided_slice %67 {offsets = [8, 0], sizes = [8, 128], strides = [1, 1]} : vector<16x128xf32> to vector<8x128xf32>
    %88 = arith.addf %86, %87 : vector<8x128xf32>
    %cst_67 = arith.constant 5.000000e-01 : f32
    %89 = vector.broadcast %cst_67 : f32 to vector<8x128xf32>
    %90 = arith.mulf %89, %88 : vector<8x128xf32>
    %cst_68 = arith.constant 0.000000e+00 : f32
    %91 = vector.broadcast %cst_68 : f32 to vector<8x128xf32>
    %92 = arith.maximumf %38, %91 : vector<8x128xf32>
    %93 = arith.truncf %92 : vector<8x128xf32> to vector<8x128xbf16>
    %c0_69 = arith.constant 0 : index
    %c0_70 = arith.constant 0 : index
    %94 = vector.load %arg19[%c0_69, %c0_70] : memref<128x128xbf16, #tpu.memory_space<vmem>>, vector<128x128xbf16>
    %cst_71 = arith.constant dense<0.000000e+00> : vector<8x128xf32>
    %95 = tpu.matmul %93, %94, %cst_71 {dimension_numbers = #tpu.dot_dimension_numbers<[1], [0], [0], [1], [0, 0, 1, 1], [], []>} : vector<8x128xbf16>, vector<128x128xbf16>, vector<8x128xf32> -> vector<8x128xf32>
    %cst_72 = arith.constant 0.000000e+00 : f32
    %96 = vector.broadcast %cst_72 : f32 to vector<8x128xf32>
    %97 = arith.maximumf %90, %96 : vector<8x128xf32>
    %98 = arith.truncf %97 : vector<8x128xf32> to vector<8x128xbf16>
    %c0_73 = arith.constant 0 : index
    %c0_74 = arith.constant 0 : index
    %99 = vector.load %arg20[%c0_73, %c0_74] : memref<128x128xbf16, #tpu.memory_space<vmem>>, vector<128x128xbf16>
    %cst_75 = arith.constant dense<0.000000e+00> : vector<8x128xf32>
    %100 = tpu.matmul %98, %99, %cst_75 {dimension_numbers = #tpu.dot_dimension_numbers<[1], [0], [0], [1], [0, 0, 1, 1], [], []>} : vector<8x128xbf16>, vector<128x128xbf16>, vector<8x128xf32> -> vector<8x128xf32>
    %101 = arith.addf %95, %100 : vector<8x128xf32>
    %c0_76 = arith.constant 0 : index
    %c0_77 = arith.constant 0 : index
    %102 = vector.load %arg21[%c0_76, %c0_77] : memref<1x128xf32, #tpu.memory_space<vmem>>, vector<1x128xf32>
    %103 = vector.broadcast %102 : vector<1x128xf32> to vector<8x128xf32>
    %104 = arith.addf %101, %103 : vector<8x128xf32>
    %c0_78 = arith.constant 0 : index
    %c0_79 = arith.constant 0 : index
    %105 = vector.load %arg22[%c0_78, %c0_79] : memref<8x128xf32, #tpu.memory_space<vmem>>, vector<8x128xf32>
    tpu.vector_store %arg22[%c0_78, %c0_79], %104 {strides = array<i32>} : memref<8x128xf32, #tpu.memory_space<vmem>>, vector<8x128xf32>,
    %c0_80 = arith.constant 0 : index
    %c0_81 = arith.constant 0 : index
    %106 = vector.load %arg23[%c0_80, %c0_81] : memref<16x256xf32, #tpu.memory_space<vmem>>, vector<16x256xf32>
    tpu.vector_store %arg23[%c0_80, %c0_81], %85 {strides = array<i32>} : memref<16x256xf32, #tpu.memory_space<vmem>>, vector<16x256xf32>,
    return
  }
  func.func @transform_0(%arg0: i32) -> (i32, i32) {
    %c0_i32 = arith.constant 0 : i32
    %c0_i32_0 = arith.constant 0 : i32
    return %arg0, %c0_i32 : i32, i32
  }
  func.func @transform_1(%arg0: i32) -> (i32, i32) {
    %c0_i32 = arith.constant 0 : i32
    %c0_i32_0 = arith.constant 0 : i32
    return %arg0, %c0_i32 : i32, i32
  }
  func.func @transform_2(%arg0: i32) -> (i32, i32) {
    %c0_i32 = arith.constant 0 : i32
    %c0_i32_0 = arith.constant 0 : i32
    %c0_i32_1 = arith.constant 0 : i32
    return %c0_i32, %c0_i32_0 : i32, i32
  }
  func.func @transform_3(%arg0: i32) -> (i32, i32) {
    %c0_i32 = arith.constant 0 : i32
    %c0_i32_0 = arith.constant 0 : i32
    %c0_i32_1 = arith.constant 0 : i32
    return %c0_i32, %c0_i32_0 : i32, i32
  }
  func.func @transform_4(%arg0: i32) -> (i32, i32) {
    %c0_i32 = arith.constant 0 : i32
    %c0_i32_0 = arith.constant 0 : i32
    %c0_i32_1 = arith.constant 0 : i32
    return %c0_i32, %c0_i32_0 : i32, i32
  }
  func.func @transform_5(%arg0: i32) -> (i32, i32) {
    %c0_i32 = arith.constant 0 : i32
    %c0_i32_0 = arith.constant 0 : i32
    %c0_i32_1 = arith.constant 0 : i32
    return %c0_i32, %c0_i32_0 : i32, i32
  }
  func.func @transform_6(%arg0: i32) -> (i32, i32, i32) {
    %c0_i32 = arith.constant 0 : i32
    %c0_i32_0 = arith.constant 0 : i32
    %c0_i32_1 = arith.constant 0 : i32
    %c0_i32_2 = arith.constant 0 : i32
    return %c0_i32, %c0_i32_0, %c0_i32_1 : i32, i32, i32
  }
  func.func @transform_7(%arg0: i32) -> (i32, i32) {
    %c0_i32 = arith.constant 0 : i32
    %c0_i32_0 = arith.constant 0 : i32
    %c0_i32_1 = arith.constant 0 : i32
    return %c0_i32, %c0_i32_0 : i32, i32
  }
  func.func @transform_8(%arg0: i32) -> (i32, i32) {
    %c0_i32 = arith.constant 0 : i32
    %c0_i32_0 = arith.constant 0 : i32
    %c0_i32_1 = arith.constant 0 : i32
    return %c0_i32, %c0_i32_0 : i32, i32
  }
  func.func @transform_9(%arg0: i32) -> (i32, i32) {
    %c0_i32 = arith.constant 0 : i32
    %c0_i32_0 = arith.constant 0 : i32
    %c0_i32_1 = arith.constant 0 : i32
    return %c0_i32, %c0_i32_0 : i32, i32
  }
  func.func @transform_10(%arg0: i32) -> (i32, i32, i32) {
    %c0_i32 = arith.constant 0 : i32
    %c0_i32_0 = arith.constant 0 : i32
    %c0_i32_1 = arith.constant 0 : i32
    %c0_i32_2 = arith.constant 0 : i32
    return %c0_i32, %c0_i32_0, %c0_i32_1 : i32, i32, i32
  }
  func.func @transform_11(%arg0: i32) -> (i32, i32) {
    %c0_i32 = arith.constant 0 : i32
    %c0_i32_0 = arith.constant 0 : i32
    %c0_i32_1 = arith.constant 0 : i32
    return %c0_i32, %c0_i32_0 : i32, i32
  }
  func.func @transform_12(%arg0: i32) -> (i32, i32) {
    %c0_i32 = arith.constant 0 : i32
    %c0_i32_0 = arith.constant 0 : i32
    %c0_i32_1 = arith.constant 0 : i32
    return %c0_i32, %c0_i32_0 : i32, i32
  }
  func.func @transform_13(%arg0: i32) -> (i32, i32) {
    %c0_i32 = arith.constant 0 : i32
    %c0_i32_0 = arith.constant 0 : i32
    %c0_i32_1 = arith.constant 0 : i32
    return %c0_i32, %c0_i32_0 : i32, i32
  }
  func.func @transform_14(%arg0: i32) -> (i32, i32, i32) {
    %c0_i32 = arith.constant 0 : i32
    %c0_i32_0 = arith.constant 0 : i32
    %c0_i32_1 = arith.constant 0 : i32
    %c0_i32_2 = arith.constant 0 : i32
    return %c0_i32, %c0_i32_0, %c0_i32_1 : i32, i32, i32
  }
  func.func @transform_15(%arg0: i32) -> (i32, i32) {
    %c0_i32 = arith.constant 0 : i32
    %c0_i32_0 = arith.constant 0 : i32
    %c0_i32_1 = arith.constant 0 : i32
    return %c0_i32, %c0_i32_0 : i32, i32
  }
  func.func @transform_16(%arg0: i32) -> (i32, i32) {
    %c0_i32 = arith.constant 0 : i32
    %c0_i32_0 = arith.constant 0 : i32
    %c0_i32_1 = arith.constant 0 : i32
    return %c0_i32, %c0_i32_0 : i32, i32
  }
  func.func @transform_17(%arg0: i32) -> (i32, i32) {
    %c0_i32 = arith.constant 0 : i32
    %c0_i32_0 = arith.constant 0 : i32
    %c0_i32_1 = arith.constant 0 : i32
    return %c0_i32, %c0_i32_0 : i32, i32
  }
  func.func @transform_18(%arg0: i32) -> (i32, i32) {
    %c0_i32 = arith.constant 0 : i32
    %c0_i32_0 = arith.constant 0 : i32
    %c0_i32_1 = arith.constant 0 : i32
    return %c0_i32, %c0_i32_0 : i32, i32
  }
  func.func @transform_19(%arg0: i32) -> (i32, i32) {
    %c0_i32 = arith.constant 0 : i32
    %c0_i32_0 = arith.constant 0 : i32
    %c0_i32_1 = arith.constant 0 : i32
    return %c0_i32, %c0_i32_0 : i32, i32
  }
  func.func @transform_20(%arg0: i32) -> (i32, i32) {
    %c0_i32 = arith.constant 0 : i32
    %c0_i32_0 = arith.constant 0 : i32
    %c0_i32_1 = arith.constant 0 : i32
    return %c0_i32, %c0_i32_0 : i32, i32
  }
  func.func @transform_21(%arg0: i32) -> (i32, i32) {
    %c0_i32 = arith.constant 0 : i32
    %c0_i32_0 = arith.constant 0 : i32
    return %arg0, %c0_i32 : i32, i32
  }
  func.func @transform_22(%arg0: i32) -> (i32, i32) {
    %c0_i32 = arith.constant 0 : i32
    %c0_i32_0 = arith.constant 0 : i32
    return %arg0, %c0_i32 : i32, i32
  }
}

</mosaic_0001>

<llo_original>
// kernel: joint_tsn_forward.1
$region0: #{joint_tsn_forward.1}
  #allocation0 [shape = 'u32[]', space=smem, size = 0x4, offset = 0x4, fixed_abs, tag = 'smem constant byte address 0x4 - core index']
  #allocation1 [shape = 'u32[144,128]{1,0:T(1,128)}', space=vmem, size = 0x12000, scoped, tag = 'internal scratch']
  %s0 = inlined_call_operand.vmem [shape: bf16[32,768], index: 0, kind: input, shape index: {}]
  %s1 = inlined_call_operand.vmem [shape: bf16[32,768], index: 1, kind: input, shape index: {}]
  %s2 = inlined_call_operand.vmem [shape: bf16[768,256], index: 2, kind: input, shape index: {}]
  %s3 = inlined_call_operand.vmem [shape: f32[1,256], index: 3, kind: input, shape index: {}]
  %s4 = inlined_call_operand.hbm [shape: bf16[768,256], index: 4, kind: input, shape index: {}]
  %s5 = inlined_call_operand.vmem [shape: f32[1,256], index: 5, kind: input, shape index: {}]
  %s6 = inlined_call_operand.hbm [shape: bf16[4,256,512], index: 6, kind: input, shape index: {}]
  %s7 = inlined_call_operand.vmem [shape: f32[1,512], index: 7, kind: input, shape index: {}]
  %s8 = inlined_call_operand.hbm [shape: bf16[512,128], index: 8, kind: input, shape index: {}]
  %s9 = inlined_call_operand.vmem [shape: f32[1,128], index: 9, kind: input, shape index: {}]
  %s10 = inlined_call_operand.vmem [shape: bf16[2,256,512], index: 10, kind: input, shape index: {}]
  %s11 = inlined_call_operand.vmem [shape: f32[1,512], index: 11, kind: input, shape index: {}]
  %s12 = inlined_call_operand.hbm [shape: bf16[512,128], index: 12, kind: input, shape index: {}]
  %s13 = inlined_call_operand.vmem [shape: f32[1,128], index: 13, kind: input, shape index: {}]
  %s14 = inlined_call_operand.hbm [shape: bf16[2,256,512], index: 14, kind: input, shape index: {}]
  %s15 = inlined_call_operand.vmem [shape: f32[1,512], index: 15, kind: input, shape index: {}]
  %s16 = inlined_call_operand.hbm [shape: bf16[512,256], index: 16, kind: input, shape index: {}]
  %s17 = inlined_call_operand.vmem [shape: f32[1,256], index: 17, kind: input, shape index: {}]
  %s18 = inlined_call_operand.vmem [shape: bf16[128,128], index: 18, kind: input, shape index: {}]
  %s19 = inlined_call_operand.vmem [shape: bf16[128,128], index: 19, kind: input, shape index: {}]
  %s20 = inlined_call_operand.vmem [shape: f32[1,128], index: 20, kind: input, shape index: {}]
  %s21 = inlined_call_operand.vmem [shape: f32[8,128], index: 21, kind: output, shape index: {0}]
  %s22 = inlined_call_operand.vmem [shape: f32[16,256], index: 22, kind: output, shape index: {1}]
  %23 = xla_tuple %s21, %s22
  %s24 = sld [smem:[#allocation0]]
  $region126: #{joint_tsn_forward.1} parent=0
    _
  %s26 = ssub.s32 1, %s24
  %s27 = scalar_select 0, %s26, %s24
  $region1: #{joint_tsn_forward.1} parent=0
    #allocation2 [shape = 'u8[393216]{0}', space=vmem, size = 0x60000, scoped, tag = 'input window, operand 4, single buffered']
    #allocation3 [shape = 's32[1]{0}', space=sflag, size = 0x4, scoped, tag = 'scoped memory for joint_tsn_forward.1']
    #allocation4 [shape = 'u8[1048576]{0}', space=vmem, size = 0x100000, scoped, tag = 'input window, operand 6, single buffered']
    #allocation5 [shape = 's32[1]{0}', space=sflag, size = 0x4, scoped, tag = 'scoped memory for joint_tsn_forward.1']
    #allocation6 [shape = 'u8[131072]{0}', space=vmem, size = 0x20000, scoped, tag = 'input window, operand 8, single buffered']
    #allocation7 [shape = 'u8[131072]{0}', space=vmem, size = 0x20000, scoped, tag = 'input window, operand 12, single buffered']
    #allocation8 [shape = 's32[1]{0}', space=sflag, size = 0x4, scoped, tag = 'scoped memory for joint_tsn_forward.1']
    #allocation9 [shape = 'u8[524288]{0}', space=vmem, size = 0x80000, scoped, tag = 'input window, operand 14, single buffered']
    #allocation10 [shape = 'u8[262144]{0}', space=vmem, size = 0x40000, scoped, tag = 'input window, operand 16, single buffered']
    #allocation11 [shape = 's32[1]{0}', space=sflag, size = 0x4, scoped, tag = 'scoped memory for joint_tsn_forward.1']
    %28 = vsyncpa [#allocation3], 0
    %29 = vsyncpa [#allocation5], 0
    %30 = vsyncpa [#allocation8], 0
    %31 = vsyncpa [#allocation11], 0
    // Predicated region
    $region2: #{joint_tsn_forward.1} parent=1 // pred_check
      _
    $region3: #{joint_tsn_forward.1} parent=1 // pred_check_branch
      %33 = sbr.rel (0) target = $region5
    $region4: #{joint_tsn_forward.1} parent=1 // pred_region
      _
    $region5: #{joint_tsn_forward.1} parent=1 // pred_fallthru
      _
    // Predicated region
    $region6: #{joint_tsn_forward.1} parent=1 // pred_check
      _
    $region7: #{joint_tsn_forward.1} parent=1 // pred_check_branch
      %35 = sbr.rel (0) target = $region9
    $region8: #{joint_tsn_forward.1} parent=1 // pred_region
      _
    $region9: #{joint_tsn_forward.1} parent=1 // pred_fallthru
      _
    // Predicated region
    $region10: #{joint_tsn_forward.1} parent=1 // pred_check
      _
    $region11: #{joint_tsn_forward.1} parent=1 // pred_check_branch
      %37 = sbr.rel (0) target = $region13
    $region12: #{joint_tsn_forward.1} parent=1 // pred_region
      _
    $region13: #{joint_tsn_forward.1} parent=1 // pred_fallthru
      _
    // Predicated region
    $region14: #{joint_tsn_forward.1} parent=1 // pred_check
      _
    $region15: #{joint_tsn_forward.1} parent=1 // pred_check_branch
      %39 = sbr.rel (0) target = $region17
    $region16: #{joint_tsn_forward.1} parent=1 // pred_region
      _
    $region17: #{joint_tsn_forward.1} parent=1 // pred_fallthru
      _
    // Predicated region
    $region18: #{joint_tsn_forward.1} parent=1 // pred_check
      _
    $region19: #{joint_tsn_forward.1} parent=1 // pred_check_branch
      %41 = sbr.rel (0) target = $region21
    $region20: #{joint_tsn_forward.1} parent=1 // pred_region
      %s43 = ssub.s32 12288, 12288
      %44 = vsyncadd [#allocation3], %s43
      %s45 = sshll.u32 [#allocation2], 4
      %s46 = int_to_ptr.vmem [resolvable:$true] %s45
      %51 = dma.hbm_to_vmem [thread:$0]  %s4, 12288, %s46, [#allocation3], 128, 128, 8
    $region21: #{joint_tsn_forward.1} parent=1 // pred_fallthru
      _
    // Predicated region
    $region22: #{joint_tsn_forward.1} parent=1 // pred_check
      _
    $region23: #{joint_tsn_forward.1} parent=1 // pred_check_branch
      %53 = sbr.rel (0) target = $region25
    $region24: #{joint_tsn_forward.1} parent=1 // pred_region
      _
    $region25: #{joint_tsn_forward.1} parent=1 // pred_fallthru
      _
    // Predicated region
    $region26: #{joint_tsn_forward.1} parent=1 // pred_check
      _
    $region27: #{joint_tsn_forward.1} parent=1 // pred_check_branch
      %55 = sbr.rel (0) target = $region29
    $region28: #{joint_tsn_forward.1} parent=1 // pred_region
      %s57 = ssub.s32 32768, 32768
      %58 = vsyncadd [#allocation5], %s57
      %s59 = sshll.u32 [#allocation4], 4
      %s60 = int_to_ptr.vmem [resolvable:$true] %s59
      %65 = dma.hbm_to_vmem [thread:$0]  %s6, 32768, %s60, [#allocation5], 256, 256, 16
    $region29: #{joint_tsn_forward.1} parent=1 // pred_fallthru
      _
    // Predicated region
    $region30: #{joint_tsn_forward.1} parent=1 // pred_check
      _
    $region31: #{joint_tsn_forward.1} parent=1 // pred_check_branch
      %67 = sbr.rel (0) target = $region33
    $region32: #{joint_tsn_forward.1} parent=1 // pred_region
      _
    $region33: #{joint_tsn_forward.1} parent=1 // pred_fallthru
      _
    // Predicated region
    $region34: #{joint_tsn_forward.1} parent=1 // pred_check
      _
    $region35: #{joint_tsn_forward.1} parent=1 // pred_check_branch
      %69 = sbr.rel (0) target = $region37
    $region36: #{joint_tsn_forward.1} parent=1 // pred_region
      %s71 = ssub.s32 4096, 4096
      %72 = vsyncadd [#allocation5], %s71
      %s73 = sshll.u32 [#allocation6], 4
      %s74 = int_to_ptr.vmem [resolvable:$true] %s73
      %79 = dma.hbm_to_vmem [thread:$0]  %s8, 4096, %s74, [#allocation5], 64, 64, 4
    $region37: #{joint_tsn_forward.1} parent=1 // pred_fallthru
      _
    // Predicated region
    $region38: #{joint_tsn_forward.1} parent=1 // pred_check
      _
    $region39: #{joint_tsn_forward.1} parent=1 // pred_check_branch
      %81 = sbr.rel (0) target = $region41
    $region40: #{joint_tsn_forward.1} parent=1 // pred_region
      _
    $region41: #{joint_tsn_forward.1} parent=1 // pred_fallthru
      _
    // Predicated region
    $region42: #{joint_tsn_forward.1} parent=1 // pred_check
      _
    $region43: #{joint_tsn_forward.1} parent=1 // pred_check_branch
      %83 = sbr.rel (0) target = $region45
    $region44: #{joint_tsn_forward.1} parent=1 // pred_region
      _
    $region45: #{joint_tsn_forward.1} parent=1 // pred_fallthru
      _
    // Predicated region
    $region46: #{joint_tsn_forward.1} parent=1 // pred_check
      _
    $region47: #{joint_tsn_forward.1} parent=1 // pred_check_branch
      %85 = sbr.rel (0) target = $region49
    $region48: #{joint_tsn_forward.1} parent=1 // pred_region
      _
    $region49: #{joint_tsn_forward.1} parent=1 // pred_fallthru
      _
    // Predicated region
    $region50: #{joint_tsn_forward.1} parent=1 // pred_check
      _
    $region51: #{joint_tsn_forward.1} parent=1 // pred_check_branch
      %87 = sbr.rel (0) target = $region53
    $region52: #{joint_tsn_forward.1} parent=1 // pred_region
      %s89 = ssub.s32 4096, 4096
      %90 = vsyncadd [#allocation8], %s89
      %s91 = sshll.u32 [#allocation7], 4
      %s92 = int_to_ptr.vmem [resolvable:$true] %s91
      %97 = dma.hbm_to_vmem [thread:$0]  %s12, 4096, %s92, [#allocation8], 64, 64, 4
    $region53: #{joint_tsn_forward.1} parent=1 // pred_fallthru
      _
    // Predicated region
    $region54: #{joint_tsn_forward.1} parent=1 // pred_check
      _
    $region55: #{joint_tsn_forward.1} parent=1 // pred_check_branch
      %99 = sbr.rel (0) target = $region57
    $region56: #{joint_tsn_forward.1} parent=1 // pred_region
      _
    $region57: #{joint_tsn_forward.1} parent=1 // pred_fallthru
      _
    // Predicated region
    $region58: #{joint_tsn_forward.1} parent=1 // pred_check
      _
    $region59: #{joint_tsn_forward.1} parent=1 // pred_check_branch
      %101 = sbr.rel (0) target = $region61
    $region60: #{joint_tsn_forward.1} parent=1 // pred_region
      %s103 = ssub.s32 16384, 16384
      %104 = vsyncadd [#allocation8], %s103
      %s105 = sshll.u32 [#allocation9], 4
      %s106 = int_to_ptr.vmem [resolvable:$true] %s105
      %111 = dma.hbm_to_vmem [thread:$0]  %s14, 16384, %s106, [#allocation8], 256, 256, 16
    $region61: #{joint_tsn_forward.1} parent=1 // pred_fallthru
      _
    // Predicated region
    $region62: #{joint_tsn_forward.1} parent=1 // pred_check
      _
    $region63: #{joint_tsn_forward.1} parent=1 // pred_check_branch
      %113 = sbr.rel (0) target = $region65
    $region64: #{joint_tsn_forward.1} parent=1 // pred_region
      _
    $region65: #{joint_tsn_forward.1} parent=1 // pred_fallthru
      _
    // Predicated region
    $region66: #{joint_tsn_forward.1} parent=1 // pred_check
      _
    $region67: #{joint_tsn_forward.1} parent=1 // pred_check_branch
      %115 = sbr.rel (0) target = $region69
    $region68: #{joint_tsn_forward.1} parent=1 // pred_region
      %s117 = ssub.s32 8192, 8192
      %118 = vsyncadd [#allocation11], %s117
      %s119 = sshll.u32 [#allocation10], 4
      %s120 = int_to_ptr.vmem [resolvable:$true] %s119
      %125 = dma.hbm_to_vmem [thread:$0]  %s16, 8192, %s120, [#allocation11], 128, 128, 8
    $region69: #{joint_tsn_forward.1} parent=1 // pred_fallthru
      _
    // Predicated region
    $region70: #{joint_tsn_forward.1} parent=1 // pred_check
      _
    $region71: #{joint_tsn_forward.1} parent=1 // pred_check_branch
      %127 = sbr.rel (0) target = $region73
    $region72: #{joint_tsn_forward.1} parent=1 // pred_region
      _
    $region73: #{joint_tsn_forward.1} parent=1 // pred_fallthru
      _
    // Predicated region
    $region74: #{joint_tsn_forward.1} parent=1 // pred_check
      _
    $region75: #{joint_tsn_forward.1} parent=1 // pred_check_branch
      %129 = sbr.rel (0) target = $region77
    $region76: #{joint_tsn_forward.1} parent=1 // pred_region
      _
    $region77: #{joint_tsn_forward.1} parent=1 // pred_fallthru
      _
    // Predicated region
    $region78: #{joint_tsn_forward.1} parent=1 // pred_check
      _
    $region79: #{joint_tsn_forward.1} parent=1 // pred_check_branch
      %131 = sbr.rel (0) target = $region81
    $region80: #{joint_tsn_forward.1} parent=1 // pred_region
      _
    $region81: #{joint_tsn_forward.1} parent=1 // pred_fallthru
      _
    // Predicated region
    $region82: #{joint_tsn_forward.1} parent=1 // pred_check
      _
    $region83: #{joint_tsn_forward.1} parent=1 // pred_check_branch
      %133 = sbr.rel (0) target = $region85
    $region84: #{joint_tsn_forward.1} parent=1 // pred_region
      _
    $region85: #{joint_tsn_forward.1} parent=1 // pred_fallthru
      _
    // Predicated region
    $region86: #{joint_tsn_forward.1} parent=1 // pred_check
      _
    $region87: #{joint_tsn_forward.1} parent=1 // pred_check_branch
      %135 = sbr.rel (0) target = $region89
    $region88: #{joint_tsn_forward.1} parent=1 // pred_region
      %136 = dma.done [#allocation3], 12288
    $region89: #{joint_tsn_forward.1} parent=1 // pred_fallthru
      _
    // Predicated region
    $region90: #{joint_tsn_forward.1} parent=1 // pred_check
      _
    $region91: #{joint_tsn_forward.1} parent=1 // pred_check_branch
      %138 = sbr.rel (0) target = $region93
    $region92: #{joint_tsn_forward.1} parent=1 // pred_region
      %139 = dma.done [#allocation5], 32768
    $region93: #{joint_tsn_forward.1} parent=1 // pred_fallthru
      _
    // Predicated region
    $region94: #{joint_tsn_forward.1} parent=1 // pred_check
      _
    $region95: #{joint_tsn_forward.1} parent=1 // pred_check_branch
      %141 = sbr.rel (0) target = $region97
    $region96: #{joint_tsn_forward.1} parent=1 // pred_region
      %142 = dma.done [#allocation5], 4096
    $region97: #{joint_tsn_forward.1} parent=1 // pred_fallthru
      _
    // Predicated region
    $region98: #{joint_tsn_forward.1} parent=1 // pred_check
      _
    $region99: #{joint_tsn_forward.1} parent=1 // pred_check_branch
      %144 = sbr.rel (0) target = $region101
    $region100: #{joint_tsn_forward.1} parent=1 // pred_region
      %145 = dma.done [#allocation8], 4096
    $region101: #{joint_tsn_forward.1} parent=1 // pred_fallthru
      _
    // Predicated region
    $region102: #{joint_tsn_forward.1} parent=1 // pred_check
      _
    $region103: #{joint_tsn_forward.1} parent=1 // pred_check_branch
      %147 = sbr.rel (0) target = $region105
    $region104: #{joint_tsn_forward.1} parent=1 // pred_region
      %148 = dma.done [#allocation8], 16384
    $region105: #{joint_tsn_forward.1} parent=1 // pred_fallthru
      _
    // Predicated region
    $region106: #{joint_tsn_forward.1} parent=1 // pred_check
      _
    $region107: #{joint_tsn_forward.1} parent=1 // pred_check_branch
      %150 = sbr.rel (0) target = $region109
    $region108: #{joint_tsn_forward.1} parent=1 // pred_region
      %151 = dma.done [#allocation11], 8192
    $region109: #{joint_tsn_forward.1} parent=1 // pred_fallthru
      _
    %v153 = vld [vmem:[%s0] sm:$0xff]
    %v154 = vld [vmem:[%s0 + $0x8] sm:$0xff]
    %v155 = vld [vmem:[%s0 + $0x10] sm:$0xff]
    %v156 = vld [vmem:[%s0 + $0x18] sm:$0xff]
    %v157 = vld [vmem:[%s0 + $0x20] sm:$0xff]
    %v158 = vld [vmem:[%s0 + $0x28] sm:$0xff]
    %v159 = vld [vmem:[%s0 + $0x30] sm:$0xff]
    %v160 = vld [vmem:[%s0 + $0x38] sm:$0xff]
    %v161 = vld [vmem:[%s0 + $0x40] sm:$0xff]
    %v162 = vld [vmem:[%s0 + $0x48] sm:$0xff]
    %v163 = vld [vmem:[%s0 + $0x50] sm:$0xff]
    %v164 = vld [vmem:[%s0 + $0x58] sm:$0xff]
    %v165 = vld [vmem:[%s2] sm:$0xff]
    %v166 = vld [vmem:[%s2 + $0x8] sm:$0xff]
    %v167 = vld [vmem:[%s2 + $0x10] sm:$0xff]
    %v168 = vld [vmem:[%s2 + $0x18] sm:$0xff]
    %v169 = vld [vmem:[%s2 + $0x20] sm:$0xff]
    %v170 = vld [vmem:[%s2 + $0x28] sm:$0xff]
    %v171 = vld [vmem:[%s2 + $0x30] sm:$0xff]
    %v172 = vld [vmem:[%s2 + $0x38] sm:$0xff]
    %v173 = vld [vmem:[%s2 + $0x40] sm:$0xff]
    %v174 = vld [vmem:[%s2 + $0x48] sm:$0xff]
    %v175 = vld [vmem:[%s2 + $0x50] sm:$0xff]
    %v176 = vld [vmem:[%s2 + $0x58] sm:$0xff]
    %v177 = vld [vmem:[%s2 + $0x60] sm:$0xff]
    %v178 = vld [vmem:[%s2 + $0x68] sm:$0xff]
    %v179 = vld [vmem:[%s2 + $0x70] sm:$0xff]
    %v180 = vld [vmem:[%s2 + $0x78] sm:$0xff]
    %v181 = vld [vmem:[%s2 + $0x80] sm:$0xff]
    %v182 = vld [vmem:[%s2 + $0x88] sm:$0xff]
    %v183 = vld [vmem:[%s2 + $0x90] sm:$0xff]
    %v184 = vld [vmem:[%s2 + $0x98] sm:$0xff]
    %v185 = vld [vmem:[%s2 + $0xa0] sm:$0xff]
    %v186 = vld [vmem:[%s2 + $0xa8] sm:$0xff]
    %v187 = vld [vmem:[%s2 + $0xb0] sm:$0xff]
    %v188 = vld [vmem:[%s2 + $0xb8] sm:$0xff]
    %v189 = vld [vmem:[%s2 + $0xc0] sm:$0xff]
    %v190 = vld [vmem:[%s2 + $0xc8] sm:$0xff]
    %v191 = vld [vmem:[%s2 + $0xd0] sm:$0xff]
    %v192 = vld [vmem:[%s2 + $0xd8] sm:$0xff]
    %v193 = vld [vmem:[%s2 + $0xe0] sm:$0xff]
    %v194 = vld [vmem:[%s2 + $0xe8] sm:$0xff]
    %v195 = vld [vmem:[%s2 + $0xf0] sm:$0xff]
    %v196 = vld [vmem:[%s2 + $0xf8] sm:$0xff]
    %v197 = vld [vmem:[%s2 + $0x100] sm:$0xff]
    %v198 = vld [vmem:[%s2 + $0x108] sm:$0xff]
    %v199 = vld [vmem:[%s2 + $0x110] sm:$0xff]
    %v200 = vld [vmem:[%s2 + $0x118] sm:$0xff]
    %v201 = vld [vmem:[%s2 + $0x120] sm:$0xff]
    %v202 = vld [vmem:[%s2 + $0x128] sm:$0xff]
    %v203 = vld [vmem:[%s2 + $0x130] sm:$0xff]
    %v204 = vld [vmem:[%s2 + $0x138] sm:$0xff]
    %v205 = vld [vmem:[%s2 + $0x140] sm:$0xff]
    %v206 = vld [vmem:[%s2 + $0x148] sm:$0xff]
    %v207 = vld [vmem:[%s2 + $0x150] sm:$0xff]
    %v208 = vld [vmem:[%s2 + $0x158] sm:$0xff]
    %v209 = vld [vmem:[%s2 + $0x160] sm:$0xff]
    %v210 = vld [vmem:[%s2 + $0x168] sm:$0xff]
    %v211 = vld [vmem:[%s2 + $0x170] sm:$0xff]
    %v212 = vld [vmem:[%s2 + $0x178] sm:$0xff]
    %v213 = vld [vmem:[%s2 + $0x180] sm:$0xff]
    %v214 = vld [vmem:[%s2 + $0x188] sm:$0xff]
    %v215 = vld [vmem:[%s2 + $0x190] sm:$0xff]
    %v216 = vld [vmem:[%s2 + $0x198] sm:$0xff]
    %v217 = vld [vmem:[%s2 + $0x1a0] sm:$0xff]
    %v218 = vld [vmem:[%s2 + $0x1a8] sm:$0xff]
    %v219 = vld [vmem:[%s2 + $0x1b0] sm:$0xff]
    %v220 = vld [vmem:[%s2 + $0x1b8] sm:$0xff]
    %v221 = vld [vmem:[%s2 + $0x1c0] sm:$0xff]
    %v222 = vld [vmem:[%s2 + $0x1c8] sm:$0xff]
    %v223 = vld [vmem:[%s2 + $0x1d0] sm:$0xff]
    %v224 = vld [vmem:[%s2 + $0x1d8] sm:$0xff]
    %v225 = vld [vmem:[%s2 + $0x1e0] sm:$0xff]
    %v226 = vld [vmem:[%s2 + $0x1e8] sm:$0xff]
    %v227 = vld [vmem:[%s2 + $0x1f0] sm:$0xff]
    %v228 = vld [vmem:[%s2 + $0x1f8] sm:$0xff]
    %v229 = vld [vmem:[%s2 + $0x200] sm:$0xff]
    %v230 = vld [vmem:[%s2 + $0x208] sm:$0xff]
    %v231 = vld [vmem:[%s2 + $0x210] sm:$0xff]
    %v232 = vld [vmem:[%s2 + $0x218] sm:$0xff]
    %v233 = vld [vmem:[%s2 + $0x220] sm:$0xff]
    %v234 = vld [vmem:[%s2 + $0x228] sm:$0xff]
    %v235 = vld [vmem:[%s2 + $0x230] sm:$0xff]
    %v236 = vld [vmem:[%s2 + $0x238] sm:$0xff]
    %v237 = vld [vmem:[%s2 + $0x240] sm:$0xff]
    %v238 = vld [vmem:[%s2 + $0x248] sm:$0xff]
    %v239 = vld [vmem:[%s2 + $0x250] sm:$0xff]
    %v240 = vld [vmem:[%s2 + $0x258] sm:$0xff]
    %v241 = vld [vmem:[%s2 + $0x260] sm:$0xff]
    %v242 = vld [vmem:[%s2 + $0x268] sm:$0xff]
    %v243 = vld [vmem:[%s2 + $0x270] sm:$0xff]
    %v244 = vld [vmem:[%s2 + $0x278] sm:$0xff]
    %v245 = vld [vmem:[%s2 + $0x280] sm:$0xff]
    %v246 = vld [vmem:[%s2 + $0x288] sm:$0xff]
    %v247 = vld [vmem:[%s2 + $0x290] sm:$0xff]
    %v248 = vld [vmem:[%s2 + $0x298] sm:$0xff]
    %v249 = vld [vmem:[%s2 + $0x2a0] sm:$0xff]
    %v250 = vld [vmem:[%s2 + $0x2a8] sm:$0xff]
    %v251 = vld [vmem:[%s2 + $0x2b0] sm:$0xff]
    %v252 = vld [vmem:[%s2 + $0x2b8] sm:$0xff]
    %v253 = vld [vmem:[%s2 + $0x2c0] sm:$0xff]
    %v254 = vld [vmem:[%s2 + $0x2c8] sm:$0xff]
    %v255 = vld [vmem:[%s2 + $0x2d0] sm:$0xff]
    %v256 = vld [vmem:[%s2 + $0x2d8] sm:$0xff]
    %v257 = vld [vmem:[%s2 + $0x2e0] sm:$0xff]
    %v258 = vld [vmem:[%s2 + $0x2e8] sm:$0xff]
    %v259 = vld [vmem:[%s2 + $0x2f0] sm:$0xff]
    %v260 = vld [vmem:[%s2 + $0x2f8] sm:$0xff]
    %v261 = vld [vmem:[%s3] sm:$0x3]
    %v263 = vlaneseq
    %v264 = vshrl.u32 %v263, 7
    %v265 = vsub.s32 0, %v264
    %v266 = vrot.slane %v261, %v265
    %v267 = vlaneseq
    %v268 = vshrl.u32 %v267, 7
    %v269 = vsub.s32 1, %v268
    %v270 = vrot.slane %v261, %v269
    %v285 = vunpack.c.l.b16 %v153
    %v286 = vunpack.c.h.b16 %v153
    %v287 = vunpack.c.l.b16 %v154
    %v288 = vunpack.c.h.b16 %v154
    %v289 = vunpack.c.l.b16 %v155
    %v290 = vunpack.c.h.b16 %v155
    %v291 = vunpack.c.l.b16 %v156
    %v292 = vunpack.c.h.b16 %v156
    %v293 = vunpack.c.l.b16 %v157
    %v294 = vunpack.c.h.b16 %v157
    %v295 = vunpack.c.l.b16 %v158
    %v296 = vunpack.c.h.b16 %v158
    %v297 = vunpack.c.l.b16 %v159
    %v298 = vunpack.c.h.b16 %v159
    %v299 = vunpack.c.l.b16 %v160
    %v300 = vunpack.c.h.b16 %v160
    %v301 = vunpack.c.l.b16 %v161
    %v302 = vunpack.c.h.b16 %v161
    %v303 = vunpack.c.l.b16 %v162
    %v304 = vunpack.c.h.b16 %v162
    %v305 = vunpack.c.l.b16 %v163
    %v306 = vunpack.c.h.b16 %v163
    %v307 = vunpack.c.l.b16 %v164
    %v308 = vunpack.c.h.b16 %v164
    %v309 = vpack.c.b16 %v291, %v285
    %v310 = vpack.c.b16 %v292, %v286
    %v311 = vpack.c.b16 %v293, %v287
    %v312 = vpack.c.b16 %v294, %v288
    %v313 = vpack.c.b16 %v295, %v289
    %v314 = vpack.c.b16 %v296, %v290
    %v315 = vpack.c.b16 %v303, %v297
    %v316 = vpack.c.b16 %v304, %v298
    %v317 = vpack.c.b16 %v305, %v299
    %v318 = vpack.c.b16 %v306, %v300
    %v319 = vpack.c.b16 %v307, %v301
    %v320 = vpack.c.b16 %v308, %v302
    %v429 = vunpack.c.l.b16 %v165
    %v430 = vunpack.c.h.b16 %v165
    %v431 = vunpack.c.l.b16 %v166
    %v432 = vunpack.c.h.b16 %v166
    %v433 = vunpack.c.l.b16 %v167
    %v434 = vunpack.c.h.b16 %v167
    %v435 = vunpack.c.l.b16 %v168
    %v436 = vunpack.c.h.b16 %v168
    %v437 = vunpack.c.l.b16 %v169
    %v438 = vunpack.c.h.b16 %v169
    %v439 = vunpack.c.l.b16 %v170
    %v440 = vunpack.c.h.b16 %v170
    %v441 = vunpack.c.l.b16 %v171
    %v442 = vunpack.c.h.b16 %v171
    %v443 = vunpack.c.l.b16 %v172
    %v444 = vunpack.c.h.b16 %v172
    %v445 = vunpack.c.l.b16 %v173
    %v446 = vunpack.c.h.b16 %v173
    %v447 = vunpack.c.l.b16 %v174
    %v448 = vunpack.c.h.b16 %v174
    %v449 = vunpack.c.l.b16 %v175
    %v450 = vunpack.c.h.b16 %v175
    %v451 = vunpack.c.l.b16 %v176
    %v452 = vunpack.c.h.b16 %v176
    %v453 = vunpack.c.l.b16 %v177
    %v454 = vunpack.c.h.b16 %v177
    %v455 = vunpack.c.l.b16 %v178
    %v456 = vunpack.c.h.b16 %v178
    %v457 = vunpack.c.l.b16 %v179
    %v458 = vunpack.c.h.b16 %v179
    %v459 = vunpack.c.l.b16 %v180
    %v460 = vunpack.c.h.b16 %v180
    %v461 = vunpack.c.l.b16 %v181
    %v462 = vunpack.c.h.b16 %v181
    %v463 = vunpack.c.l.b16 %v182
    %v464 = vunpack.c.h.b16 %v182
    %v465 = vunpack.c.l.b16 %v183
    %v466 = vunpack.c.h.b16 %v183
    %v467 = vunpack.c.l.b16 %v184
    %v468 = vunpack.c.h.b16 %v184
    %v469 = vunpack.c.l.b16 %v185
    %v470 = vunpack.c.h.b16 %v185
    %v471 = vunpack.c.l.b16 %v186
    %v472 = vunpack.c.h.b16 %v186
    %v473 = vunpack.c.l.b16 %v187
    %v474 = vunpack.c.h.b16 %v187
    %v475 = vunpack.c.l.b16 %v188
    %v476 = vunpack.c.h.b16 %v188
    %v477 = vunpack.c.l.b16 %v189
    %v478 = vunpack.c.h.b16 %v189
    %v479 = vunpack.c.l.b16 %v190
    %v480 = vunpack.c.h.b16 %v190
    %v481 = vunpack.c.l.b16 %v191
    %v482 = vunpack.c.h.b16 %v191
    %v483 = vunpack.c.l.b16 %v192
    %v484 = vunpack.c.h.b16 %v192
    %v485 = vunpack.c.l.b16 %v193
    %v486 = vunpack.c.h.b16 %v193
    %v487 = vunpack.c.l.b16 %v194
    %v488 = vunpack.c.h.b16 %v194
    %v489 = vunpack.c.l.b16 %v195
    %v490 = vunpack.c.h.b16 %v195
    %v491 = vunpack.c.l.b16 %v196
    %v492 = vunpack.c.h.b16 %v196
    %v493 = vunpack.c.l.b16 %v197
    %v494 = vunpack.c.h.b16 %v197
    %v495 = vunpack.c.l.b16 %v198
    %v496 = vunpack.c.h.b16 %v198
    %v497 = vunpack.c.l.b16 %v199
    %v498 = vunpack.c.h.b16 %v199
    %v499 = vunpack.c.l.b16 %v200
    %v500 = vunpack.c.h.b16 %v200
    %v501 = vunpack.c.l.b16 %v201
    %v502 = vunpack.c.h.b16 %v201
    %v503 = vunpack.c.l.b16 %v202
    %v504 = vunpack.c.h.b16 %v202
    %v505 = vunpack.c.l.b16 %v203
    %v506 = vunpack.c.h.b16 %v203
    %v507 = vunpack.c.l.b16 %v204
    %v508 = vunpack.c.h.b16 %v204
    %v509 = vunpack.c.l.b16 %v205
    %v510 = vunpack.c.h.b16 %v205
    %v511 = vunpack.c.l.b16 %v206
    %v512 = vunpack.c.h.b16 %v206
    %v513 = vunpack.c.l.b16 %v207
    %v514 = vunpack.c.h.b16 %v207
    %v515 = vunpack.c.l.b16 %v208
    %v516 = vunpack.c.h.b16 %v208
    %v517 = vunpack.c.l.b16 %v209
    %v518 = vunpack.c.h.b16 %v209
    %v519 = vunpack.c.l.b16 %v210
    %v520 = vunpack.c.h.b16 %v210
    %v521 = vunpack.c.l.b16 %v211
    %v522 = vunpack.c.h.b16 %v211
    %v523 = vunpack.c.l.b16 %v212
    %v524 = vunpack.c.h.b16 %v212
    %v525 = vunpack.c.l.b16 %v213
    %v526 = vunpack.c.h.b16 %v213
    %v527 = vunpack.c.l.b16 %v214
    %v528 = vunpack.c.h.b16 %v214
    %v529 = vunpack.c.l.b16 %v215
    %v530 = vunpack.c.h.b16 %v215
    %v531 = vunpack.c.l.b16 %v216
    %v532 = vunpack.c.h.b16 %v216
    %v533 = vunpack.c.l.b16 %v217
    %v534 = vunpack.c.h.b16 %v217
    %v535 = vunpack.c.l.b16 %v218
    %v536 = vunpack.c.h.b16 %v218
    %v537 = vunpack.c.l.b16 %v219
    %v538 = vunpack.c.h.b16 %v219
    %v539 = vunpack.c.l.b16 %v220
    %v540 = vunpack.c.h.b16 %v220
    %v541 = vunpack.c.l.b16 %v221
    %v542 = vunpack.c.h.b16 %v221
    %v543 = vunpack.c.l.b16 %v222
    %v544 = vunpack.c.h.b16 %v222
    %v545 = vunpack.c.l.b16 %v223
    %v546 = vunpack.c.h.b16 %v223
    %v547 = vunpack.c.l.b16 %v224
    %v548 = vunpack.c.h.b16 %v224
    %v549 = vunpack.c.l.b16 %v225
    %v550 = vunpack.c.h.b16 %v225
    %v551 = vunpack.c.l.b16 %v226
    %v552 = vunpack.c.h.b16 %v226
    %v553 = vunpack.c.l.b16 %v227
    %v554 = vunpack.c.h.b16 %v227
    %v555 = vunpack.c.l.b16 %v228
    %v556 = vunpack.c.h.b16 %v228
    %v557 = vunpack.c.l.b16 %v229
    %v558 = vunpack.c.h.b16 %v229
    %v559 = vunpack.c.l.b16 %v230
    %v560 = vunpack.c.h.b16 %v230
    %v561 = vunpack.c.l.b16 %v231
    %v562 = vunpack.c.h.b16 %v231
    %v563 = vunpack.c.l.b16 %v232
    %v564 = vunpack.c.h.b16 %v232
    %v565 = vunpack.c.l.b16 %v233
    %v566 = vunpack.c.h.b16 %v233
    %v567 = vunpack.c.l.b16 %v234
    %v568 = vunpack.c.h.b16 %v234
    %v569 = vunpack.c.l.b16 %v235
    %v570 = vunpack.c.h.b16 %v235
    %v571 = vunpack.c.l.b16 %v236
    %v572 = vunpack.c.h.b16 %v236
    %v573 = vunpack.c.l.b16 %v237
    %v574 = vunpack.c.h.b16 %v237
    %v575 = vunpack.c.l.b16 %v238
    %v576 = vunpack.c.h.b16 %v238
    %v577 = vunpack.c.l.b16 %v239
    %v578 = vunpack.c.h.b16 %v239
    %v579 = vunpack.c.l.b16 %v240
    %v580 = vunpack.c.h.b16 %v240
    %v581 = vunpack.c.l.b16 %v241
    %v582 = vunpack.c.h.b16 %v241
    %v583 = vunpack.c.l.b16 %v242
    %v584 = vunpack.c.h.b16 %v242
    %v585 = vunpack.c.l.b16 %v243
    %v586 = vunpack.c.h.b16 %v243
    %v587 = vunpack.c.l.b16 %v244
    %v588 = vunpack.c.h.b16 %v244
    %v589 = vunpack.c.l.b16 %v245
    %v590 = vunpack.c.h.b16 %v245
    %v591 = vunpack.c.l.b16 %v246
    %v592 = vunpack.c.h.b16 %v246
    %v593 = vunpack.c.l.b16 %v247
    %v594 = vunpack.c.h.b16 %v247
    %v595 = vunpack.c.l.b16 %v248
    %v596 = vunpack.c.h.b16 %v248
    %v597 = vunpack.c.l.b16 %v249
    %v598 = vunpack.c.h.b16 %v249
    %v599 = vunpack.c.l.b16 %v250
    %v600 = vunpack.c.h.b16 %v250
    %v601 = vunpack.c.l.b16 %v251
    %v602 = vunpack.c.h.b16 %v251
    %v603 = vunpack.c.l.b16 %v252
    %v604 = vunpack.c.h.b16 %v252
    %v605 = vunpack.c.l.b16 %v253
    %v606 = vunpack.c.h.b16 %v253
    %v607 = vunpack.c.l.b16 %v254
    %v608 = vunpack.c.h.b16 %v254
    %v609 = vunpack.c.l.b16 %v255
    %v610 = vunpack.c.h.b16 %v255
    %v611 = vunpack.c.l.b16 %v256
    %v612 = vunpack.c.h.b16 %v256
    %v613 = vunpack.c.l.b16 %v257
    %v614 = vunpack.c.h.b16 %v257
    %v615 = vunpack.c.l.b16 %v258
    %v616 = vunpack.c.h.b16 %v258
    %v617 = vunpack.c.l.b16 %v259
    %v618 = vunpack.c.h.b16 %v259
    %v619 = vunpack.c.l.b16 %v260
    %v620 = vunpack.c.h.b16 %v260
    %v621 = vpack.c.b16 %v431, %v429
    %v622 = vpack.c.b16 %v432, %v430
    %v623 = vpack.c.b16 %v435, %v433
    %v624 = vpack.c.b16 %v436, %v434
    %v625 = vpack.c.b16 %v439, %v437
    %v626 = vpack.c.b16 %v440, %v438
    %v627 = vpack.c.b16 %v443, %v441
    %v628 = vpack.c.b16 %v444, %v442
    %v629 = vpack.c.b16 %v447, %v445
    %v630 = vpack.c.b16 %v448, %v446
    %v631 = vpack.c.b16 %v451, %v449
    %v632 = vpack.c.b16 %v452, %v450
    %v633 = vpack.c.b16 %v455, %v453
    %v634 = vpack.c.b16 %v456, %v454
    %v635 = vpack.c.b16 %v459, %v457
    %v636 = vpack.c.b16 %v460, %v458
    %v637 = vpack.c.b16 %v463, %v461
    %v638 = vpack.c.b16 %v464, %v462
    %v639 = vpack.c.b16 %v467, %v465
    %v640 = vpack.c.b16 %v468, %v466
    %v641 = vpack.c.b16 %v471, %v469
    %v642 = vpack.c.b16 %v472, %v470
    %v643 = vpack.c.b16 %v475, %v473
    %v644 = vpack.c.b16 %v476, %v474
    %v645 = vpack.c.b16 %v479, %v477
    %v646 = vpack.c.b16 %v480, %v478
    %v647 = vpack.c.b16 %v483, %v481
    %v648 = vpack.c.b16 %v484, %v482
    %v649 = vpack.c.b16 %v487, %v485
    %v650 = vpack.c.b16 %v488, %v486
    %v651 = vpack.c.b16 %v491, %v489
    %v652 = vpack.c.b16 %v492, %v490
    %v653 = vpack.c.b16 %v495, %v493
    %v654 = vpack.c.b16 %v496, %v494
    %v655 = vpack.c.b16 %v499, %v497
    %v656 = vpack.c.b16 %v500, %v498
    %v657 = vpack.c.b16 %v503, %v501
    %v658 = vpack.c.b16 %v504, %v502
    %v659 = vpack.c.b16 %v507, %v505
    %v660 = vpack.c.b16 %v508, %v506
    %v661 = vpack.c.b16 %v511, %v509
    %v662 = vpack.c.b16 %v512, %v510
    %v663 = vpack.c.b16 %v515, %v513
    %v664 = vpack.c.b16 %v516, %v514
    %v665 = vpack.c.b16 %v519, %v517
    %v666 = vpack.c.b16 %v520, %v518
    %v667 = vpack.c.b16 %v523, %v521
    %v668 = vpack.c.b16 %v524, %v522
    %v669 = vpack.c.b16 %v527, %v525
    %v670 = vpack.c.b16 %v528, %v526
    %v671 = vpack.c.b16 %v531, %v529
    %v672 = vpack.c.b16 %v532, %v530
    %v673 = vpack.c.b16 %v535, %v533
    %v674 = vpack.c.b16 %v536, %v534
    %v675 = vpack.c.b16 %v539, %v537
    %v676 = vpack.c.b16 %v540, %v538
    %v677 = vpack.c.b16 %v543, %v541
    %v678 = vpack.c.b16 %v544, %v542
    %v679 = vpack.c.b16 %v547, %v545
    %v680 = vpack.c.b16 %v548, %v546
    %v681 = vpack.c.b16 %v551, %v549
    %v682 = vpack.c.b16 %v552, %v550
    %v683 = vpack.c.b16 %v555, %v553
    %v684 = vpack.c.b16 %v556, %v554
    %v685 = vpack.c.b16 %v559, %v557
    %v686 = vpack.c.b16 %v560, %v558
    %v687 = vpack.c.b16 %v563, %v561
    %v688 = vpack.c.b16 %v564, %v562
    %v689 = vpack.c.b16 %v567, %v565
    %v690 = vpack.c.b16 %v568, %v566
    %v691 = vpack.c.b16 %v571, %v569
    %v692 = vpack.c.b16 %v572, %v570
    %v693 = vpack.c.b16 %v575, %v573
    %v694 = vpack.c.b16 %v576, %v574
    %v695 = vpack.c.b16 %v579, %v577
    %v696 = vpack.c.b16 %v580, %v578
    %v697 = vpack.c.b16 %v583, %v581
    %v698 = vpack.c.b16 %v584, %v582
    %v699 = vpack.c.b16 %v587, %v585
    %v700 = vpack.c.b16 %v588, %v586
    %v701 = vpack.c.b16 %v591, %v589
    %v702 = vpack.c.b16 %v592, %v590
    %v703 = vpack.c.b16 %v595, %v593
    %v704 = vpack.c.b16 %v596, %v594
    %v705 = vpack.c.b16 %v599, %v597
    %v706 = vpack.c.b16 %v600, %v598
    %v707 = vpack.c.b16 %v603, %v601
    %v708 = vpack.c.b16 %v604, %v602
    %v709 = vpack.c.b16 %v607, %v605
    %v710 = vpack.c.b16 %v608, %v606
    %v711 = vpack.c.b16 %v611, %v609
    %v712 = vpack.c.b16 %v612, %v610
    %v713 = vpack.c.b16 %v615, %v613
    %v714 = vpack.c.b16 %v616, %v614
    %v715 = vpack.c.b16 %v619, %v617
    %v716 = vpack.c.b16 %v620, %v618
    %813 = vmatprep.subr.bf16.mxu0 %v622
    %814 = vmatpush1.bf16.msra.mxu0 %v621
    %815 = vmatprep.subr.bf16.mxu0 %v624
    %816 = vmatpush1.bf16.msra.mxu0 %v623
    %817 = vmatprep.subr.bf16.mxu0 %v626
    %818 = vmatpush1.bf16.msra.mxu0 %v625
    %819 = vmatprep.subr.bf16.mxu0 %v628
    %820 = vmatpush1.bf16.msra.mxu0 %v627
    %821 = vmatprep.subr.bf16.mxu0 %v630
    %822 = vmatpush1.bf16.msra.mxu0 %v629
    %823 = vmatprep.subr.bf16.mxu0 %v632
    %824 = vmatpush1.bf16.msra.mxu0 %v631
    %825 = vmatprep.subr.bf16.mxu0 %v634
    %826 = vmatpush1.bf16.msra.mxu0 %v633
    %827 = vmatprep.subr.bf16.mxu0 %v636
    %828 = vmatpush1.bf16.msra.mxu0 %v635
    %829 = vmatprep.subr.bf16.mxu0 %v638
    %830 = vmatpush1.bf16.msra.mxu0 %v637
    %831 = vmatprep.subr.bf16.mxu0 %v640
    %832 = vmatpush1.bf16.msra.mxu0 %v639
    %833 = vmatprep.subr.bf16.mxu0 %v642
    %834 = vmatpush1.bf16.msra.mxu0 %v641
    %835 = vmatprep.subr.bf16.mxu0 %v644
    %836 = vmatpush1.bf16.msra.mxu0 %v643
    %837 = vmatprep.subr.bf16.mxu0 %v646
    %838 = vmatpush1.bf16.msra.mxu0 %v645
    %839 = vmatprep.subr.bf16.mxu0 %v648
    %840 = vmatpush1.bf16.msra.mxu0 %v647
    %841 = vmatprep.subr.bf16.mxu0 %v650
    %842 = vmatpush1.bf16.msra.mxu0 %v649
    %843 = vmatprep.subr.bf16.mxu0 %v652
    %844 = vmatpush1.bf16.msra.mxu0 %v651
    %845 = vmatprep.mubr.bf16.mxu0 %v310
    %846 = vmatmul.mubr.bf16.gmra.mrb[0].mxu0 %v309
    %v847 = vpop.f32.mrb[0].mxu0
    %v848 = vadd.f32 %v266, %v847
    %v849 = vpop.f32.mrb[0].mxu0
    %v850 = vadd.f32 %v270, %v849
    %v851 = vpop.f32.mrb[0].mxu0
    %v852 = vadd.f32 %v266, %v851
    %v853 = vpop.f32.mrb[0].mxu0
    %v854 = vadd.f32 %v270, %v853
    %855 = vmatprep.mubr.bf16.mxu0 %v316
    %856 = vmatmul.mubr.bf16.gmra.mrb[0].mxu0 %v315
    %v857 = vpop.f32.mrb[0].mxu0
    %v858 = vadd.f32 %v266, %v857
    %v859 = vpop.f32.mrb[0].mxu0
    %v860 = vadd.f32 %v270, %v859
    %v861 = vpop.f32.mrb[0].mxu0
    %v862 = vadd.f32 %v266, %v861
    %v863 = vpop.f32.mrb[0].mxu0
    %v864 = vadd.f32 %v270, %v863
    %865 = vdwg.mxu0
    %866 = vmatprep.subr.bf16.mxu0 %v654
    %867 = vmatpush1.bf16.msra.mxu0 %v653
    %868 = vmatprep.subr.bf16.mxu0 %v656
    %869 = vmatpush1.bf16.msra.mxu0 %v655
    %870 = vmatprep.subr.bf16.mxu0 %v658
    %871 = vmatpush1.bf16.msra.mxu0 %v657
    %872 = vmatprep.subr.bf16.mxu0 %v660
    %873 = vmatpush1.bf16.msra.mxu0 %v659
    %874 = vmatprep.subr.bf16.mxu0 %v662
    %875 = vmatpush1.bf16.msra.mxu0 %v661
    %876 = vmatprep.subr.bf16.mxu0 %v664
    %877 = vmatpush1.bf16.msra.mxu0 %v663
    %878 = vmatprep.subr.bf16.mxu0 %v666
    %879 = vmatpush1.bf16.msra.mxu0 %v665
    %880 = vmatprep.subr.bf16.mxu0 %v668
    %881 = vmatpush1.bf16.msra.mxu0 %v667
    %882 = vmatprep.subr.bf16.mxu0 %v670
    %883 = vmatpush1.bf16.msra.mxu0 %v669
    %884 = vmatprep.subr.bf16.mxu0 %v672
    %885 = vmatpush1.bf16.msra.mxu0 %v671
    %886 = vmatprep.subr.bf16.mxu0 %v674
    %887 = vmatpush1.bf16.msra.mxu0 %v673
    %888 = vmatprep.subr.bf16.mxu0 %v676
    %889 = vmatpush1.bf16.msra.mxu0 %v675
    %890 = vmatprep.subr.bf16.mxu0 %v678
    %891 = vmatpush1.bf16.msra.mxu0 %v677
    %892 = vmatprep.subr.bf16.mxu0 %v680
    %893 = vmatpush1.bf16.msra.mxu0 %v679
    %894 = vmatprep.subr.bf16.mxu0 %v682
    %895 = vmatpush1.bf16.msra.mxu0 %v681
    %896 = vmatprep.subr.bf16.mxu0 %v684
    %897 = vmatpush1.bf16.msra.mxu0 %v683
    %898 = vmatprep.mubr.bf16.mxu0 %v312
    %899 = vmatmul.mubr.bf16.gmra.mrb[0].mxu0 %v311
    %v900 = vpop.f32.mrb[0].mxu0
    %v901 = vadd.f32 %v848, %v900
    %v902 = vpop.f32.mrb[0].mxu0
    %v903 = vadd.f32 %v850, %v902
    %v904 = vpop.f32.mrb[0].mxu0
    %v905 = vadd.f32 %v852, %v904
    %v906 = vpop.f32.mrb[0].mxu0
    %v907 = vadd.f32 %v854, %v906
    %908 = vmatprep.mubr.bf16.mxu0 %v318
    %909 = vmatmul.mubr.bf16.gmra.mrb[0].mxu0 %v317
    %v910 = vpop.f32.mrb[0].mxu0
    %v911 = vadd.f32 %v858, %v910
    %v912 = vpop.f32.mrb[0].mxu0
    %v913 = vadd.f32 %v860, %v912
    %v914 = vpop.f32.mrb[0].mxu0
    %v915 = vadd.f32 %v862, %v914
    %v916 = vpop.f32.mrb[0].mxu0
    %v917 = vadd.f32 %v864, %v916
    %918 = vdwg.mxu0
    %919 = vmatprep.subr.bf16.mxu0 %v686
    %920 = vmatpush1.bf16.msra.mxu0 %v685
    %921 = vmatprep.subr.bf16.mxu0 %v688
    %922 = vmatpush1.bf16.msra.mxu0 %v687
    %923 = vmatprep.subr.bf16.mxu0 %v690
    %924 = vmatpush1.bf16.msra.mxu0 %v689
    %925 = vmatprep.subr.bf16.mxu0 %v692
    %926 = vmatpush1.bf16.msra.mxu0 %v691
    %927 = vmatprep.subr.bf16.mxu0 %v694
    %928 = vmatpush1.bf16.msra.mxu0 %v693
    %929 = vmatprep.subr.bf16.mxu0 %v696
    %930 = vmatpush1.bf16.msra.mxu0 %v695
    %931 = vmatprep.subr.bf16.mxu0 %v698
    %932 = vmatpush1.bf16.msra.mxu0 %v697
    %933 = vmatprep.subr.bf16.mxu0 %v700
    %934 = vmatpush1.bf16.msra.mxu0 %v699
    %935 = vmatprep.subr.bf16.mxu0 %v702
    %936 = vmatpush1.bf16.msra.mxu0 %v701
    %937 = vmatprep.subr.bf16.mxu0 %v704
    %938 = vmatpush1.bf16.msra.mxu0 %v703
    %939 = vmatprep.subr.bf16.mxu0 %v706
    %940 = vmatpush1.bf16.msra.mxu0 %v705
    %941 = vmatprep.subr.bf16.mxu0 %v708
    %942 = vmatpush1.bf16.msra.mxu0 %v707
    %943 = vmatprep.subr.bf16.mxu0 %v710
    %944 = vmatpush1.bf16.msra.mxu0 %v709
    %945 = vmatprep.subr.bf16.mxu0 %v712
    %946 = vmatpush1.bf16.msra.mxu0 %v711
    %947 = vmatprep.subr.bf16.mxu0 %v714
    %948 = vmatpush1.bf16.msra.mxu0 %v713
    %949 = vmatprep.subr.bf16.mxu0 %v716
    %950 = vmatpush1.bf16.msra.mxu0 %v715
    %951 = vmatprep.mubr.bf16.mxu0 %v314
    %952 = vmatmul.mubr.bf16.gmra.mrb[0].mxu0 %v313
    %v953 = vpop.f32.mrb[0].mxu0
    %v954 = vadd.f32 %v901, %v953
    %v955 = vpop.f32.mrb[0].mxu0
    %v956 = vadd.f32 %v903, %v955
    %v957 = vpop.f32.mrb[0].mxu0
    %v958 = vadd.f32 %v905, %v957
    %v959 = vpop.f32.mrb[0].mxu0
    %v960 = vadd.f32 %v907, %v959
    %961 = vmatprep.mubr.bf16.mxu0 %v320
    %962 = vmatmul.mubr.bf16.gmra.mrb[0].mxu0 %v319
    %v963 = vpop.f32.mrb[0].mxu0
    %v964 = vadd.f32 %v911, %v963
    %v965 = vpop.f32.mrb[0].mxu0
    %v966 = vadd.f32 %v913, %v965
    %v967 = vpop.f32.mrb[0].mxu0
    %v968 = vadd.f32 %v915, %v967
    %v969 = vpop.f32.mrb[0].mxu0
    %v970 = vadd.f32 %v917, %v969
    %971 = vdwg.mxu0
    %v972 = vmax.f32 %v954, 0.0
    %v973 = vmax.f32 %v956, 0.0
    %v974 = vmax.f32 %v958, 0.0
    %v975 = vmax.f32 %v960, 0.0
    %v976 = vmax.f32 %v964, 0.0
    %v977 = vmax.f32 %v966, 0.0
    %v978 = vmax.f32 %v968, 0.0
    %v979 = vmax.f32 %v970, 0.0
    %v980 = vpack.c.bf16 %v974, %v972
    %v981 = vpack.c.bf16 %v975, %v973
    %v982 = vpack.c.bf16 %v978, %v976
    %v983 = vpack.c.bf16 %v979, %v977
    %v984 = vld [vmem:[#allocation4] sm:$0xff]
    %v985 = vld [vmem:[#allocation4 + $0x8] sm:$0xff]
    %v986 = vld [vmem:[#allocation4 + $0x10] sm:$0xff]
    %v987 = vld [vmem:[#allocation4 + $0x18] sm:$0xff]
    %v988 = vld [vmem:[#allocation4 + $0x20] sm:$0xff]
    %v989 = vld [vmem:[#allocation4 + $0x28] sm:$0xff]
    %v990 = vld [vmem:[#allocation4 + $0x30] sm:$0xff]
    %v991 = vld [vmem:[#allocation4 + $0x38] sm:$0xff]
    %v992 = vld [vmem:[#allocation4 + $0x40] sm:$0xff]
    %v993 = vld [vmem:[#allocation4 + $0x48] sm:$0xff]
    %v994 = vld [vmem:[#allocation4 + $0x50] sm:$0xff]
    %v995 = vld [vmem:[#allocation4 + $0x58] sm:$0xff]
    %v996 = vld [vmem:[#allocation4 + $0x60] sm:$0xff]
    %v997 = vld [vmem:[#allocation4 + $0x68] sm:$0xff]
    %v998 = vld [vmem:[#allocation4 + $0x70] sm:$0xff]
    %v999 = vld [vmem:[#allocation4 + $0x78] sm:$0xff]
    %v1000 = vld [vmem:[#allocation4 + $0x80] sm:$0xff]
    %v1001 = vld [vmem:[#allocation4 + $0x88] sm:$0xff]
    %v1002 = vld [vmem:[#allocation4 + $0x90] sm:$0xff]
    %v1003 = vld [vmem:[#allocation4 + $0x98] sm:$0xff]
    %v1004 = vld [vmem:[#allocation4 + $0xa0] sm:$0xff]
    %v1005 = vld [vmem:[#allocation4 + $0xa8] sm:$0xff]
    %v1006 = vld [vmem:[#allocation4 + $0xb0] sm:$0xff]
    %v1007 = vld [vmem:[#allocation4 + $0xb8] sm:$0xff]
    %v1008 = vld [vmem:[#allocation4 + $0xc0] sm:$0xff]
    %v1009 = vld [vmem:[#allocation4 + $0xc8] sm:$0xff]
    %v1010 = vld [vmem:[#allocation4 + $0xd0] sm:$0xff]
    %v1011 = vld [vmem:[#allocation4 + $0xd8] sm:$0xff]
    %v1012 = vld [vmem:[#allocation4 + $0xe0] sm:$0xff]
    %v1013 = vld [vmem:[#allocation4 + $0xe8] sm:$0xff]
    %v1014 = vld [vmem:[#allocation4 + $0xf0] sm:$0xff]
    %v1015 = vld [vmem:[#allocation4 + $0xf8] sm:$0xff]
    %v1016 = vld [vmem:[#allocation4 + $0x100] sm:$0xff]
    %v1017 = vld [vmem:[#allocation4 + $0x108] sm:$0xff]
    %v1018 = vld [vmem:[#allocation4 + $0x110] sm:$0xff]
    %v1019 = vld [vmem:[#allocation4 + $0x118] sm:$0xff]
    %v1020 = vld [vmem:[#allocation4 + $0x120] sm:$0xff]
    %v1021 = vld [vmem:[#allocation4 + $0x128] sm:$0xff]
    %v1022 = vld [vmem:[#allocation4 + $0x130] sm:$0xff]
    %v1023 = vld [vmem:[#allocation4 + $0x138] sm:$0xff]
    %v1024 = vld [vmem:[#allocation4 + $0x140] sm:$0xff]
    %v1025 = vld [vmem:[#allocation4 + $0x148] sm:$0xff]
    %v1026 = vld [vmem:[#allocation4 + $0x150] sm:$0xff]
    %v1027 = vld [vmem:[#allocation4 + $0x158] sm:$0xff]
    %v1028 = vld [vmem:[#allocation4 + $0x160] sm:$0xff]
    %v1029 = vld [vmem:[#allocation4 + $0x168] sm:$0xff]
    %v1030 = vld [vmem:[#allocation4 + $0x170] sm:$0xff]
    %v1031 = vld [vmem:[#allocation4 + $0x178] sm:$0xff]
    %v1032 = vld [vmem:[#allocation4 + $0x180] sm:$0xff]
    %v1033 = vld [vmem:[#allocation4 + $0x188] sm:$0xff]
    %v1034 = vld [vmem:[#allocation4 + $0x190] sm:$0xff]
    %v1035 = vld [vmem:[#allocation4 + $0x198] sm:$0xff]
    %v1036 = vld [vmem:[#allocation4 + $0x1a0] sm:$0xff]
    %v1037 = vld [vmem:[#allocation4 + $0x1a8] sm:$0xff]
    %v1038 = vld [vmem:[#allocation4 + $0x1b0] sm:$0xff]
    %v1039 = vld [vmem:[#allocation4 + $0x1b8] sm:$0xff]
    %v1040 = vld [vmem:[#allocation4 + $0x1c0] sm:$0xff]
    %v1041 = vld [vmem:[#allocation4 + $0x1c8] sm:$0xff]
    %v1042 = vld [vmem:[#allocation4 + $0x1d0] sm:$0xff]
    %v1043 = vld [vmem:[#allocation4 + $0x1d8] sm:$0xff]
    %v1044 = vld [vmem:[#allocation4 + $0x1e0] sm:$0xff]
    %v1045 = vld [vmem:[#allocation4 + $0x1e8] sm:$0xff]
    %v1046 = vld [vmem:[#allocation4 + $0x1f0] sm:$0xff]
    %v1047 = vld [vmem:[#allocation4 + $0x1f8] sm:$0xff]
    %s1048 = scalar_lea.vmem [#allocation4], 512
    %v1049 = vld [vmem:[%s1048] sm:$0xff]
    %v1050 = vld [vmem:[%s1048 + $0x8] sm:$0xff]
    %v1051 = vld [vmem:[%s1048 + $0x10] sm:$0xff]
    %v1052 = vld [vmem:[%s1048 + $0x18] sm:$0xff]
    %v1053 = vld [vmem:[%s1048 + $0x20] sm:$0xff]
    %v1054 = vld [vmem:[%s1048 + $0x28] sm:$0xff]
    %v1055 = vld [vmem:[%s1048 + $0x30] sm:$0xff]
    %v1056 = vld [vmem:[%s1048 + $0x38] sm:$0xff]
    %v1057 = vld [vmem:[%s1048 + $0x40] sm:$0xff]
    %v1058 = vld [vmem:[%s1048 + $0x48] sm:$0xff]
    %v1059 = vld [vmem:[%s1048 + $0x50] sm:$0xff]
    %v1060 = vld [vmem:[%s1048 + $0x58] sm:$0xff]
    %v1061 = vld [vmem:[%s1048 + $0x60] sm:$0xff]
    %v1062 = vld [vmem:[%s1048 + $0x68] sm:$0xff]
    %v1063 = vld [vmem:[%s1048 + $0x70] sm:$0xff]
    %v1064 = vld [vmem:[%s1048 + $0x78] sm:$0xff]
    %v1065 = vld [vmem:[%s1048 + $0x80] sm:$0xff]
    %v1066 = vld [vmem:[%s1048 + $0x88] sm:$0xff]
    %v1067 = vld [vmem:[%s1048 + $0x90] sm:$0xff]
    %v1068 = vld [vmem:[%s1048 + $0x98] sm:$0xff]
    %v1069 = vld [vmem:[%s1048 + $0xa0] sm:$0xff]
    %v1070 = vld [vmem:[%s1048 + $0xa8] sm:$0xff]
    %v1071 = vld [vmem:[%s1048 + $0xb0] sm:$0xff]
    %v1072 = vld [vmem:[%s1048 + $0xb8] sm:$0xff]
    %v1073 = vld [vmem:[%s1048 + $0xc0] sm:$0xff]
    %v1074 = vld [vmem:[%s1048 + $0xc8] sm:$0xff]
    %v1075 = vld [vmem:[%s1048 + $0xd0] sm:$0xff]
    %v1076 = vld [vmem:[%s1048 + $0xd8] sm:$0xff]
    %v1077 = vld [vmem:[%s1048 + $0xe0] sm:$0xff]
    %v1078 = vld [vmem:[%s1048 + $0xe8] sm:$0xff]
    %v1079 = vld [vmem:[%s1048 + $0xf0] sm:$0xff]
    %v1080 = vld [vmem:[%s1048 + $0xf8] sm:$0xff]
    %v1081 = vld [vmem:[%s1048 + $0x100] sm:$0xff]
    %v1082 = vld [vmem:[%s1048 + $0x108] sm:$0xff]
    %v1083 = vld [vmem:[%s1048 + $0x110] sm:$0xff]
    %v1084 = vld [vmem:[%s1048 + $0x118] sm:$0xff]
    %v1085 = vld [vmem:[%s1048 + $0x120] sm:$0xff]
    %v1086 = vld [vmem:[%s1048 + $0x128] sm:$0xff]
    %v1087 = vld [vmem:[%s1048 + $0x130] sm:$0xff]
    %v1088 = vld [vmem:[%s1048 + $0x138] sm:$0xff]
    %v1089 = vld [vmem:[%s1048 + $0x140] sm:$0xff]
    %v1090 = vld [vmem:[%s1048 + $0x148] sm:$0xff]
    %v1091 = vld [vmem:[%s1048 + $0x150] sm:$0xff]
    %v1092 = vld [vmem:[%s1048 + $0x158] sm:$0xff]
    %v1093 = vld [vmem:[%s1048 + $0x160] sm:$0xff]
    %v1094 = vld [vmem:[%s1048 + $0x168] sm:$0xff]
    %v1095 = vld [vmem:[%s1048 + $0x170] sm:$0xff]
    %v1096 = vld [vmem:[%s1048 + $0x178] sm:$0xff]
    %v1097 = vld [vmem:[%s1048 + $0x180] sm:$0xff]
    %v1098 = vld [vmem:[%s1048 + $0x188] sm:$0xff]
    %v1099 = vld [vmem:[%s1048 + $0x190] sm:$0xff]
    %v1100 = vld [vmem:[%s1048 + $0x198] sm:$0xff]
    %v1101 = vld [vmem:[%s1048 + $0x1a0] sm:$0xff]
    %v1102 = vld [vmem:[%s1048 + $0x1a8] sm:$0xff]
    %v1103 = vld [vmem:[%s1048 + $0x1b0] sm:$0xff]
    %v1104 = vld [vmem:[%s1048 + $0x1b8] sm:$0xff]
    %v1105 = vld [vmem:[%s1048 + $0x1c0] sm:$0xff]
    %v1106 = vld [vmem:[%s1048 + $0x1c8] sm:$0xff]
    %v1107 = vld [vmem:[%s1048 + $0x1d0] sm:$0xff]
    %v1108 = vld [vmem:[%s1048 + $0x1d8] sm:$0xff]
    %v1109 = vld [vmem:[%s1048 + $0x1e0] sm:$0xff]
    %v1110 = vld [vmem:[%s1048 + $0x1e8] sm:$0xff]
    %v1111 = vld [vmem:[%s1048 + $0x1f0] sm:$0xff]
    %v1112 = vld [vmem:[%s1048 + $0x1f8] sm:$0xff]
    %v1115 = vrot.slane %v980, 4
    %v1116 = vrot.slane %v981, 4
    %v1183 = vunpack.c.l.b16 %v1049
    %v1184 = vunpack.c.h.b16 %v1049
    %v1185 = vunpack.c.l.b16 %v1050
    %v1186 = vunpack.c.h.b16 %v1050
    %v1187 = vunpack.c.l.b16 %v1051
    %v1188 = vunpack.c.h.b16 %v1051
    %v1189 = vunpack.c.l.b16 %v1052
    %v1190 = vunpack.c.h.b16 %v1052
    %v1191 = vunpack.c.l.b16 %v1053
    %v1192 = vunpack.c.h.b16 %v1053
    %v1193 = vunpack.c.l.b16 %v1054
    %v1194 = vunpack.c.h.b16 %v1054
    %v1195 = vunpack.c.l.b16 %v1055
    %v1196 = vunpack.c.h.b16 %v1055
    %v1197 = vunpack.c.l.b16 %v1056
    %v1198 = vunpack.c.h.b16 %v1056
    %v1199 = vunpack.c.l.b16 %v1057
    %v1200 = vunpack.c.h.b16 %v1057
    %v1201 = vunpack.c.l.b16 %v1058
    %v1202 = vunpack.c.h.b16 %v1058
    %v1203 = vunpack.c.l.b16 %v1059
    %v1204 = vunpack.c.h.b16 %v1059
    %v1205 = vunpack.c.l.b16 %v1060
    %v1206 = vunpack.c.h.b16 %v1060
    %v1207 = vunpack.c.l.b16 %v1061
    %v1208 = vunpack.c.h.b16 %v1061
    %v1209 = vunpack.c.l.b16 %v1062
    %v1210 = vunpack.c.h.b16 %v1062
    %v1211 = vunpack.c.l.b16 %v1063
    %v1212 = vunpack.c.h.b16 %v1063
    %v1213 = vunpack.c.l.b16 %v1064
    %v1214 = vunpack.c.h.b16 %v1064
    %v1215 = vunpack.c.l.b16 %v1065
    %v1216 = vunpack.c.h.b16 %v1065
    %v1217 = vunpack.c.l.b16 %v1066
    %v1218 = vunpack.c.h.b16 %v1066
    %v1219 = vunpack.c.l.b16 %v1067
    %v1220 = vunpack.c.h.b16 %v1067
    %v1221 = vunpack.c.l.b16 %v1068
    %v1222 = vunpack.c.h.b16 %v1068
    %v1223 = vunpack.c.l.b16 %v1069
    %v1224 = vunpack.c.h.b16 %v1069
    %v1225 = vunpack.c.l.b16 %v1070
    %v1226 = vunpack.c.h.b16 %v1070
    %v1227 = vunpack.c.l.b16 %v1071
    %v1228 = vunpack.c.h.b16 %v1071
    %v1229 = vunpack.c.l.b16 %v1072
    %v1230 = vunpack.c.h.b16 %v1072
    %v1231 = vunpack.c.l.b16 %v1073
    %v1232 = vunpack.c.h.b16 %v1073
    %v1233 = vunpack.c.l.b16 %v1074
    %v1234 = vunpack.c.h.b16 %v1074
    %v1235 = vunpack.c.l.b16 %v1075
    %v1236 = vunpack.c.h.b16 %v1075
    %v1237 = vunpack.c.l.b16 %v1076
    %v1238 = vunpack.c.h.b16 %v1076
    %v1239 = vunpack.c.l.b16 %v1077
    %v1240 = vunpack.c.h.b16 %v1077
    %v1241 = vunpack.c.l.b16 %v1078
    %v1242 = vunpack.c.h.b16 %v1078
    %v1243 = vunpack.c.l.b16 %v1079
    %v1244 = vunpack.c.h.b16 %v1079
    %v1245 = vunpack.c.l.b16 %v1080
    %v1246 = vunpack.c.h.b16 %v1080
    %v1247 = vunpack.c.l.b16 %v1081
    %v1248 = vunpack.c.h.b16 %v1081
    %v1249 = vunpack.c.l.b16 %v1082
    %v1250 = vunpack.c.h.b16 %v1082
    %v1251 = vunpack.c.l.b16 %v1083
    %v1252 = vunpack.c.h.b16 %v1083
    %v1253 = vunpack.c.l.b16 %v1084
    %v1254 = vunpack.c.h.b16 %v1084
    %v1255 = vunpack.c.l.b16 %v1085
    %v1256 = vunpack.c.h.b16 %v1085
    %v1257 = vunpack.c.l.b16 %v1086
    %v1258 = vunpack.c.h.b16 %v1086
    %v1259 = vunpack.c.l.b16 %v1087
    %v1260 = vunpack.c.h.b16 %v1087
    %v1261 = vunpack.c.l.b16 %v1088
    %v1262 = vunpack.c.h.b16 %v1088
    %v1263 = vunpack.c.l.b16 %v1089
    %v1264 = vunpack.c.h.b16 %v1089
    %v1265 = vunpack.c.l.b16 %v1090
    %v1266 = vunpack.c.h.b16 %v1090
    %v1267 = vunpack.c.l.b16 %v1091
    %v1268 = vunpack.c.h.b16 %v1091
    %v1269 = vunpack.c.l.b16 %v1092
    %v1270 = vunpack.c.h.b16 %v1092
    %v1271 = vunpack.c.l.b16 %v1093
    %v1272 = vunpack.c.h.b16 %v1093
    %v1273 = vunpack.c.l.b16 %v1094
    %v1274 = vunpack.c.h.b16 %v1094
    %v1275 = vunpack.c.l.b16 %v1095
    %v1276 = vunpack.c.h.b16 %v1095
    %v1277 = vunpack.c.l.b16 %v1096
    %v1278 = vunpack.c.h.b16 %v1096
    %v1279 = vunpack.c.l.b16 %v1097
    %v1280 = vunpack.c.h.b16 %v1097
    %v1281 = vunpack.c.l.b16 %v1098
    %v1282 = vunpack.c.h.b16 %v1098
    %v1283 = vunpack.c.l.b16 %v1099
    %v1284 = vunpack.c.h.b16 %v1099
    %v1285 = vunpack.c.l.b16 %v1100
    %v1286 = vunpack.c.h.b16 %v1100
    %v1287 = vunpack.c.l.b16 %v1101
    %v1288 = vunpack.c.h.b16 %v1101
    %v1289 = vunpack.c.l.b16 %v1102
    %v1290 = vunpack.c.h.b16 %v1102
    %v1291 = vunpack.c.l.b16 %v1103
    %v1292 = vunpack.c.h.b16 %v1103
    %v1293 = vunpack.c.l.b16 %v1104
    %v1294 = vunpack.c.h.b16 %v1104
    %v1295 = vunpack.c.l.b16 %v1105
    %v1296 = vunpack.c.h.b16 %v1105
    %v1297 = vunpack.c.l.b16 %v1106
    %v1298 = vunpack.c.h.b16 %v1106
    %v1299 = vunpack.c.l.b16 %v1107
    %v1300 = vunpack.c.h.b16 %v1107
    %v1301 = vunpack.c.l.b16 %v1108
    %v1302 = vunpack.c.h.b16 %v1108
    %v1303 = vunpack.c.l.b16 %v1109
    %v1304 = vunpack.c.h.b16 %v1109
    %v1305 = vunpack.c.l.b16 %v1110
    %v1306 = vunpack.c.h.b16 %v1110
    %v1307 = vunpack.c.l.b16 %v1111
    %v1308 = vunpack.c.h.b16 %v1111
    %v1309 = vunpack.c.l.b16 %v1112
    %v1310 = vunpack.c.h.b16 %v1112
    %v1311 = vpack.c.b16 %v1187, %v1183
    %v1312 = vpack.c.b16 %v1188, %v1184
    %v1313 = vpack.c.b16 %v1189, %v1185
    %v1314 = vpack.c.b16 %v1190, %v1186
    %v1315 = vpack.c.b16 %v1195, %v1191
    %v1316 = vpack.c.b16 %v1196, %v1192
    %v1317 = vpack.c.b16 %v1197, %v1193
    %v1318 = vpack.c.b16 %v1198, %v1194
    %v1319 = vpack.c.b16 %v1203, %v1199
    %v1320 = vpack.c.b16 %v1204, %v1200
    %v1321 = vpack.c.b16 %v1205, %v1201
    %v1322 = vpack.c.b16 %v1206, %v1202
    %v1323 = vpack.c.b16 %v1211, %v1207
    %v1324 = vpack.c.b16 %v1212, %v1208
    %v1325 = vpack.c.b16 %v1213, %v1209
    %v1326 = vpack.c.b16 %v1214, %v1210
    %v1327 = vpack.c.b16 %v1219, %v1215
    %v1328 = vpack.c.b16 %v1220, %v1216
    %v1329 = vpack.c.b16 %v1221, %v1217
    %v1330 = vpack.c.b16 %v1222, %v1218
    %v1331 = vpack.c.b16 %v1227, %v1223
    %v1332 = vpack.c.b16 %v1228, %v1224
    %v1333 = vpack.c.b16 %v1229, %v1225
    %v1334 = vpack.c.b16 %v1230, %v1226
    %v1335 = vpack.c.b16 %v1235, %v1231
    %v1336 = vpack.c.b16 %v1236, %v1232
    %v1337 = vpack.c.b16 %v1237, %v1233
    %v1338 = vpack.c.b16 %v1238, %v1234
    %v1339 = vpack.c.b16 %v1243, %v1239
    %v1340 = vpack.c.b16 %v1244, %v1240
    %v1341 = vpack.c.b16 %v1245, %v1241
    %v1342 = vpack.c.b16 %v1246, %v1242
    %v1343 = vpack.c.b16 %v1251, %v1247
    %v1344 = vpack.c.b16 %v1252, %v1248
    %v1345 = vpack.c.b16 %v1253, %v1249
    %v1346 = vpack.c.b16 %v1254, %v1250
    %v1347 = vpack.c.b16 %v1259, %v1255
    %v1348 = vpack.c.b16 %v1260, %v1256
    %v1349 = vpack.c.b16 %v1261, %v1257
    %v1350 = vpack.c.b16 %v1262, %v1258
    %v1351 = vpack.c.b16 %v1267, %v1263
    %v1352 = vpack.c.b16 %v1268, %v1264
    %v1353 = vpack.c.b16 %v1269, %v1265
    %v1354 = vpack.c.b16 %v1270, %v1266
    %v1355 = vpack.c.b16 %v1275, %v1271
    %v1356 = vpack.c.b16 %v1276, %v1272
    %v1357 = vpack.c.b16 %v1277, %v1273
    %v1358 = vpack.c.b16 %v1278, %v1274
    %v1359 = vpack.c.b16 %v1283, %v1279
    %v1360 = vpack.c.b16 %v1284, %v1280
    %v1361 = vpack.c.b16 %v1285, %v1281
    %v1362 = vpack.c.b16 %v1286, %v1282
    %v1363 = vpack.c.b16 %v1291, %v1287
    %v1364 = vpack.c.b16 %v1292, %v1288
    %v1365 = vpack.c.b16 %v1293, %v1289
    %v1366 = vpack.c.b16 %v1294, %v1290
    %v1367 = vpack.c.b16 %v1299, %v1295
    %v1368 = vpack.c.b16 %v1300, %v1296
    %v1369 = vpack.c.b16 %v1301, %v1297
    %v1370 = vpack.c.b16 %v1302, %v1298
    %v1371 = vpack.c.b16 %v1307, %v1303
    %v1372 = vpack.c.b16 %v1308, %v1304
    %v1373 = vpack.c.b16 %v1309, %v1305
    %v1374 = vpack.c.b16 %v1310, %v1306
    %1439 = vmatprep.subr.bf16.mxu0 %v1312
    %1440 = vmatpush1.bf16.msra.mxu0 %v1311
    %1441 = vmatprep.subr.bf16.mxu0 %v1316
    %1442 = vmatpush1.bf16.msra.mxu0 %v1315
    %1443 = vmatprep.subr.bf16.mxu0 %v1320
    %1444 = vmatpush1.bf16.msra.mxu0 %v1319
    %1445 = vmatprep.subr.bf16.mxu0 %v1324
    %1446 = vmatpush1.bf16.msra.mxu0 %v1323
    %1447 = vmatprep.subr.bf16.mxu0 %v1328
    %1448 = vmatpush1.bf16.msra.mxu0 %v1327
    %1449 = vmatprep.subr.bf16.mxu0 %v1332
    %1450 = vmatpush1.bf16.msra.mxu0 %v1331
    %1451 = vmatprep.subr.bf16.mxu0 %v1336
    %1452 = vmatpush1.bf16.msra.mxu0 %v1335
    %1453 = vmatprep.subr.bf16.mxu0 %v1340
    %1454 = vmatpush1.bf16.msra.mxu0 %v1339
    %1455 = vmatprep.subr.bf16.mxu0 %v1344
    %1456 = vmatpush1.bf16.msra.mxu0 %v1343
    %1457 = vmatprep.subr.bf16.mxu0 %v1348
    %1458 = vmatpush1.bf16.msra.mxu0 %v1347
    %1459 = vmatprep.subr.bf16.mxu0 %v1352
    %1460 = vmatpush1.bf16.msra.mxu0 %v1351
    %1461 = vmatprep.subr.bf16.mxu0 %v1356
    %1462 = vmatpush1.bf16.msra.mxu0 %v1355
    %1463 = vmatprep.subr.bf16.mxu0 %v1360
    %1464 = vmatpush1.bf16.msra.mxu0 %v1359
    %1465 = vmatprep.subr.bf16.mxu0 %v1364
    %1466 = vmatpush1.bf16.msra.mxu0 %v1363
    %1467 = vmatprep.subr.bf16.mxu0 %v1368
    %1468 = vmatpush1.bf16.msra.mxu0 %v1367
    %1469 = vmatprep.subr.bf16.mxu0 %v1372
    %1470 = vmatpush1.bf16.msra.mxu0 %v1371
    %1471 = vmatprep.mubr.bf16.mxu0 %v1116
    %1472 = vmatmul.mubr.bf16.gmra.mrb[0].mxu0 %v1115
    %v1473 = vpop.f32.mrb[0].mxu0
    %v1474 = vadd.f32 0.0, %v1473
    %v1475 = vpop.f32.mrb[0].mxu0
    %v1476 = vadd.f32 0.0, %v1475
    %v1477 = vpop.f32.mrb[0].mxu0
    %v1478 = vpop.f32.mrb[0].mxu0
    %1479 = vdwg.mxu0
    %1480 = vmatprep.subr.bf16.mxu0 %v1314
    %1481 = vmatpush1.bf16.msra.mxu0 %v1313
    %1482 = vmatprep.subr.bf16.mxu0 %v1318
    %1483 = vmatpush1.bf16.msra.mxu0 %v1317
    %1484 = vmatprep.subr.bf16.mxu0 %v1322
    %1485 = vmatpush1.bf16.msra.mxu0 %v1321
    %1486 = vmatprep.subr.bf16.mxu0 %v1326
    %1487 = vmatpush1.bf16.msra.mxu0 %v1325
    %1488 = vmatprep.subr.bf16.mxu0 %v1330
    %1489 = vmatpush1.bf16.msra.mxu0 %v1329
    %1490 = vmatprep.subr.bf16.mxu0 %v1334
    %1491 = vmatpush1.bf16.msra.mxu0 %v1333
    %1492 = vmatprep.subr.bf16.mxu0 %v1338
    %1493 = vmatpush1.bf16.msra.mxu0 %v1337
    %1494 = vmatprep.subr.bf16.mxu0 %v1342
    %1495 = vmatpush1.bf16.msra.mxu0 %v1341
    %1496 = vmatprep.subr.bf16.mxu0 %v1346
    %1497 = vmatpush1.bf16.msra.mxu0 %v1345
    %1498 = vmatprep.subr.bf16.mxu0 %v1350
    %1499 = vmatpush1.bf16.msra.mxu0 %v1349
    %1500 = vmatprep.subr.bf16.mxu0 %v1354
    %1501 = vmatpush1.bf16.msra.mxu0 %v1353
    %1502 = vmatprep.subr.bf16.mxu0 %v1358
    %1503 = vmatpush1.bf16.msra.mxu0 %v1357
    %1504 = vmatprep.subr.bf16.mxu0 %v1362
    %1505 = vmatpush1.bf16.msra.mxu0 %v1361
    %1506 = vmatprep.subr.bf16.mxu0 %v1366
    %1507 = vmatpush1.bf16.msra.mxu0 %v1365
    %1508 = vmatprep.subr.bf16.mxu0 %v1370
    %1509 = vmatpush1.bf16.msra.mxu0 %v1369
    %1510 = vmatprep.subr.bf16.mxu0 %v1374
    %1511 = vmatpush1.bf16.msra.mxu0 %v1373
    %1512 = vmatprep.mubr.bf16.mxu0 %v1116
    %1513 = vmatmul.mubr.bf16.gmra.mrb[0].mxu0 %v1115
    %v1514 = vpop.f32.mrb[0].mxu0
    %v1515 = vadd.f32 0.0, %v1514
    %v1516 = vpop.f32.mrb[0].mxu0
    %v1517 = vadd.f32 0.0, %v1516
    %v1518 = vpop.f32.mrb[0].mxu0
    %v1519 = vpop.f32.mrb[0].mxu0
    %1520 = vdwg.mxu0
    %v1585 = vunpack.c.l.b16 %v984
    %v1586 = vunpack.c.h.b16 %v984
    %v1587 = vunpack.c.l.b16 %v985
    %v1588 = vunpack.c.h.b16 %v985
    %v1589 = vunpack.c.l.b16 %v986
    %v1590 = vunpack.c.h.b16 %v986
    %v1591 = vunpack.c.l.b16 %v987
    %v1592 = vunpack.c.h.b16 %v987
    %v1593 = vunpack.c.l.b16 %v988
    %v1594 = vunpack.c.h.b16 %v988
    %v1595 = vunpack.c.l.b16 %v989
    %v1596 = vunpack.c.h.b16 %v989
    %v1597 = vunpack.c.l.b16 %v990
    %v1598 = vunpack.c.h.b16 %v990
    %v1599 = vunpack.c.l.b16 %v991
    %v1600 = vunpack.c.h.b16 %v991
    %v1601 = vunpack.c.l.b16 %v992
    %v1602 = vunpack.c.h.b16 %v992
    %v1603 = vunpack.c.l.b16 %v993
    %v1604 = vunpack.c.h.b16 %v993
    %v1605 = vunpack.c.l.b16 %v994
    %v1606 = vunpack.c.h.b16 %v994
    %v1607 = vunpack.c.l.b16 %v995
    %v1608 = vunpack.c.h.b16 %v995
    %v1609 = vunpack.c.l.b16 %v996
    %v1610 = vunpack.c.h.b16 %v996
    %v1611 = vunpack.c.l.b16 %v997
    %v1612 = vunpack.c.h.b16 %v997
    %v1613 = vunpack.c.l.b16 %v998
    %v1614 = vunpack.c.h.b16 %v998
    %v1615 = vunpack.c.l.b16 %v999
    %v1616 = vunpack.c.h.b16 %v999
    %v1617 = vunpack.c.l.b16 %v1000
    %v1618 = vunpack.c.h.b16 %v1000
    %v1619 = vunpack.c.l.b16 %v1001
    %v1620 = vunpack.c.h.b16 %v1001
    %v1621 = vunpack.c.l.b16 %v1002
    %v1622 = vunpack.c.h.b16 %v1002
    %v1623 = vunpack.c.l.b16 %v1003
    %v1624 = vunpack.c.h.b16 %v1003
    %v1625 = vunpack.c.l.b16 %v1004
    %v1626 = vunpack.c.h.b16 %v1004
    %v1627 = vunpack.c.l.b16 %v1005
    %v1628 = vunpack.c.h.b16 %v1005
    %v1629 = vunpack.c.l.b16 %v1006
    %v1630 = vunpack.c.h.b16 %v1006
    %v1631 = vunpack.c.l.b16 %v1007
    %v1632 = vunpack.c.h.b16 %v1007
    %v1633 = vunpack.c.l.b16 %v1008
    %v1634 = vunpack.c.h.b16 %v1008
    %v1635 = vunpack.c.l.b16 %v1009
    %v1636 = vunpack.c.h.b16 %v1009
    %v1637 = vunpack.c.l.b16 %v1010
    %v1638 = vunpack.c.h.b16 %v1010
    %v1639 = vunpack.c.l.b16 %v1011
    %v1640 = vunpack.c.h.b16 %v1011
    %v1641 = vunpack.c.l.b16 %v1012
    %v1642 = vunpack.c.h.b16 %v1012
    %v1643 = vunpack.c.l.b16 %v1013
    %v1644 = vunpack.c.h.b16 %v1013
    %v1645 = vunpack.c.l.b16 %v1014
    %v1646 = vunpack.c.h.b16 %v1014
    %v1647 = vunpack.c.l.b16 %v1015
    %v1648 = vunpack.c.h.b16 %v1015
    %v1649 = vunpack.c.l.b16 %v1016
    %v1650 = vunpack.c.h.b16 %v1016
    %v1651 = vunpack.c.l.b16 %v1017
    %v1652 = vunpack.c.h.b16 %v1017
    %v1653 = vunpack.c.l.b16 %v1018
    %v1654 = vunpack.c.h.b16 %v1018
    %v1655 = vunpack.c.l.b16 %v1019
    %v1656 = vunpack.c.h.b16 %v1019
    %v1657 = vunpack.c.l.b16 %v1020
    %v1658 = vunpack.c.h.b16 %v1020
    %v1659 = vunpack.c.l.b16 %v1021
    %v1660 = vunpack.c.h.b16 %v1021
    %v1661 = vunpack.c.l.b16 %v1022
    %v1662 = vunpack.c.h.b16 %v1022
    %v1663 = vunpack.c.l.b16 %v1023
    %v1664 = vunpack.c.h.b16 %v1023
    %v1665 = vunpack.c.l.b16 %v1024
    %v1666 = vunpack.c.h.b16 %v1024
    %v1667 = vunpack.c.l.b16 %v1025
    %v1668 = vunpack.c.h.b16 %v1025
    %v1669 = vunpack.c.l.b16 %v1026
    %v1670 = vunpack.c.h.b16 %v1026
    %v1671 = vunpack.c.l.b16 %v1027
    %v1672 = vunpack.c.h.b16 %v1027
    %v1673 = vunpack.c.l.b16 %v1028
    %v1674 = vunpack.c.h.b16 %v1028
    %v1675 = vunpack.c.l.b16 %v1029
    %v1676 = vunpack.c.h.b16 %v1029
    %v1677 = vunpack.c.l.b16 %v1030
    %v1678 = vunpack.c.h.b16 %v1030
    %v1679 = vunpack.c.l.b16 %v1031
    %v1680 = vunpack.c.h.b16 %v1031
    %v1681 = vunpack.c.l.b16 %v1032
    %v1682 = vunpack.c.h.b16 %v1032
    %v1683 = vunpack.c.l.b16 %v1033
    %v1684 = vunpack.c.h.b16 %v1033
    %v1685 = vunpack.c.l.b16 %v1034
    %v1686 = vunpack.c.h.b16 %v1034
    %v1687 = vunpack.c.l.b16 %v1035
    %v1688 = vunpack.c.h.b16 %v1035
    %v1689 = vunpack.c.l.b16 %v1036
    %v1690 = vunpack.c.h.b16 %v1036
    %v1691 = vunpack.c.l.b16 %v1037
    %v1692 = vunpack.c.h.b16 %v1037
    %v1693 = vunpack.c.l.b16 %v1038
    %v1694 = vunpack.c.h.b16 %v1038
    %v1695 = vunpack.c.l.b16 %v1039
    %v1696 = vunpack.c.h.b16 %v1039
    %v1697 = vunpack.c.l.b16 %v1040
    %v1698 = vunpack.c.h.b16 %v1040
    %v1699 = vunpack.c.l.b16 %v1041
    %v1700 = vunpack.c.h.b16 %v1041
    %v1701 = vunpack.c.l.b16 %v1042
    %v1702 = vunpack.c.h.b16 %v1042
    %v1703 = vunpack.c.l.b16 %v1043
    %v1704 = vunpack.c.h.b16 %v1043
    %v1705 = vunpack.c.l.b16 %v1044
    %v1706 = vunpack.c.h.b16 %v1044
    %v1707 = vunpack.c.l.b16 %v1045
    %v1708 = vunpack.c.h.b16 %v1045
    %v1709 = vunpack.c.l.b16 %v1046
    %v1710 = vunpack.c.h.b16 %v1046
    %v1711 = vunpack.c.l.b16 %v1047
    %v1712 = vunpack.c.h.b16 %v1047
    %v1713 = vpack.c.b16 %v1589, %v1585
    %v1714 = vpack.c.b16 %v1590, %v1586
    %v1715 = vpack.c.b16 %v1591, %v1587
    %v1716 = vpack.c.b16 %v1592, %v1588
    %v1717 = vpack.c.b16 %v1597, %v1593
    %v1718 = vpack.c.b16 %v1598, %v1594
    %v1719 = vpack.c.b16 %v1599, %v1595
    %v1720 = vpack.c.b16 %v1600, %v1596
    %v1721 = vpack.c.b16 %v1605, %v1601
    %v1722 = vpack.c.b16 %v1606, %v1602
    %v1723 = vpack.c.b16 %v1607, %v1603
    %v1724 = vpack.c.b16 %v1608, %v1604
    %v1725 = vpack.c.b16 %v1613, %v1609
    %v1726 = vpack.c.b16 %v1614, %v1610
    %v1727 = vpack.c.b16 %v1615, %v1611
    %v1728 = vpack.c.b16 %v1616, %v1612
    %v1729 = vpack.c.b16 %v1621, %v1617
    %v1730 = vpack.c.b16 %v1622, %v1618
    %v1731 = vpack.c.b16 %v1623, %v1619
    %v1732 = vpack.c.b16 %v1624, %v1620
    %v1733 = vpack.c.b16 %v1629, %v1625
    %v1734 = vpack.c.b16 %v1630, %v1626
    %v1735 = vpack.c.b16 %v1631, %v1627
    %v1736 = vpack.c.b16 %v1632, %v1628
    %v1737 = vpack.c.b16 %v1637, %v1633
    %v1738 = vpack.c.b16 %v1638, %v1634
    %v1739 = vpack.c.b16 %v1639, %v1635
    %v1740 = vpack.c.b16 %v1640, %v1636
    %v1741 = vpack.c.b16 %v1645, %v1641
    %v1742 = vpack.c.b16 %v1646, %v1642
    %v1743 = vpack.c.b16 %v1647, %v1643
    %v1744 = vpack.c.b16 %v1648, %v1644
    %v1745 = vpack.c.b16 %v1653, %v1649
    %v1746 = vpack.c.b16 %v1654, %v1650
    %v1747 = vpack.c.b16 %v1655, %v1651
    %v1748 = vpack.c.b16 %v1656, %v1652
    %v1749 = vpack.c.b16 %v1661, %v1657
    %v1750 = vpack.c.b16 %v1662, %v1658
    %v1751 = vpack.c.b16 %v1663, %v1659
    %v1752 = vpack.c.b16 %v1664, %v1660
    %v1753 = vpack.c.b16 %v1669, %v1665
    %v1754 = vpack.c.b16 %v1670, %v1666
    %v1755 = vpack.c.b16 %v1671, %v1667
    %v1756 = vpack.c.b16 %v1672, %v1668
    %v1757 = vpack.c.b16 %v1677, %v1673
    %v1758 = vpack.c.b16 %v1678, %v1674
    %v1759 = vpack.c.b16 %v1679, %v1675
    %v1760 = vpack.c.b16 %v1680, %v1676
    %v1761 = vpack.c.b16 %v1685, %v1681
    %v1762 = vpack.c.b16 %v1686, %v1682
    %v1763 = vpack.c.b16 %v1687, %v1683
    %v1764 = vpack.c.b16 %v1688, %v1684
    %v1765 = vpack.c.b16 %v1693, %v1689
    %v1766 = vpack.c.b16 %v1694, %v1690
    %v1767 = vpack.c.b16 %v1695, %v1691
    %v1768 = vpack.c.b16 %v1696, %v1692
    %v1769 = vpack.c.b16 %v1701, %v1697
    %v1770 = vpack.c.b16 %v1702, %v1698
    %v1771 = vpack.c.b16 %v1703, %v1699
    %v1772 = vpack.c.b16 %v1704, %v1700
    %v1773 = vpack.c.b16 %v1709, %v1705
    %v1774 = vpack.c.b16 %v1710, %v1706
    %v1775 = vpack.c.b16 %v1711, %v1707
    %v1776 = vpack.c.b16 %v1712, %v1708
    %1841 = vmatprep.subr.bf16.mxu0 %v1714
    %1842 = vmatpush1.bf16.msra.mxu0 %v1713
    %1843 = vmatprep.subr.bf16.mxu0 %v1718
    %1844 = vmatpush1.bf16.msra.mxu0 %v1717
    %1845 = vmatprep.subr.bf16.mxu0 %v1722
    %1846 = vmatpush1.bf16.msra.mxu0 %v1721
    %1847 = vmatprep.subr.bf16.mxu0 %v1726
    %1848 = vmatpush1.bf16.msra.mxu0 %v1725
    %1849 = vmatprep.subr.bf16.mxu0 %v1730
    %1850 = vmatpush1.bf16.msra.mxu0 %v1729
    %1851 = vmatprep.subr.bf16.mxu0 %v1734
    %1852 = vmatpush1.bf16.msra.mxu0 %v1733
    %1853 = vmatprep.subr.bf16.mxu0 %v1738
    %1854 = vmatpush1.bf16.msra.mxu0 %v1737
    %1855 = vmatprep.subr.bf16.mxu0 %v1742
    %1856 = vmatpush1.bf16.msra.mxu0 %v1741
    %1857 = vmatprep.subr.bf16.mxu0 %v1746
    %1858 = vmatpush1.bf16.msra.mxu0 %v1745
    %1859 = vmatprep.subr.bf16.mxu0 %v1750
    %1860 = vmatpush1.bf16.msra.mxu0 %v1749
    %1861 = vmatprep.subr.bf16.mxu0 %v1754
    %1862 = vmatpush1.bf16.msra.mxu0 %v1753
    %1863 = vmatprep.subr.bf16.mxu0 %v1758
    %1864 = vmatpush1.bf16.msra.mxu0 %v1757
    %1865 = vmatprep.subr.bf16.mxu0 %v1762
    %1866 = vmatpush1.bf16.msra.mxu0 %v1761
    %1867 = vmatprep.subr.bf16.mxu0 %v1766
    %1868 = vmatpush1.bf16.msra.mxu0 %v1765
    %1869 = vmatprep.subr.bf16.mxu0 %v1770
    %1870 = vmatpush1.bf16.msra.mxu0 %v1769
    %1871 = vmatprep.subr.bf16.mxu0 %v1774
    %1872 = vmatpush1.bf16.msra.mxu0 %v1773
    %1873 = vmatprep.mubr.bf16.mxu0 %v981
    %1874 = vmatmul.mubr.bf16.gmra.mrb[0].mxu0 %v980
    %v1875 = vpop.f32.mrb[0].mxu0
    %v1876 = vadd.f32 %v1474, %v1875
    %v1877 = vpop.f32.mrb[0].mxu0
    %v1878 = vadd.f32 %v1476, %v1877
    %v1879 = vpop.f32.mrb[0].mxu0
    %v1880 = vpop.f32.mrb[0].mxu0
    %1881 = vdwg.mxu0
    %1882 = vmatprep.subr.bf16.mxu0 %v1716
    %1883 = vmatpush1.bf16.msra.mxu0 %v1715
    %1884 = vmatprep.subr.bf16.mxu0 %v1720
    %1885 = vmatpush1.bf16.msra.mxu0 %v1719
    %1886 = vmatprep.subr.bf16.mxu0 %v1724
    %1887 = vmatpush1.bf16.msra.mxu0 %v1723
    %1888 = vmatprep.subr.bf16.mxu0 %v1728
    %1889 = vmatpush1.bf16.msra.mxu0 %v1727
    %1890 = vmatprep.subr.bf16.mxu0 %v1732
    %1891 = vmatpush1.bf16.msra.mxu0 %v1731
    %1892 = vmatprep.subr.bf16.mxu0 %v1736
    %1893 = vmatpush1.bf16.msra.mxu0 %v1735
    %1894 = vmatprep.subr.bf16.mxu0 %v1740
    %1895 = vmatpush1.bf16.msra.mxu0 %v1739
    %1896 = vmatprep.subr.bf16.mxu0 %v1744
    %1897 = vmatpush1.bf16.msra.mxu0 %v1743
    %1898 = vmatprep.subr.bf16.mxu0 %v1748
    %1899 = vmatpush1.bf16.msra.mxu0 %v1747
    %1900 = vmatprep.subr.bf16.mxu0 %v1752
    %1901 = vmatpush1.bf16.msra.mxu0 %v1751
    %1902 = vmatprep.subr.bf16.mxu0 %v1756
    %1903 = vmatpush1.bf16.msra.mxu0 %v1755
    %1904 = vmatprep.subr.bf16.mxu0 %v1760
    %1905 = vmatpush1.bf16.msra.mxu0 %v1759
    %1906 = vmatprep.subr.bf16.mxu0 %v1764
    %1907 = vmatpush1.bf16.msra.mxu0 %v1763
    %1908 = vmatprep.subr.bf16.mxu0 %v1768
    %1909 = vmatpush1.bf16.msra.mxu0 %v1767
    %1910 = vmatprep.subr.bf16.mxu0 %v1772
    %1911 = vmatpush1.bf16.msra.mxu0 %v1771
    %1912 = vmatprep.subr.bf16.mxu0 %v1776
    %1913 = vmatpush1.bf16.msra.mxu0 %v1775
    %1914 = vmatprep.mubr.bf16.mxu0 %v981
    %1915 = vmatmul.mubr.bf16.gmra.mrb[0].mxu0 %v980
    %v1916 = vpop.f32.mrb[0].mxu0
    %v1917 = vadd.f32 %v1515, %v1916
    %v1918 = vpop.f32.mrb[0].mxu0
    %v1919 = vadd.f32 %v1517, %v1918
    %v1920 = vpop.f32.mrb[0].mxu0
    %v1921 = vpop.f32.mrb[0].mxu0
    %1922 = vdwg.mxu0
    %s1923 = scalar_lea.vmem [#allocation4], 1024
    %v1924 = vld [vmem:[%s1923] sm:$0xff]
    %v1925 = vld [vmem:[%s1923 + $0x8] sm:$0xff]
    %v1926 = vld [vmem:[%s1923 + $0x10] sm:$0xff]
    %v1927 = vld [vmem:[%s1923 + $0x18] sm:$0xff]
    %v1928 = vld [vmem:[%s1923 + $0x20] sm:$0xff]
    %v1929 = vld [vmem:[%s1923 + $0x28] sm:$0xff]
    %v1930 = vld [vmem:[%s1923 + $0x30] sm:$0xff]
    %v1931 = vld [vmem:[%s1923 + $0x38] sm:$0xff]
    %v1932 = vld [vmem:[%s1923 + $0x40] sm:$0xff]
    %v1933 = vld [vmem:[%s1923 + $0x48] sm:$0xff]
    %v1934 = vld [vmem:[%s1923 + $0x50] sm:$0xff]
    %v1935 = vld [vmem:[%s1923 + $0x58] sm:$0xff]
    %v1936 = vld [vmem:[%s1923 + $0x60] sm:$0xff]
    %v1937 = vld [vmem:[%s1923 + $0x68] sm:$0xff]
    %v1938 = vld [vmem:[%s1923 + $0x70] sm:$0xff]
    %v1939 = vld [vmem:[%s1923 + $0x78] sm:$0xff]
    %v1940 = vld [vmem:[%s1923 + $0x80] sm:$0xff]
    %v1941 = vld [vmem:[%s1923 + $0x88] sm:$0xff]
    %v1942 = vld [vmem:[%s1923 + $0x90] sm:$0xff]
    %v1943 = vld [vmem:[%s1923 + $0x98] sm:$0xff]
    %v1944 = vld [vmem:[%s1923 + $0xa0] sm:$0xff]
    %v1945 = vld [vmem:[%s1923 + $0xa8] sm:$0xff]
    %v1946 = vld [vmem:[%s1923 + $0xb0] sm:$0xff]
    %v1947 = vld [vmem:[%s1923 + $0xb8] sm:$0xff]
    %v1948 = vld [vmem:[%s1923 + $0xc0] sm:$0xff]
    %v1949 = vld [vmem:[%s1923 + $0xc8] sm:$0xff]
    %v1950 = vld [vmem:[%s1923 + $0xd0] sm:$0xff]
    %v1951 = vld [vmem:[%s1923 + $0xd8] sm:$0xff]
    %v1952 = vld [vmem:[%s1923 + $0xe0] sm:$0xff]
    %v1953 = vld [vmem:[%s1923 + $0xe8] sm:$0xff]
    %v1954 = vld [vmem:[%s1923 + $0xf0] sm:$0xff]
    %v1955 = vld [vmem:[%s1923 + $0xf8] sm:$0xff]
    %v1956 = vld [vmem:[%s1923 + $0x100] sm:$0xff]
    %v1957 = vld [vmem:[%s1923 + $0x108] sm:$0xff]
    %v1958 = vld [vmem:[%s1923 + $0x110] sm:$0xff]
    %v1959 = vld [vmem:[%s1923 + $0x118] sm:$0xff]
    %v1960 = vld [vmem:[%s1923 + $0x120] sm:$0xff]
    %v1961 = vld [vmem:[%s1923 + $0x128] sm:$0xff]
    %v1962 = vld [vmem:[%s1923 + $0x130] sm:$0xff]
    %v1963 = vld [vmem:[%s1923 + $0x138] sm:$0xff]
    %v1964 = vld [vmem:[%s1923 + $0x140] sm:$0xff]
    %v1965 = vld [vmem:[%s1923 + $0x148] sm:$0xff]
    %v1966 = vld [vmem:[%s1923 + $0x150] sm:$0xff]
    %v1967 = vld [vmem:[%s1923 + $0x158] sm:$0xff]
    %v1968 = vld [vmem:[%s1923 + $0x160] sm:$0xff]
    %v1969 = vld [vmem:[%s1923 + $0x168] sm:$0xff]
    %v1970 = vld [vmem:[%s1923 + $0x170] sm:$0xff]
    %v1971 = vld [vmem:[%s1923 + $0x178] sm:$0xff]
    %v1972 = vld [vmem:[%s1923 + $0x180] sm:$0xff]
    %v1973 = vld [vmem:[%s1923 + $0x188] sm:$0xff]
    %v1974 = vld [vmem:[%s1923 + $0x190] sm:$0xff]
    %v1975 = vld [vmem:[%s1923 + $0x198] sm:$0xff]
    %v1976 = vld [vmem:[%s1923 + $0x1a0] sm:$0xff]
    %v1977 = vld [vmem:[%s1923 + $0x1a8] sm:$0xff]
    %v1978 = vld [vmem:[%s1923 + $0x1b0] sm:$0xff]
    %v1979 = vld [vmem:[%s1923 + $0x1b8] sm:$0xff]
    %v1980 = vld [vmem:[%s1923 + $0x1c0] sm:$0xff]
    %v1981 = vld [vmem:[%s1923 + $0x1c8] sm:$0xff]
    %v1982 = vld [vmem:[%s1923 + $0x1d0] sm:$0xff]
    %v1983 = vld [vmem:[%s1923 + $0x1d8] sm:$0xff]
    %v1984 = vld [vmem:[%s1923 + $0x1e0] sm:$0xff]
    %v1985 = vld [vmem:[%s1923 + $0x1e8] sm:$0xff]
    %v1986 = vld [vmem:[%s1923 + $0x1f0] sm:$0xff]
    %v1987 = vld [vmem:[%s1923 + $0x1f8] sm:$0xff]
    %v2052 = vunpack.c.l.b16 %v1924
    %v2053 = vunpack.c.h.b16 %v1924
    %v2054 = vunpack.c.l.b16 %v1925
    %v2055 = vunpack.c.h.b16 %v1925
    %v2056 = vunpack.c.l.b16 %v1926
    %v2057 = vunpack.c.h.b16 %v1926
    %v2058 = vunpack.c.l.b16 %v1927
    %v2059 = vunpack.c.h.b16 %v1927
    %v2060 = vunpack.c.l.b16 %v1928
    %v2061 = vunpack.c.h.b16 %v1928
    %v2062 = vunpack.c.l.b16 %v1929
    %v2063 = vunpack.c.h.b16 %v1929
    %v2064 = vunpack.c.l.b16 %v1930
    %v2065 = vunpack.c.h.b16 %v1930
    %v2066 = vunpack.c.l.b16 %v1931
    %v2067 = vunpack.c.h.b16 %v1931
    %v2068 = vunpack.c.l.b16 %v1932
    %v2069 = vunpack.c.h.b16 %v1932
    %v2070 = vunpack.c.l.b16 %v1933
    %v2071 = vunpack.c.h.b16 %v1933
    %v2072 = vunpack.c.l.b16 %v1934
    %v2073 = vunpack.c.h.b16 %v1934
    %v2074 = vunpack.c.l.b16 %v1935
    %v2075 = vunpack.c.h.b16 %v1935
    %v2076 = vunpack.c.l.b16 %v1936
    %v2077 = vunpack.c.h.b16 %v1936
    %v2078 = vunpack.c.l.b16 %v1937
    %v2079 = vunpack.c.h.b16 %v1937
    %v2080 = vunpack.c.l.b16 %v1938
    %v2081 = vunpack.c.h.b16 %v1938
    %v2082 = vunpack.c.l.b16 %v1939
    %v2083 = vunpack.c.h.b16 %v1939
    %v2084 = vunpack.c.l.b16 %v1940
    %v2085 = vunpack.c.h.b16 %v1940
    %v2086 = vunpack.c.l.b16 %v1941
    %v2087 = vunpack.c.h.b16 %v1941
    %v2088 = vunpack.c.l.b16 %v1942
    %v2089 = vunpack.c.h.b16 %v1942
    %v2090 = vunpack.c.l.b16 %v1943
    %v2091 = vunpack.c.h.b16 %v1943
    %v2092 = vunpack.c.l.b16 %v1944
    %v2093 = vunpack.c.h.b16 %v1944
    %v2094 = vunpack.c.l.b16 %v1945
    %v2095 = vunpack.c.h.b16 %v1945
    %v2096 = vunpack.c.l.b16 %v1946
    %v2097 = vunpack.c.h.b16 %v1946
    %v2098 = vunpack.c.l.b16 %v1947
    %v2099 = vunpack.c.h.b16 %v1947
    %v2100 = vunpack.c.l.b16 %v1948
    %v2101 = vunpack.c.h.b16 %v1948
    %v2102 = vunpack.c.l.b16 %v1949
    %v2103 = vunpack.c.h.b16 %v1949
    %v2104 = vunpack.c.l.b16 %v1950
    %v2105 = vunpack.c.h.b16 %v1950
    %v2106 = vunpack.c.l.b16 %v1951
    %v2107 = vunpack.c.h.b16 %v1951
    %v2108 = vunpack.c.l.b16 %v1952
    %v2109 = vunpack.c.h.b16 %v1952
    %v2110 = vunpack.c.l.b16 %v1953
    %v2111 = vunpack.c.h.b16 %v1953
    %v2112 = vunpack.c.l.b16 %v1954
    %v2113 = vunpack.c.h.b16 %v1954
    %v2114 = vunpack.c.l.b16 %v1955
    %v2115 = vunpack.c.h.b16 %v1955
    %v2116 = vunpack.c.l.b16 %v1956
    %v2117 = vunpack.c.h.b16 %v1956
    %v2118 = vunpack.c.l.b16 %v1957
    %v2119 = vunpack.c.h.b16 %v1957
    %v2120 = vunpack.c.l.b16 %v1958
    %v2121 = vunpack.c.h.b16 %v1958
    %v2122 = vunpack.c.l.b16 %v1959
    %v2123 = vunpack.c.h.b16 %v1959
    %v2124 = vunpack.c.l.b16 %v1960
    %v2125 = vunpack.c.h.b16 %v1960
    %v2126 = vunpack.c.l.b16 %v1961
    %v2127 = vunpack.c.h.b16 %v1961
    %v2128 = vunpack.c.l.b16 %v1962
    %v2129 = vunpack.c.h.b16 %v1962
    %v2130 = vunpack.c.l.b16 %v1963
    %v2131 = vunpack.c.h.b16 %v1963
    %v2132 = vunpack.c.l.b16 %v1964
    %v2133 = vunpack.c.h.b16 %v1964
    %v2134 = vunpack.c.l.b16 %v1965
    %v2135 = vunpack.c.h.b16 %v1965
    %v2136 = vunpack.c.l.b16 %v1966
    %v2137 = vunpack.c.h.b16 %v1966
    %v2138 = vunpack.c.l.b16 %v1967
    %v2139 = vunpack.c.h.b16 %v1967
    %v2140 = vunpack.c.l.b16 %v1968
    %v2141 = vunpack.c.h.b16 %v1968
    %v2142 = vunpack.c.l.b16 %v1969
    %v2143 = vunpack.c.h.b16 %v1969
    %v2144 = vunpack.c.l.b16 %v1970
    %v2145 = vunpack.c.h.b16 %v1970
    %v2146 = vunpack.c.l.b16 %v1971
    %v2147 = vunpack.c.h.b16 %v1971
    %v2148 = vunpack.c.l.b16 %v1972
    %v2149 = vunpack.c.h.b16 %v1972
    %v2150 = vunpack.c.l.b16 %v1973
    %v2151 = vunpack.c.h.b16 %v1973
    %v2152 = vunpack.c.l.b16 %v1974
    %v2153 = vunpack.c.h.b16 %v1974
    %v2154 = vunpack.c.l.b16 %v1975
    %v2155 = vunpack.c.h.b16 %v1975
    %v2156 = vunpack.c.l.b16 %v1976
    %v2157 = vunpack.c.h.b16 %v1976
    %v2158 = vunpack.c.l.b16 %v1977
    %v2159 = vunpack.c.h.b16 %v1977
    %v2160 = vunpack.c.l.b16 %v1978
    %v2161 = vunpack.c.h.b16 %v1978
    %v2162 = vunpack.c.l.b16 %v1979
    %v2163 = vunpack.c.h.b16 %v1979
    %v2164 = vunpack.c.l.b16 %v1980
    %v2165 = vunpack.c.h.b16 %v1980
    %v2166 = vunpack.c.l.b16 %v1981
    %v2167 = vunpack.c.h.b16 %v1981
    %v2168 = vunpack.c.l.b16 %v1982
    %v2169 = vunpack.c.h.b16 %v1982
    %v2170 = vunpack.c.l.b16 %v1983
    %v2171 = vunpack.c.h.b16 %v1983
    %v2172 = vunpack.c.l.b16 %v1984
    %v2173 = vunpack.c.h.b16 %v1984
    %v2174 = vunpack.c.l.b16 %v1985
    %v2175 = vunpack.c.h.b16 %v1985
    %v2176 = vunpack.c.l.b16 %v1986
    %v2177 = vunpack.c.h.b16 %v1986
    %v2178 = vunpack.c.l.b16 %v1987
    %v2179 = vunpack.c.h.b16 %v1987
    %v2180 = vpack.c.b16 %v2056, %v2052
    %v2181 = vpack.c.b16 %v2057, %v2053
    %v2182 = vpack.c.b16 %v2058, %v2054
    %v2183 = vpack.c.b16 %v2059, %v2055
    %v2184 = vpack.c.b16 %v2064, %v2060
    %v2185 = vpack.c.b16 %v2065, %v2061
    %v2186 = vpack.c.b16 %v2066, %v2062
    %v2187 = vpack.c.b16 %v2067, %v2063
    %v2188 = vpack.c.b16 %v2072, %v2068
    %v2189 = vpack.c.b16 %v2073, %v2069
    %v2190 = vpack.c.b16 %v2074, %v2070
    %v2191 = vpack.c.b16 %v2075, %v2071
    %v2192 = vpack.c.b16 %v2080, %v2076
    %v2193 = vpack.c.b16 %v2081, %v2077
    %v2194 = vpack.c.b16 %v2082, %v2078
    %v2195 = vpack.c.b16 %v2083, %v2079
    %v2196 = vpack.c.b16 %v2088, %v2084
    %v2197 = vpack.c.b16 %v2089, %v2085
    %v2198 = vpack.c.b16 %v2090, %v2086
    %v2199 = vpack.c.b16 %v2091, %v2087
    %v2200 = vpack.c.b16 %v2096, %v2092
    %v2201 = vpack.c.b16 %v2097, %v2093
    %v2202 = vpack.c.b16 %v2098, %v2094
    %v2203 = vpack.c.b16 %v2099, %v2095
    %v2204 = vpack.c.b16 %v2104, %v2100
    %v2205 = vpack.c.b16 %v2105, %v2101
    %v2206 = vpack.c.b16 %v2106, %v2102
    %v2207 = vpack.c.b16 %v2107, %v2103
    %v2208 = vpack.c.b16 %v2112, %v2108
    %v2209 = vpack.c.b16 %v2113, %v2109
    %v2210 = vpack.c.b16 %v2114, %v2110
    %v2211 = vpack.c.b16 %v2115, %v2111
    %v2212 = vpack.c.b16 %v2120, %v2116
    %v2213 = vpack.c.b16 %v2121, %v2117
    %v2214 = vpack.c.b16 %v2122, %v2118
    %v2215 = vpack.c.b16 %v2123, %v2119
    %v2216 = vpack.c.b16 %v2128, %v2124
    %v2217 = vpack.c.b16 %v2129, %v2125
    %v2218 = vpack.c.b16 %v2130, %v2126
    %v2219 = vpack.c.b16 %v2131, %v2127
    %v2220 = vpack.c.b16 %v2136, %v2132
    %v2221 = vpack.c.b16 %v2137, %v2133
    %v2222 = vpack.c.b16 %v2138, %v2134
    %v2223 = vpack.c.b16 %v2139, %v2135
    %v2224 = vpack.c.b16 %v2144, %v2140
    %v2225 = vpack.c.b16 %v2145, %v2141
    %v2226 = vpack.c.b16 %v2146, %v2142
    %v2227 = vpack.c.b16 %v2147, %v2143
    %v2228 = vpack.c.b16 %v2152, %v2148
    %v2229 = vpack.c.b16 %v2153, %v2149
    %v2230 = vpack.c.b16 %v2154, %v2150
    %v2231 = vpack.c.b16 %v2155, %v2151
    %v2232 = vpack.c.b16 %v2160, %v2156
    %v2233 = vpack.c.b16 %v2161, %v2157
    %v2234 = vpack.c.b16 %v2162, %v2158
    %v2235 = vpack.c.b16 %v2163, %v2159
    %v2236 = vpack.c.b16 %v2168, %v2164
    %v2237 = vpack.c.b16 %v2169, %v2165
    %v2238 = vpack.c.b16 %v2170, %v2166
    %v2239 = vpack.c.b16 %v2171, %v2167
    %v2240 = vpack.c.b16 %v2176, %v2172
    %v2241 = vpack.c.b16 %v2177, %v2173
    %v2242 = vpack.c.b16 %v2178, %v2174
    %v2243 = vpack.c.b16 %v2179, %v2175
    %2308 = vmatprep.subr.bf16.mxu0 %v2181
    %2309 = vmatpush1.bf16.msra.mxu0 %v2180
    %2310 = vmatprep.subr.bf16.mxu0 %v2185
    %2311 = vmatpush1.bf16.msra.mxu0 %v2184
    %2312 = vmatprep.subr.bf16.mxu0 %v2189
    %2313 = vmatpush1.bf16.msra.mxu0 %v2188
    %2314 = vmatprep.subr.bf16.mxu0 %v2193
    %2315 = vmatpush1.bf16.msra.mxu0 %v2192
    %2316 = vmatprep.subr.bf16.mxu0 %v2197
    %2317 = vmatpush1.bf16.msra.mxu0 %v2196
    %2318 = vmatprep.subr.bf16.mxu0 %v2201
    %2319 = vmatpush1.bf16.msra.mxu0 %v2200
    %2320 = vmatprep.subr.bf16.mxu0 %v2205
    %2321 = vmatpush1.bf16.msra.mxu0 %v2204
    %2322 = vmatprep.subr.bf16.mxu0 %v2209
    %2323 = vmatpush1.bf16.msra.mxu0 %v2208
    %2324 = vmatprep.subr.bf16.mxu0 %v2213
    %2325 = vmatpush1.bf16.msra.mxu0 %v2212
    %2326 = vmatprep.subr.bf16.mxu0 %v2217
    %2327 = vmatpush1.bf16.msra.mxu0 %v2216
    %2328 = vmatprep.subr.bf16.mxu0 %v2221
    %2329 = vmatpush1.bf16.msra.mxu0 %v2220
    %2330 = vmatprep.subr.bf16.mxu0 %v2225
    %2331 = vmatpush1.bf16.msra.mxu0 %v2224
    %2332 = vmatprep.subr.bf16.mxu0 %v2229
    %2333 = vmatpush1.bf16.msra.mxu0 %v2228
    %2334 = vmatprep.subr.bf16.mxu0 %v2233
    %2335 = vmatpush1.bf16.msra.mxu0 %v2232
    %2336 = vmatprep.subr.bf16.mxu0 %v2237
    %2337 = vmatpush1.bf16.msra.mxu0 %v2236
    %2338 = vmatprep.subr.bf16.mxu0 %v2241
    %2339 = vmatpush1.bf16.msra.mxu0 %v2240
    %2340 = vmatprep.mubr.bf16.mxu0 %v983
    %2341 = vmatmul.mubr.bf16.gmra.mrb[0].mxu0 %v982
    %v2342 = vpop.f32.mrb[0].mxu0
    %v2343 = vadd.f32 0.0, %v2342
    %v2344 = vpop.f32.mrb[0].mxu0
    %v2345 = vadd.f32 0.0, %v2344
    %v2346 = vpop.f32.mrb[0].mxu0
    %v2347 = vpop.f32.mrb[0].mxu0
    %2348 = vdwg.mxu0
    %2349 = vmatprep.subr.bf16.mxu0 %v2183
    %2350 = vmatpush1.bf16.msra.mxu0 %v2182
    %2351 = vmatprep.subr.bf16.mxu0 %v2187
    %2352 = vmatpush1.bf16.msra.mxu0 %v2186
    %2353 = vmatprep.subr.bf16.mxu0 %v2191
    %2354 = vmatpush1.bf16.msra.mxu0 %v2190
    %2355 = vmatprep.subr.bf16.mxu0 %v2195
    %2356 = vmatpush1.bf16.msra.mxu0 %v2194
    %2357 = vmatprep.subr.bf16.mxu0 %v2199
    %2358 = vmatpush1.bf16.msra.mxu0 %v2198
    %2359 = vmatprep.subr.bf16.mxu0 %v2203
    %2360 = vmatpush1.bf16.msra.mxu0 %v2202
    %2361 = vmatprep.subr.bf16.mxu0 %v2207
    %2362 = vmatpush1.bf16.msra.mxu0 %v2206
    %2363 = vmatprep.subr.bf16.mxu0 %v2211
    %2364 = vmatpush1.bf16.msra.mxu0 %v2210
    %2365 = vmatprep.subr.bf16.mxu0 %v2215
    %2366 = vmatpush1.bf16.msra.mxu0 %v2214
    %2367 = vmatprep.subr.bf16.mxu0 %v2219
    %2368 = vmatpush1.bf16.msra.mxu0 %v2218
    %2369 = vmatprep.subr.bf16.mxu0 %v2223
    %2370 = vmatpush1.bf16.msra.mxu0 %v2222
    %2371 = vmatprep.subr.bf16.mxu0 %v2227
    %2372 = vmatpush1.bf16.msra.mxu0 %v2226
    %2373 = vmatprep.subr.bf16.mxu0 %v2231
    %2374 = vmatpush1.bf16.msra.mxu0 %v2230
    %2375 = vmatprep.subr.bf16.mxu0 %v2235
    %2376 = vmatpush1.bf16.msra.mxu0 %v2234
    %2377 = vmatprep.subr.bf16.mxu0 %v2239
    %2378 = vmatpush1.bf16.msra.mxu0 %v2238
    %2379 = vmatprep.subr.bf16.mxu0 %v2243
    %2380 = vmatpush1.bf16.msra.mxu0 %v2242
    %2381 = vmatprep.mubr.bf16.mxu0 %v983
    %2382 = vmatmul.mubr.bf16.gmra.mrb[0].mxu0 %v982
    %v2383 = vpop.f32.mrb[0].mxu0
    %v2384 = vadd.f32 0.0, %v2383
    %v2385 = vpop.f32.mrb[0].mxu0
    %v2386 = vadd.f32 0.0, %v2385
    %v2387 = vpop.f32.mrb[0].mxu0
    %v2388 = vpop.f32.mrb[0].mxu0
    %2389 = vdwg.mxu0
    %v2390 = vadd.f32 %v1876, %v2343
    %v2391 = vadd.f32 %v1878, %v2345
    %v2392 = vadd.f32 %v1917, %v2384
    %v2393 = vadd.f32 %v1919, %v2386
    %s2394 = scalar_lea.vmem [#allocation4], 1536
    %v2395 = vld [vmem:[%s2394] sm:$0xff]
    %v2396 = vld [vmem:[%s2394 + $0x8] sm:$0xff]
    %v2397 = vld [vmem:[%s2394 + $0x10] sm:$0xff]
    %v2398 = vld [vmem:[%s2394 + $0x18] sm:$0xff]
    %v2399 = vld [vmem:[%s2394 + $0x20] sm:$0xff]
    %v2400 = vld [vmem:[%s2394 + $0x28] sm:$0xff]
    %v2401 = vld [vmem:[%s2394 + $0x30] sm:$0xff]
    %v2402 = vld [vmem:[%s2394 + $0x38] sm:$0xff]
    %v2403 = vld [vmem:[%s2394 + $0x40] sm:$0xff]
    %v2404 = vld [vmem:[%s2394 + $0x48] sm:$0xff]
    %v2405 = vld [vmem:[%s2394 + $0x50] sm:$0xff]
    %v2406 = vld [vmem:[%s2394 + $0x58] sm:$0xff]
    %v2407 = vld [vmem:[%s2394 + $0x60] sm:$0xff]
    %v2408 = vld [vmem:[%s2394 + $0x68] sm:$0xff]
    %v2409 = vld [vmem:[%s2394 + $0x70] sm:$0xff]
    %v2410 = vld [vmem:[%s2394 + $0x78] sm:$0xff]
    %v2411 = vld [vmem:[%s2394 + $0x80] sm:$0xff]
    %v2412 = vld [vmem:[%s2394 + $0x88] sm:$0xff]
    %v2413 = vld [vmem:[%s2394 + $0x90] sm:$0xff]
    %v2414 = vld [vmem:[%s2394 + $0x98] sm:$0xff]
    %v2415 = vld [vmem:[%s2394 + $0xa0] sm:$0xff]
    %v2416 = vld [vmem:[%s2394 + $0xa8] sm:$0xff]
    %v2417 = vld [vmem:[%s2394 + $0xb0] sm:$0xff]
    %v2418 = vld [vmem:[%s2394 + $0xb8] sm:$0xff]
    %v2419 = vld [vmem:[%s2394 + $0xc0] sm:$0xff]
    %v2420 = vld [vmem:[%s2394 + $0xc8] sm:$0xff]
    %v2421 = vld [vmem:[%s2394 + $0xd0] sm:$0xff]
    %v2422 = vld [vmem:[%s2394 + $0xd8] sm:$0xff]
    %v2423 = vld [vmem:[%s2394 + $0xe0] sm:$0xff]
    %v2424 = vld [vmem:[%s2394 + $0xe8] sm:$0xff]
    %v2425 = vld [vmem:[%s2394 + $0xf0] sm:$0xff]
    %v2426 = vld [vmem:[%s2394 + $0xf8] sm:$0xff]
    %v2427 = vld [vmem:[%s2394 + $0x100] sm:$0xff]
    %v2428 = vld [vmem:[%s2394 + $0x108] sm:$0xff]
    %v2429 = vld [vmem:[%s2394 + $0x110] sm:$0xff]
    %v2430 = vld [vmem:[%s2394 + $0x118] sm:$0xff]
    %v2431 = vld [vmem:[%s2394 + $0x120] sm:$0xff]
    %v2432 = vld [vmem:[%s2394 + $0x128] sm:$0xff]
    %v2433 = vld [vmem:[%s2394 + $0x130] sm:$0xff]
    %v2434 = vld [vmem:[%s2394 + $0x138] sm:$0xff]
    %v2435 = vld [vmem:[%s2394 + $0x140] sm:$0xff]
    %v2436 = vld [vmem:[%s2394 + $0x148] sm:$0xff]
    %v2437 = vld [vmem:[%s2394 + $0x150] sm:$0xff]
    %v2438 = vld [vmem:[%s2394 + $0x158] sm:$0xff]
    %v2439 = vld [vmem:[%s2394 + $0x160] sm:$0xff]
    %v2440 = vld [vmem:[%s2394 + $0x168] sm:$0xff]
    %v2441 = vld [vmem:[%s2394 + $0x170] sm:$0xff]
    %v2442 = vld [vmem:[%s2394 + $0x178] sm:$0xff]
    %v2443 = vld [vmem:[%s2394 + $0x180] sm:$0xff]
    %v2444 = vld [vmem:[%s2394 + $0x188] sm:$0xff]
    %v2445 = vld [vmem:[%s2394 + $0x190] sm:$0xff]
    %v2446 = vld [vmem:[%s2394 + $0x198] sm:$0xff]
    %v2447 = vld [vmem:[%s2394 + $0x1a0] sm:$0xff]
    %v2448 = vld [vmem:[%s2394 + $0x1a8] sm:$0xff]
    %v2449 = vld [vmem:[%s2394 + $0x1b0] sm:$0xff]
    %v2450 = vld [vmem:[%s2394 + $0x1b8] sm:$0xff]
    %v2451 = vld [vmem:[%s2394 + $0x1c0] sm:$0xff]
    %v2452 = vld [vmem:[%s2394 + $0x1c8] sm:$0xff]
    %v2453 = vld [vmem:[%s2394 + $0x1d0] sm:$0xff]
    %v2454 = vld [vmem:[%s2394 + $0x1d8] sm:$0xff]
    %v2455 = vld [vmem:[%s2394 + $0x1e0] sm:$0xff]
    %v2456 = vld [vmem:[%s2394 + $0x1e8] sm:$0xff]
    %v2457 = vld [vmem:[%s2394 + $0x1f0] sm:$0xff]
    %v2458 = vld [vmem:[%s2394 + $0x1f8] sm:$0xff]
    %v2461 = vrot.slane %v982, 4
    %v2462 = vrot.slane %v983, 4
    %v2529 = vunpack.c.l.b16 %v2395
    %v2530 = vunpack.c.h.b16 %v2395
    %v2531 = vunpack.c.l.b16 %v2396
    %v2532 = vunpack.c.h.b16 %v2396
    %v2533 = vunpack.c.l.b16 %v2397
    %v2534 = vunpack.c.h.b16 %v2397
    %v2535 = vunpack.c.l.b16 %v2398
    %v2536 = vunpack.c.h.b16 %v2398
    %v2537 = vunpack.c.l.b16 %v2399
    %v2538 = vunpack.c.h.b16 %v2399
    %v2539 = vunpack.c.l.b16 %v2400
    %v2540 = vunpack.c.h.b16 %v2400
    %v2541 = vunpack.c.l.b16 %v2401
    %v2542 = vunpack.c.h.b16 %v2401
    %v2543 = vunpack.c.l.b16 %v2402
    %v2544 = vunpack.c.h.b16 %v2402
    %v2545 = vunpack.c.l.b16 %v2403
    %v2546 = vunpack.c.h.b16 %v2403
    %v2547 = vunpack.c.l.b16 %v2404
    %v2548 = vunpack.c.h.b16 %v2404
    %v2549 = vunpack.c.l.b16 %v2405
    %v2550 = vunpack.c.h.b16 %v2405
    %v2551 = vunpack.c.l.b16 %v2406
    %v2552 = vunpack.c.h.b16 %v2406
    %v2553 = vunpack.c.l.b16 %v2407
    %v2554 = vunpack.c.h.b16 %v2407
    %v2555 = vunpack.c.l.b16 %v2408
    %v2556 = vunpack.c.h.b16 %v2408
    %v2557 = vunpack.c.l.b16 %v2409
    %v2558 = vunpack.c.h.b16 %v2409
    %v2559 = vunpack.c.l.b16 %v2410
    %v2560 = vunpack.c.h.b16 %v2410
    %v2561 = vunpack.c.l.b16 %v2411
    %v2562 = vunpack.c.h.b16 %v2411
    %v2563 = vunpack.c.l.b16 %v2412
    %v2564 = vunpack.c.h.b16 %v2412
    %v2565 = vunpack.c.l.b16 %v2413
    %v2566 = vunpack.c.h.b16 %v2413
    %v2567 = vunpack.c.l.b16 %v2414
    %v2568 = vunpack.c.h.b16 %v2414
    %v2569 = vunpack.c.l.b16 %v2415
    %v2570 = vunpack.c.h.b16 %v2415
    %v2571 = vunpack.c.l.b16 %v2416
    %v2572 = vunpack.c.h.b16 %v2416
    %v2573 = vunpack.c.l.b16 %v2417
    %v2574 = vunpack.c.h.b16 %v2417
    %v2575 = vunpack.c.l.b16 %v2418
    %v2576 = vunpack.c.h.b16 %v2418
    %v2577 = vunpack.c.l.b16 %v2419
    %v2578 = vunpack.c.h.b16 %v2419
    %v2579 = vunpack.c.l.b16 %v2420
    %v2580 = vunpack.c.h.b16 %v2420
    %v2581 = vunpack.c.l.b16 %v2421
    %v2582 = vunpack.c.h.b16 %v2421
    %v2583 = vunpack.c.l.b16 %v2422
    %v2584 = vunpack.c.h.b16 %v2422
    %v2585 = vunpack.c.l.b16 %v2423
    %v2586 = vunpack.c.h.b16 %v2423
    %v2587 = vunpack.c.l.b16 %v2424
    %v2588 = vunpack.c.h.b16 %v2424
    %v2589 = vunpack.c.l.b16 %v2425
    %v2590 = vunpack.c.h.b16 %v2425
    %v2591 = vunpack.c.l.b16 %v2426
    %v2592 = vunpack.c.h.b16 %v2426
    %v2593 = vunpack.c.l.b16 %v2427
    %v2594 = vunpack.c.h.b16 %v2427
    %v2595 = vunpack.c.l.b16 %v2428
    %v2596 = vunpack.c.h.b16 %v2428
    %v2597 = vunpack.c.l.b16 %v2429
    %v2598 = vunpack.c.h.b16 %v2429
    %v2599 = vunpack.c.l.b16 %v2430
    %v2600 = vunpack.c.h.b16 %v2430
    %v2601 = vunpack.c.l.b16 %v2431
    %v2602 = vunpack.c.h.b16 %v2431
    %v2603 = vunpack.c.l.b16 %v2432
    %v2604 = vunpack.c.h.b16 %v2432
    %v2605 = vunpack.c.l.b16 %v2433
    %v2606 = vunpack.c.h.b16 %v2433
    %v2607 = vunpack.c.l.b16 %v2434
    %v2608 = vunpack.c.h.b16 %v2434
    %v2609 = vunpack.c.l.b16 %v2435
    %v2610 = vunpack.c.h.b16 %v2435
    %v2611 = vunpack.c.l.b16 %v2436
    %v2612 = vunpack.c.h.b16 %v2436
    %v2613 = vunpack.c.l.b16 %v2437
    %v2614 = vunpack.c.h.b16 %v2437
    %v2615 = vunpack.c.l.b16 %v2438
    %v2616 = vunpack.c.h.b16 %v2438
    %v2617 = vunpack.c.l.b16 %v2439
    %v2618 = vunpack.c.h.b16 %v2439
    %v2619 = vunpack.c.l.b16 %v2440
    %v2620 = vunpack.c.h.b16 %v2440
    %v2621 = vunpack.c.l.b16 %v2441
    %v2622 = vunpack.c.h.b16 %v2441
    %v2623 = vunpack.c.l.b16 %v2442
    %v2624 = vunpack.c.h.b16 %v2442
    %v2625 = vunpack.c.l.b16 %v2443
    %v2626 = vunpack.c.h.b16 %v2443
    %v2627 = vunpack.c.l.b16 %v2444
    %v2628 = vunpack.c.h.b16 %v2444
    %v2629 = vunpack.c.l.b16 %v2445
    %v2630 = vunpack.c.h.b16 %v2445
    %v2631 = vunpack.c.l.b16 %v2446
    %v2632 = vunpack.c.h.b16 %v2446
    %v2633 = vunpack.c.l.b16 %v2447
    %v2634 = vunpack.c.h.b16 %v2447
    %v2635 = vunpack.c.l.b16 %v2448
    %v2636 = vunpack.c.h.b16 %v2448
    %v2637 = vunpack.c.l.b16 %v2449
    %v2638 = vunpack.c.h.b16 %v2449
    %v2639 = vunpack.c.l.b16 %v2450
    %v2640 = vunpack.c.h.b16 %v2450
    %v2641 = vunpack.c.l.b16 %v2451
    %v2642 = vunpack.c.h.b16 %v2451
    %v2643 = vunpack.c.l.b16 %v2452
    %v2644 = vunpack.c.h.b16 %v2452
    %v2645 = vunpack.c.l.b16 %v2453
    %v2646 = vunpack.c.h.b16 %v2453
    %v2647 = vunpack.c.l.b16 %v2454
    %v2648 = vunpack.c.h.b16 %v2454
    %v2649 = vunpack.c.l.b16 %v2455
    %v2650 = vunpack.c.h.b16 %v2455
    %v2651 = vunpack.c.l.b16 %v2456
    %v2652 = vunpack.c.h.b16 %v2456
    %v2653 = vunpack.c.l.b16 %v2457
    %v2654 = vunpack.c.h.b16 %v2457
    %v2655 = vunpack.c.l.b16 %v2458
    %v2656 = vunpack.c.h.b16 %v2458
    %v2657 = vpack.c.b16 %v2533, %v2529
    %v2658 = vpack.c.b16 %v2534, %v2530
    %v2659 = vpack.c.b16 %v2535, %v2531
    %v2660 = vpack.c.b16 %v2536, %v2532
    %v2661 = vpack.c.b16 %v2541, %v2537
    %v2662 = vpack.c.b16 %v2542, %v2538
    %v2663 = vpack.c.b16 %v2543, %v2539
    %v2664 = vpack.c.b16 %v2544, %v2540
    %v2665 = vpack.c.b16 %v2549, %v2545
    %v2666 = vpack.c.b16 %v2550, %v2546
    %v2667 = vpack.c.b16 %v2551, %v2547
    %v2668 = vpack.c.b16 %v2552, %v2548
    %v2669 = vpack.c.b16 %v2557, %v2553
    %v2670 = vpack.c.b16 %v2558, %v2554
    %v2671 = vpack.c.b16 %v2559, %v2555
    %v2672 = vpack.c.b16 %v2560, %v2556
    %v2673 = vpack.c.b16 %v2565, %v2561
    %v2674 = vpack.c.b16 %v2566, %v2562
    %v2675 = vpack.c.b16 %v2567, %v2563
    %v2676 = vpack.c.b16 %v2568, %v2564
    %v2677 = vpack.c.b16 %v2573, %v2569
    %v2678 = vpack.c.b16 %v2574, %v2570
    %v2679 = vpack.c.b16 %v2575, %v2571
    %v2680 = vpack.c.b16 %v2576, %v2572
    %v2681 = vpack.c.b16 %v2581, %v2577
    %v2682 = vpack.c.b16 %v2582, %v2578
    %v2683 = vpack.c.b16 %v2583, %v2579
    %v2684 = vpack.c.b16 %v2584, %v2580
    %v2685 = vpack.c.b16 %v2589, %v2585
    %v2686 = vpack.c.b16 %v2590, %v2586
    %v2687 = vpack.c.b16 %v2591, %v2587
    %v2688 = vpack.c.b16 %v2592, %v2588
    %v2689 = vpack.c.b16 %v2597, %v2593
    %v2690 = vpack.c.b16 %v2598, %v2594
    %v2691 = vpack.c.b16 %v2599, %v2595
    %v2692 = vpack.c.b16 %v2600, %v2596
    %v2693 = vpack.c.b16 %v2605, %v2601
    %v2694 = vpack.c.b16 %v2606, %v2602
    %v2695 = vpack.c.b16 %v2607, %v2603
    %v2696 = vpack.c.b16 %v2608, %v2604
    %v2697 = vpack.c.b16 %v2613, %v2609
    %v2698 = vpack.c.b16 %v2614, %v2610
    %v2699 = vpack.c.b16 %v2615, %v2611
    %v2700 = vpack.c.b16 %v2616, %v2612
    %v2701 = vpack.c.b16 %v2621, %v2617
    %v2702 = vpack.c.b16 %v2622, %v2618
    %v2703 = vpack.c.b16 %v2623, %v2619
    %v2704 = vpack.c.b16 %v2624, %v2620
    %v2705 = vpack.c.b16 %v2629, %v2625
    %v2706 = vpack.c.b16 %v2630, %v2626
    %v2707 = vpack.c.b16 %v2631, %v2627
    %v2708 = vpack.c.b16 %v2632, %v2628
    %v2709 = vpack.c.b16 %v2637, %v2633
    %v2710 = vpack.c.b16 %v2638, %v2634
    %v2711 = vpack.c.b16 %v2639, %v2635
    %v2712 = vpack.c.b16 %v2640, %v2636
    %v2713 = vpack.c.b16 %v2645, %v2641
    %v2714 = vpack.c.b16 %v2646, %v2642
    %v2715 = vpack.c.b16 %v2647, %v2643
    %v2716 = vpack.c.b16 %v2648, %v2644
    %v2717 = vpack.c.b16 %v2653, %v2649
    %v2718 = vpack.c.b16 %v2654, %v2650
    %v2719 = vpack.c.b16 %v2655, %v2651
    %v2720 = vpack.c.b16 %v2656, %v2652
    %2785 = vmatprep.subr.bf16.mxu0 %v2658
    %2786 = vmatpush1.bf16.msra.mxu0 %v2657
    %2787 = vmatprep.subr.bf16.mxu0 %v2662
    %2788 = vmatpush1.bf16.msra.mxu0 %v2661
    %2789 = vmatprep.subr.bf16.mxu0 %v2666
    %2790 = vmatpush1.bf16.msra.mxu0 %v2665
    %2791 = vmatprep.subr.bf16.mxu0 %v2670
    %2792 = vmatpush1.bf16.msra.mxu0 %v2669
    %2793 = vmatprep.subr.bf16.mxu0 %v2674
    %2794 = vmatpush1.bf16.msra.mxu0 %v2673
    %2795 = vmatprep.subr.bf16.mxu0 %v2678
    %2796 = vmatpush1.bf16.msra.mxu0 %v2677
    %2797 = vmatprep.subr.bf16.mxu0 %v2682
    %2798 = vmatpush1.bf16.msra.mxu0 %v2681
    %2799 = vmatprep.subr.bf16.mxu0 %v2686
    %2800 = vmatpush1.bf16.msra.mxu0 %v2685
    %2801 = vmatprep.subr.bf16.mxu0 %v2690
    %2802 = vmatpush1.bf16.msra.mxu0 %v2689
    %2803 = vmatprep.subr.bf16.mxu0 %v2694
    %2804 = vmatpush1.bf16.msra.mxu0 %v2693
    %2805 = vmatprep.subr.bf16.mxu0 %v2698
    %2806 = vmatpush1.bf16.msra.mxu0 %v2697
    %2807 = vmatprep.subr.bf16.mxu0 %v2702
    %2808 = vmatpush1.bf16.msra.mxu0 %v2701
    %2809 = vmatprep.subr.bf16.mxu0 %v2706
    %2810 = vmatpush1.bf16.msra.mxu0 %v2705
    %2811 = vmatprep.subr.bf16.mxu0 %v2710
    %2812 = vmatpush1.bf16.msra.mxu0 %v2709
    %2813 = vmatprep.subr.bf16.mxu0 %v2714
    %2814 = vmatpush1.bf16.msra.mxu0 %v2713
    %2815 = vmatprep.subr.bf16.mxu0 %v2718
    %2816 = vmatpush1.bf16.msra.mxu0 %v2717
    %2817 = vmatprep.mubr.bf16.mxu0 %v2462
    %2818 = vmatmul.mubr.bf16.gmra.mrb[0].mxu0 %v2461
    %v2819 = vpop.f32.mrb[0].mxu0
    %v2820 = vadd.f32 0.0, %v2819
    %v2821 = vpop.f32.mrb[0].mxu0
    %v2822 = vadd.f32 0.0, %v2821
    %v2823 = vpop.f32.mrb[0].mxu0
    %v2824 = vpop.f32.mrb[0].mxu0
    %2825 = vdwg.mxu0
    %2826 = vmatprep.subr.bf16.mxu0 %v2660
    %2827 = vmatpush1.bf16.msra.mxu0 %v2659
    %2828 = vmatprep.subr.bf16.mxu0 %v2664
    %2829 = vmatpush1.bf16.msra.mxu0 %v2663
    %2830 = vmatprep.subr.bf16.mxu0 %v2668
    %2831 = vmatpush1.bf16.msra.mxu0 %v2667
    %2832 = vmatprep.subr.bf16.mxu0 %v2672
    %2833 = vmatpush1.bf16.msra.mxu0 %v2671
    %2834 = vmatprep.subr.bf16.mxu0 %v2676
    %2835 = vmatpush1.bf16.msra.mxu0 %v2675
    %2836 = vmatprep.subr.bf16.mxu0 %v2680
    %2837 = vmatpush1.bf16.msra.mxu0 %v2679
    %2838 = vmatprep.subr.bf16.mxu0 %v2684
    %2839 = vmatpush1.bf16.msra.mxu0 %v2683
    %2840 = vmatprep.subr.bf16.mxu0 %v2688
    %2841 = vmatpush1.bf16.msra.mxu0 %v2687
    %2842 = vmatprep.subr.bf16.mxu0 %v2692
    %2843 = vmatpush1.bf16.msra.mxu0 %v2691
    %2844 = vmatprep.subr.bf16.mxu0 %v2696
    %2845 = vmatpush1.bf16.msra.mxu0 %v2695
    %2846 = vmatprep.subr.bf16.mxu0 %v2700
    %2847 = vmatpush1.bf16.msra.mxu0 %v2699
    %2848 = vmatprep.subr.bf16.mxu0 %v2704
    %2849 = vmatpush1.bf16.msra.mxu0 %v2703
    %2850 = vmatprep.subr.bf16.mxu0 %v2708
    %2851 = vmatpush1.bf16.msra.mxu0 %v2707
    %2852 = vmatprep.subr.bf16.mxu0 %v2712
    %2853 = vmatpush1.bf16.msra.mxu0 %v2711
    %2854 = vmatprep.subr.bf16.mxu0 %v2716
    %2855 = vmatpush1.bf16.msra.mxu0 %v2715
    %2856 = vmatprep.subr.bf16.mxu0 %v2720
    %2857 = vmatpush1.bf16.msra.mxu0 %v2719
    %2858 = vmatprep.mubr.bf16.mxu0 %v2462
    %2859 = vmatmul.mubr.bf16.gmra.mrb[0].mxu0 %v2461
    %v2860 = vpop.f32.mrb[0].mxu0
    %v2861 = vadd.f32 0.0, %v2860
    %v2862 = vpop.f32.mrb[0].mxu0
    %v2863 = vadd.f32 0.0, %v2862
    %v2864 = vpop.f32.mrb[0].mxu0
    %v2865 = vpop.f32.mrb[0].mxu0
    %2866 = vdwg.mxu0
    %v2867 = vadd.f32 %v2390, %v2820
    %v2868 = vadd.f32 %v2391, %v2822
    %v2869 = vadd.f32 %v2392, %v2861
    %v2870 = vadd.f32 %v2393, %v2863
    %v2871 = vld [vmem:[%s7] sm:$0xf]
    %v2873 = vlaneseq
    %v2874 = vshrl.u32 %v2873, 7
    %v2875 = vsub.s32 0, %v2874
    %v2876 = vrot.slane %v2871, %v2875
    %v2877 = vlaneseq
    %v2878 = vshrl.u32 %v2877, 7
    %v2879 = vsub.s32 1, %v2878
    %v2880 = vrot.slane %v2871, %v2879
    %v2881 = vlaneseq
    %v2882 = vshrl.u32 %v2881, 7
    %v2883 = vsub.s32 2, %v2882
    %v2884 = vrot.slane %v2871, %v2883
    %v2885 = vlaneseq
    %v2886 = vshrl.u32 %v2885, 7
    %v2887 = vsub.s32 3, %v2886
    %v2888 = vrot.slane %v2871, %v2887
    %v2893 = vadd.f32 %v2867, %v2876
    %v2894 = vadd.f32 %v2868, %v2880
    %v2895 = vadd.f32 %v2869, %v2884
    %v2896 = vadd.f32 %v2870, %v2888
    %v2897 = vmax.f32 %v2893, 0.0
    %v2898 = vmax.f32 %v2894, 0.0
    %v2899 = vmax.f32 %v2895, 0.0
    %v2900 = vmax.f32 %v2896, 0.0
    %v2901 = vpack.c.bf16 %v2897, %v2897
    %v2902 = vpack.c.bf16 %v2898, %v2898
    %v2903 = vpack.c.bf16 %v2899, %v2899
    %v2904 = vpack.c.bf16 %v2900, %v2900
    %v2905 = vld [vmem:[#allocation6] sm:$0xf]
    %v2906 = vld [vmem:[#allocation6 + $0x4] sm:$0xf]
    %v2907 = vld [vmem:[#allocation6 + $0x8] sm:$0xf]
    %v2908 = vld [vmem:[#allocation6 + $0xc] sm:$0xf]
    %v2909 = vld [vmem:[#allocation6 + $0x10] sm:$0xf]
    %v2910 = vld [vmem:[#allocation6 + $0x14] sm:$0xf]
    %v2911 = vld [vmem:[#allocation6 + $0x18] sm:$0xf]
    %v2912 = vld [vmem:[#allocation6 + $0x1c] sm:$0xf]
    %v2913 = vld [vmem:[#allocation6 + $0x20] sm:$0xf]
    %v2914 = vld [vmem:[#allocation6 + $0x24] sm:$0xf]
    %v2915 = vld [vmem:[#allocation6 + $0x28] sm:$0xf]
    %v2916 = vld [vmem:[#allocation6 + $0x2c] sm:$0xf]
    %v2917 = vld [vmem:[#allocation6 + $0x30] sm:$0xf]
    %v2918 = vld [vmem:[#allocation6 + $0x34] sm:$0xf]
    %v2919 = vld [vmem:[#allocation6 + $0x38] sm:$0xf]
    %v2920 = vld [vmem:[#allocation6 + $0x3c] sm:$0xf]
    %v2921 = vld [vmem:[#allocation6 + $0x40] sm:$0xf]
    %v2922 = vld [vmem:[#allocation6 + $0x44] sm:$0xf]
    %v2923 = vld [vmem:[#allocation6 + $0x48] sm:$0xf]
    %v2924 = vld [vmem:[#allocation6 + $0x4c] sm:$0xf]
    %v2925 = vld [vmem:[#allocation6 + $0x50] sm:$0xf]
    %v2926 = vld [vmem:[#allocation6 + $0x54] sm:$0xf]
    %v2927 = vld [vmem:[#allocation6 + $0x58] sm:$0xf]
    %v2928 = vld [vmem:[#allocation6 + $0x5c] sm:$0xf]
    %v2929 = vld [vmem:[#allocation6 + $0x60] sm:$0xf]
    %v2930 = vld [vmem:[#allocation6 + $0x64] sm:$0xf]
    %v2931 = vld [vmem:[#allocation6 + $0x68] sm:$0xf]
    %v2932 = vld [vmem:[#allocation6 + $0x6c] sm:$0xf]
    %v2933 = vld [vmem:[#allocation6 + $0x70] sm:$0xf]
    %v2934 = vld [vmem:[#allocation6 + $0x74] sm:$0xf]
    %v2935 = vld [vmem:[#allocation6 + $0x78] sm:$0xf]
    %v2936 = vld [vmem:[#allocation6 + $0x7c] sm:$0xf]
    %v2937 = vld [vmem:[#allocation6 + $0x80] sm:$0xf]
    %v2938 = vld [vmem:[#allocation6 + $0x84] sm:$0xf]
    %v2939 = vld [vmem:[#allocation6 + $0x88] sm:$0xf]
    %v2940 = vld [vmem:[#allocation6 + $0x8c] sm:$0xf]
    %v2941 = vld [vmem:[#allocation6 + $0x90] sm:$0xf]
    %v2942 = vld [vmem:[#allocation6 + $0x94] sm:$0xf]
    %v2943 = vld [vmem:[#allocation6 + $0x98] sm:$0xf]
    %v2944 = vld [vmem:[#allocation6 + $0x9c] sm:$0xf]
    %v2945 = vld [vmem:[#allocation6 + $0xa0] sm:$0xf]
    %v2946 = vld [vmem:[#allocation6 + $0xa4] sm:$0xf]
    %v2947 = vld [vmem:[#allocation6 + $0xa8] sm:$0xf]
    %v2948 = vld [vmem:[#allocation6 + $0xac] sm:$0xf]
    %v2949 = vld [vmem:[#allocation6 + $0xb0] sm:$0xf]
    %v2950 = vld [vmem:[#allocation6 + $0xb4] sm:$0xf]
    %v2951 = vld [vmem:[#allocation6 + $0xb8] sm:$0xf]
    %v2952 = vld [vmem:[#allocation6 + $0xbc] sm:$0xf]
    %v2953 = vld [vmem:[#allocation6 + $0xc0] sm:$0xf]
    %v2954 = vld [vmem:[#allocation6 + $0xc4] sm:$0xf]
    %v2955 = vld [vmem:[#allocation6 + $0xc8] sm:$0xf]
    %v2956 = vld [vmem:[#allocation6 + $0xcc] sm:$0xf]
    %v2957 = vld [vmem:[#allocation6 + $0xd0] sm:$0xf]
    %v2958 = vld [vmem:[#allocation6 + $0xd4] sm:$0xf]
    %v2959 = vld [vmem:[#allocation6 + $0xd8] sm:$0xf]
    %v2960 = vld [vmem:[#allocation6 + $0xdc] sm:$0xf]
    %v2961 = vld [vmem:[#allocation6 + $0xe0] sm:$0xf]
    %v2962 = vld [vmem:[#allocation6 + $0xe4] sm:$0xf]
    %v2963 = vld [vmem:[#allocation6 + $0xe8] sm:$0xf]
    %v2964 = vld [vmem:[#allocation6 + $0xec] sm:$0xf]
    %v2965 = vld [vmem:[#allocation6 + $0xf0] sm:$0xf]
    %v2966 = vld [vmem:[#allocation6 + $0xf4] sm:$0xf]
    %v2967 = vld [vmem:[#allocation6 + $0xf8] sm:$0xf]
    %v2968 = vld [vmem:[#allocation6 + $0xfc] sm:$0xf]
    %v2969 = vld [vmem:[%s9] sm:$0x1]
    %v2971 = vlaneseq
    %v2972 = vshrl.u32 %v2971, 7
    %v2973 = vsub.s32 0, %v2972
    %v2974 = vrot.slane %v2969, %v2973
    %v3040 = vunpack.c.l.b16 %v2905
    %v3041 = vunpack.c.l.b16 %v2906
    %v3042 = vunpack.c.l.b16 %v2907
    %v3043 = vunpack.c.l.b16 %v2908
    %v3044 = vunpack.c.l.b16 %v2909
    %v3045 = vunpack.c.l.b16 %v2910
    %v3046 = vunpack.c.l.b16 %v2911
    %v3047 = vunpack.c.l.b16 %v2912
    %v3048 = vunpack.c.l.b16 %v2913
    %v3049 = vunpack.c.l.b16 %v2914
    %v3050 = vunpack.c.l.b16 %v2915
    %v3051 = vunpack.c.l.b16 %v2916
    %v3052 = vunpack.c.l.b16 %v2917
    %v3053 = vunpack.c.l.b16 %v2918
    %v3054 = vunpack.c.l.b16 %v2919
    %v3055 = vunpack.c.l.b16 %v2920
    %v3056 = vunpack.c.l.b16 %v2921
    %v3057 = vunpack.c.l.b16 %v2922
    %v3058 = vunpack.c.l.b16 %v2923
    %v3059 = vunpack.c.l.b16 %v2924
    %v3060 = vunpack.c.l.b16 %v2925
    %v3061 = vunpack.c.l.b16 %v2926
    %v3062 = vunpack.c.l.b16 %v2927
    %v3063 = vunpack.c.l.b16 %v2928
    %v3064 = vunpack.c.l.b16 %v2929
    %v3065 = vunpack.c.l.b16 %v2930
    %v3066 = vunpack.c.l.b16 %v2931
    %v3067 = vunpack.c.l.b16 %v2932
    %v3068 = vunpack.c.l.b16 %v2933
    %v3069 = vunpack.c.l.b16 %v2934
    %v3070 = vunpack.c.l.b16 %v2935
    %v3071 = vunpack.c.l.b16 %v2936
    %v3072 = vunpack.c.l.b16 %v2937
    %v3073 = vunpack.c.l.b16 %v2938
    %v3074 = vunpack.c.l.b16 %v2939
    %v3075 = vunpack.c.l.b16 %v2940
    %v3076 = vunpack.c.l.b16 %v2941
    %v3077 = vunpack.c.l.b16 %v2942
    %v3078 = vunpack.c.l.b16 %v2943
    %v3079 = vunpack.c.l.b16 %v2944
    %v3080 = vunpack.c.l.b16 %v2945
    %v3081 = vunpack.c.l.b16 %v2946
    %v3082 = vunpack.c.l.b16 %v2947
    %v3083 = vunpack.c.l.b16 %v2948
    %v3084 = vunpack.c.l.b16 %v2949
    %v3085 = vunpack.c.l.b16 %v2950
    %v3086 = vunpack.c.l.b16 %v2951
    %v3087 = vunpack.c.l.b16 %v2952
    %v3088 = vunpack.c.l.b16 %v2953
    %v3089 = vunpack.c.l.b16 %v2954
    %v3090 = vunpack.c.l.b16 %v2955
    %v3091 = vunpack.c.l.b16 %v2956
    %v3092 = vunpack.c.l.b16 %v2957
    %v3093 = vunpack.c.l.b16 %v2958
    %v3094 = vunpack.c.l.b16 %v2959
    %v3095 = vunpack.c.l.b16 %v2960
    %v3096 = vunpack.c.l.b16 %v2961
    %v3097 = vunpack.c.l.b16 %v2962
    %v3098 = vunpack.c.l.b16 %v2963
    %v3099 = vunpack.c.l.b16 %v2964
    %v3100 = vunpack.c.l.b16 %v2965
    %v3101 = vunpack.c.l.b16 %v2966
    %v3102 = vunpack.c.l.b16 %v2967
    %v3103 = vunpack.c.l.b16 %v2968
    %v3104 = vpack.c.b16 %v3041, %v3040
    %v3105 = vpack.c.b16 %v3043, %v3042
    %v3106 = vpack.c.b16 %v3045, %v3044
    %v3107 = vpack.c.b16 %v3047, %v3046
    %v3108 = vpack.c.b16 %v3049, %v3048
    %v3109 = vpack.c.b16 %v3051, %v3050
    %v3110 = vpack.c.b16 %v3053, %v3052
    %v3111 = vpack.c.b16 %v3055, %v3054
    %v3112 = vpack.c.b16 %v3057, %v3056
    %v3113 = vpack.c.b16 %v3059, %v3058
    %v3114 = vpack.c.b16 %v3061, %v3060
    %v3115 = vpack.c.b16 %v3063, %v3062
    %v3116 = vpack.c.b16 %v3065, %v3064
    %v3117 = vpack.c.b16 %v3067, %v3066
    %v3118 = vpack.c.b16 %v3069, %v3068
    %v3119 = vpack.c.b16 %v3071, %v3070
    %v3120 = vpack.c.b16 %v3073, %v3072
    %v3121 = vpack.c.b16 %v3075, %v3074
    %v3122 = vpack.c.b16 %v3077, %v3076
    %v3123 = vpack.c.b16 %v3079, %v3078
    %v3124 = vpack.c.b16 %v3081, %v3080
    %v3125 = vpack.c.b16 %v3083, %v3082
    %v3126 = vpack.c.b16 %v3085, %v3084
    %v3127 = vpack.c.b16 %v3087, %v3086
    %v3128 = vpack.c.b16 %v3089, %v3088
    %v3129 = vpack.c.b16 %v3091, %v3090
    %v3130 = vpack.c.b16 %v3093, %v3092
    %v3131 = vpack.c.b16 %v3095, %v3094
    %v3132 = vpack.c.b16 %v3097, %v3096
    %v3133 = vpack.c.b16 %v3099, %v3098
    %v3134 = vpack.c.b16 %v3101, %v3100
    %v3135 = vpack.c.b16 %v3103, %v3102
    %3168 = vmatprep.subr.bf16.mxu0 0
    %3169 = vmatpush1.bf16.msra.mxu0 %v3104
    %3170 = vmatprep.subr.bf16.mxu0 0
    %3171 = vmatpush1.bf16.msra.mxu0 %v3105
    %3172 = vmatprep.subr.bf16.mxu0 0
    %3173 = vmatpush1.bf16.msra.mxu0 %v3106
    %3174 = vmatprep.subr.bf16.mxu0 0
    %3175 = vmatpush1.bf16.msra.mxu0 %v3107
    %3176 = vmatprep.subr.bf16.mxu0 0
    %3177 = vmatpush1.bf16.msra.mxu0 %v3108
    %3178 = vmatprep.subr.bf16.mxu0 0
    %3179 = vmatpush1.bf16.msra.mxu0 %v3109
    %3180 = vmatprep.subr.bf16.mxu0 0
    %3181 = vmatpush1.bf16.msra.mxu0 %v3110
    %3182 = vmatprep.subr.bf16.mxu0 0
    %3183 = vmatpush1.bf16.msra.mxu0 %v3111
    %3184 = vmatprep.subr.bf16.mxu0 0
    %3185 = vmatpush1.bf16.msra.mxu0 %v3112
    %3186 = vmatprep.subr.bf16.mxu0 0
    %3187 = vmatpush1.bf16.msra.mxu0 %v3113
    %3188 = vmatprep.subr.bf16.mxu0 0
    %3189 = vmatpush1.bf16.msra.mxu0 %v3114
    %3190 = vmatprep.subr.bf16.mxu0 0
    %3191 = vmatpush1.bf16.msra.mxu0 %v3115
    %3192 = vmatprep.subr.bf16.mxu0 0
    %3193 = vmatpush1.bf16.msra.mxu0 %v3116
    %3194 = vmatprep.subr.bf16.mxu0 0
    %3195 = vmatpush1.bf16.msra.mxu0 %v3117
    %3196 = vmatprep.subr.bf16.mxu0 0
    %3197 = vmatpush1.bf16.msra.mxu0 %v3118
    %3198 = vmatprep.subr.bf16.mxu0 0
    %3199 = vmatpush1.bf16.msra.mxu0 %v3119
    %3200 = vmatprep.mubr.bf16.mxu0 %v2902
    %3201 = vmatmul.mubr.bf16.gmra.mrb[0].mxu0 %v2901
    %v3202 = vpop.f32.mrb[0].mxu0
    %v3203 = vadd.f32 %v2974, %v3202
    %v3204 = vpop.f32.mrb[0].mxu0
    %v3205 = vpop.f32.mrb[0].mxu0
    %v3206 = vpop.f32.mrb[0].mxu0
    %3207 = vdwg.mxu0
    %3208 = vmatprep.subr.bf16.mxu0 0
    %3209 = vmatpush1.bf16.msra.mxu0 %v3120
    %3210 = vmatprep.subr.bf16.mxu0 0
    %3211 = vmatpush1.bf16.msra.mxu0 %v3121
    %3212 = vmatprep.subr.bf16.mxu0 0
    %3213 = vmatpush1.bf16.msra.mxu0 %v3122
    %3214 = vmatprep.subr.bf16.mxu0 0
    %3215 = vmatpush1.bf16.msra.mxu0 %v3123
    %3216 = vmatprep.subr.bf16.mxu0 0
    %3217 = vmatpush1.bf16.msra.mxu0 %v3124
    %3218 = vmatprep.subr.bf16.mxu0 0
    %3219 = vmatpush1.bf16.msra.mxu0 %v3125
    %3220 = vmatprep.subr.bf16.mxu0 0
    %3221 = vmatpush1.bf16.msra.mxu0 %v3126
    %3222 = vmatprep.subr.bf16.mxu0 0
    %3223 = vmatpush1.bf16.msra.mxu0 %v3127
    %3224 = vmatprep.subr.bf16.mxu0 0
    %3225 = vmatpush1.bf16.msra.mxu0 %v3128
    %3226 = vmatprep.subr.bf16.mxu0 0
    %3227 = vmatpush1.bf16.msra.mxu0 %v3129
    %3228 = vmatprep.subr.bf16.mxu0 0
    %3229 = vmatpush1.bf16.msra.mxu0 %v3130
    %3230 = vmatprep.subr.bf16.mxu0 0
    %3231 = vmatpush1.bf16.msra.mxu0 %v3131
    %3232 = vmatprep.subr.bf16.mxu0 0
    %3233 = vmatpush1.bf16.msra.mxu0 %v3132
    %3234 = vmatprep.subr.bf16.mxu0 0
    %3235 = vmatpush1.bf16.msra.mxu0 %v3133
    %3236 = vmatprep.subr.bf16.mxu0 0
    %3237 = vmatpush1.bf16.msra.mxu0 %v3134
    %3238 = vmatprep.subr.bf16.mxu0 0
    %3239 = vmatpush1.bf16.msra.mxu0 %v3135
    %3240 = vmatprep.mubr.bf16.mxu0 %v2904
    %3241 = vmatmul.mubr.bf16.gmra.mrb[0].mxu0 %v2903
    %v3242 = vpop.f32.mrb[0].mxu0
    %v3243 = vadd.f32 %v3203, %v3242
    %v3244 = vpop.f32.mrb[0].mxu0
    %v3245 = vpop.f32.mrb[0].mxu0
    %v3246 = vpop.f32.mrb[0].mxu0
    %3247 = vdwg.mxu0
    %v3248 = vld [vmem:[%s1] sm:$0xff]
    %v3249 = vld [vmem:[%s1 + $0x8] sm:$0xff]
    %v3250 = vld [vmem:[%s1 + $0x10] sm:$0xff]
    %v3251 = vld [vmem:[%s1 + $0x18] sm:$0xff]
    %v3252 = vld [vmem:[%s1 + $0x20] sm:$0xff]
    %v3253 = vld [vmem:[%s1 + $0x28] sm:$0xff]
    %v3254 = vld [vmem:[%s1 + $0x30] sm:$0xff]
    %v3255 = vld [vmem:[%s1 + $0x38] sm:$0xff]
    %v3256 = vld [vmem:[%s1 + $0x40] sm:$0xff]
    %v3257 = vld [vmem:[%s1 + $0x48] sm:$0xff]
    %v3258 = vld [vmem:[%s1 + $0x50] sm:$0xff]
    %v3259 = vld [vmem:[%s1 + $0x58] sm:$0xff]
    %v3260 = vld [vmem:[#allocation2] sm:$0xff]
    %v3261 = vld [vmem:[#allocation2 + $0x8] sm:$0xff]
    %v3262 = vld [vmem:[#allocation2 + $0x10] sm:$0xff]
    %v3263 = vld [vmem:[#allocation2 + $0x18] sm:$0xff]
    %v3264 = vld [vmem:[#allocation2 + $0x20] sm:$0xff]
    %v3265 = vld [vmem:[#allocation2 + $0x28] sm:$0xff]
    %v3266 = vld [vmem:[#allocation2 + $0x30] sm:$0xff]
    %v3267 = vld [vmem:[#allocation2 + $0x38] sm:$0xff]
    %v3268 = vld [vmem:[#allocation2 + $0x40] sm:$0xff]
    %v3269 = vld [vmem:[#allocation2 + $0x48] sm:$0xff]
    %v3270 = vld [vmem:[#allocation2 + $0x50] sm:$0xff]
    %v3271 = vld [vmem:[#allocation2 + $0x58] sm:$0xff]
    %v3272 = vld [vmem:[#allocation2 + $0x60] sm:$0xff]
    %v3273 = vld [vmem:[#allocation2 + $0x68] sm:$0xff]
    %v3274 = vld [vmem:[#allocation2 + $0x70] sm:$0xff]
    %v3275 = vld [vmem:[#allocation2 + $0x78] sm:$0xff]
    %v3276 = vld [vmem:[#allocation2 + $0x80] sm:$0xff]
    %v3277 = vld [vmem:[#allocation2 + $0x88] sm:$0xff]
    %v3278 = vld [vmem:[#allocation2 + $0x90] sm:$0xff]
    %v3279 = vld [vmem:[#allocation2 + $0x98] sm:$0xff]
    %v3280 = vld [vmem:[#allocation2 + $0xa0] sm:$0xff]
    %v3281 = vld [vmem:[#allocation2 + $0xa8] sm:$0xff]
    %v3282 = vld [vmem:[#allocation2 + $0xb0] sm:$0xff]
    %v3283 = vld [vmem:[#allocation2 + $0xb8] sm:$0xff]
    %v3284 = vld [vmem:[#allocation2 + $0xc0] sm:$0xff]
    %v3285 = vld [vmem:[#allocation2 + $0xc8] sm:$0xff]
    %v3286 = vld [vmem:[#allocation2 + $0xd0] sm:$0xff]
    %v3287 = vld [vmem:[#allocation2 + $0xd8] sm:$0xff]
    %v3288 = vld [vmem:[#allocation2 + $0xe0] sm:$0xff]
    %v3289 = vld [vmem:[#allocation2 + $0xe8] sm:$0xff]
    %v3290 = vld [vmem:[#allocation2 + $0xf0] sm:$0xff]
    %v3291 = vld [vmem:[#allocation2 + $0xf8] sm:$0xff]
    %v3292 = vld [vmem:[#allocation2 + $0x100] sm:$0xff]
    %v3293 = vld [vmem:[#allocation2 + $0x108] sm:$0xff]
    %v3294 = vld [vmem:[#allocation2 + $0x110] sm:$0xff]
    %v3295 = vld [vmem:[#allocation2 + $0x118] sm:$0xff]
    %v3296 = vld [vmem:[#allocation2 + $0x120] sm:$0xff]
    %v3297 = vld [vmem:[#allocation2 + $0x128] sm:$0xff]
    %v3298 = vld [vmem:[#allocation2 + $0x130] sm:$0xff]
    %v3299 = vld [vmem:[#allocation2 + $0x138] sm:$0xff]
    %v3300 = vld [vmem:[#allocation2 + $0x140] sm:$0xff]
    %v3301 = vld [vmem:[#allocation2 + $0x148] sm:$0xff]
    %v3302 = vld [vmem:[#allocation2 + $0x150] sm:$0xff]
    %v3303 = vld [vmem:[#allocation2 + $0x158] sm:$0xff]
    %v3304 = vld [vmem:[#allocation2 + $0x160] sm:$0xff]
    %v3305 = vld [vmem:[#allocation2 + $0x168] sm:$0xff]
    %v3306 = vld [vmem:[#allocation2 + $0x170] sm:$0xff]
    %v3307 = vld [vmem:[#allocation2 + $0x178] sm:$0xff]
    %v3308 = vld [vmem:[#allocation2 + $0x180] sm:$0xff]
    %v3309 = vld [vmem:[#allocation2 + $0x188] sm:$0xff]
    %v3310 = vld [vmem:[#allocation2 + $0x190] sm:$0xff]
    %v3311 = vld [vmem:[#allocation2 + $0x198] sm:$0xff]
    %v3312 = vld [vmem:[#allocation2 + $0x1a0] sm:$0xff]
    %v3313 = vld [vmem:[#allocation2 + $0x1a8] sm:$0xff]
    %v3314 = vld [vmem:[#allocation2 + $0x1b0] sm:$0xff]
    %v3315 = vld [vmem:[#allocation2 + $0x1b8] sm:$0xff]
    %v3316 = vld [vmem:[#allocation2 + $0x1c0] sm:$0xff]
    %v3317 = vld [vmem:[#allocation2 + $0x1c8] sm:$0xff]
    %v3318 = vld [vmem:[#allocation2 + $0x1d0] sm:$0xff]
    %v3319 = vld [vmem:[#allocation2 + $0x1d8] sm:$0xff]
    %v3320 = vld [vmem:[#allocation2 + $0x1e0] sm:$0xff]
    %v3321 = vld [vmem:[#allocation2 + $0x1e8] sm:$0xff]
    %v3322 = vld [vmem:[#allocation2 + $0x1f0] sm:$0xff]
    %v3323 = vld [vmem:[#allocation2 + $0x1f8] sm:$0xff]
    %v3324 = vld [vmem:[#allocation2 + $0x200] sm:$0xff]
    %v3325 = vld [vmem:[#allocation2 + $0x208] sm:$0xff]
    %v3326 = vld [vmem:[#allocation2 + $0x210] sm:$0xff]
    %v3327 = vld [vmem:[#allocation2 + $0x218] sm:$0xff]
    %v3328 = vld [vmem:[#allocation2 + $0x220] sm:$0xff]
    %v3329 = vld [vmem:[#allocation2 + $0x228] sm:$0xff]
    %v3330 = vld [vmem:[#allocation2 + $0x230] sm:$0xff]
    %v3331 = vld [vmem:[#allocation2 + $0x238] sm:$0xff]
    %v3332 = vld [vmem:[#allocation2 + $0x240] sm:$0xff]
    %v3333 = vld [vmem:[#allocation2 + $0x248] sm:$0xff]
    %v3334 = vld [vmem:[#allocation2 + $0x250] sm:$0xff]
    %v3335 = vld [vmem:[#allocation2 + $0x258] sm:$0xff]
    %v3336 = vld [vmem:[#allocation2 + $0x260] sm:$0xff]
    %v3337 = vld [vmem:[#allocation2 + $0x268] sm:$0xff]
    %v3338 = vld [vmem:[#allocation2 + $0x270] sm:$0xff]
    %v3339 = vld [vmem:[#allocation2 + $0x278] sm:$0xff]
    %v3340 = vld [vmem:[#allocation2 + $0x280] sm:$0xff]
    %v3341 = vld [vmem:[#allocation2 + $0x288] sm:$0xff]
    %v3342 = vld [vmem:[#allocation2 + $0x290] sm:$0xff]
    %v3343 = vld [vmem:[#allocation2 + $0x298] sm:$0xff]
    %v3344 = vld [vmem:[#allocation2 + $0x2a0] sm:$0xff]
    %v3345 = vld [vmem:[#allocation2 + $0x2a8] sm:$0xff]
    %v3346 = vld [vmem:[#allocation2 + $0x2b0] sm:$0xff]
    %v3347 = vld [vmem:[#allocation2 + $0x2b8] sm:$0xff]
    %v3348 = vld [vmem:[#allocation2 + $0x2c0] sm:$0xff]
    %v3349 = vld [vmem:[#allocation2 + $0x2c8] sm:$0xff]
    %v3350 = vld [vmem:[#allocation2 + $0x2d0] sm:$0xff]
    %v3351 = vld [vmem:[#allocation2 + $0x2d8] sm:$0xff]
    %v3352 = vld [vmem:[#allocation2 + $0x2e0] sm:$0xff]
    %v3353 = vld [vmem:[#allocation2 + $0x2e8] sm:$0xff]
    %v3354 = vld [vmem:[#allocation2 + $0x2f0] sm:$0xff]
    %v3355 = vld [vmem:[#allocation2 + $0x2f8] sm:$0xff]
    %v3356 = vld [vmem:[%s5] sm:$0x3]
    %v3358 = vlaneseq
    %v3359 = vshrl.u32 %v3358, 7
    %v3360 = vsub.s32 0, %v3359
    %v3361 = vrot.slane %v3356, %v3360
    %v3362 = vlaneseq
    %v3363 = vshrl.u32 %v3362, 7
    %v3364 = vsub.s32 1, %v3363
    %v3365 = vrot.slane %v3356, %v3364
    %v3380 = vunpack.c.l.b16 %v3248
    %v3381 = vunpack.c.h.b16 %v3248
    %v3382 = vunpack.c.l.b16 %v3249
    %v3383 = vunpack.c.h.b16 %v3249
    %v3384 = vunpack.c.l.b16 %v3250
    %v3385 = vunpack.c.h.b16 %v3250
    %v3386 = vunpack.c.l.b16 %v3251
    %v3387 = vunpack.c.h.b16 %v3251
    %v3388 = vunpack.c.l.b16 %v3252
    %v3389 = vunpack.c.h.b16 %v3252
    %v3390 = vunpack.c.l.b16 %v3253
    %v3391 = vunpack.c.h.b16 %v3253
    %v3392 = vunpack.c.l.b16 %v3254
    %v3393 = vunpack.c.h.b16 %v3254
    %v3394 = vunpack.c.l.b16 %v3255
    %v3395 = vunpack.c.h.b16 %v3255
    %v3396 = vunpack.c.l.b16 %v3256
    %v3397 = vunpack.c.h.b16 %v3256
    %v3398 = vunpack.c.l.b16 %v3257
    %v3399 = vunpack.c.h.b16 %v3257
    %v3400 = vunpack.c.l.b16 %v3258
    %v3401 = vunpack.c.h.b16 %v3258
    %v3402 = vunpack.c.l.b16 %v3259
    %v3403 = vunpack.c.h.b16 %v3259
    %v3404 = vpack.c.b16 %v3386, %v3380
    %v3405 = vpack.c.b16 %v3387, %v3381
    %v3406 = vpack.c.b16 %v3388, %v3382
    %v3407 = vpack.c.b16 %v3389, %v3383
    %v3408 = vpack.c.b16 %v3390, %v3384
    %v3409 = vpack.c.b16 %v3391, %v3385
    %v3410 = vpack.c.b16 %v3398, %v3392
    %v3411 = vpack.c.b16 %v3399, %v3393
    %v3412 = vpack.c.b16 %v3400, %v3394
    %v3413 = vpack.c.b16 %v3401, %v3395
    %v3414 = vpack.c.b16 %v3402, %v3396
    %v3415 = vpack.c.b16 %v3403, %v3397
    %v3524 = vunpack.c.l.b16 %v3260
    %v3525 = vunpack.c.h.b16 %v3260
    %v3526 = vunpack.c.l.b16 %v3261
    %v3527 = vunpack.c.h.b16 %v3261
    %v3528 = vunpack.c.l.b16 %v3262
    %v3529 = vunpack.c.h.b16 %v3262
    %v3530 = vunpack.c.l.b16 %v3263
    %v3531 = vunpack.c.h.b16 %v3263
    %v3532 = vunpack.c.l.b16 %v3264
    %v3533 = vunpack.c.h.b16 %v3264
    %v3534 = vunpack.c.l.b16 %v3265
    %v3535 = vunpack.c.h.b16 %v3265
    %v3536 = vunpack.c.l.b16 %v3266
    %v3537 = vunpack.c.h.b16 %v3266
    %v3538 = vunpack.c.l.b16 %v3267
    %v3539 = vunpack.c.h.b16 %v3267
    %v3540 = vunpack.c.l.b16 %v3268
    %v3541 = vunpack.c.h.b16 %v3268
    %v3542 = vunpack.c.l.b16 %v3269
    %v3543 = vunpack.c.h.b16 %v3269
    %v3544 = vunpack.c.l.b16 %v3270
    %v3545 = vunpack.c.h.b16 %v3270
    %v3546 = vunpack.c.l.b16 %v3271
    %v3547 = vunpack.c.h.b16 %v3271
    %v3548 = vunpack.c.l.b16 %v3272
    %v3549 = vunpack.c.h.b16 %v3272
    %v3550 = vunpack.c.l.b16 %v3273
    %v3551 = vunpack.c.h.b16 %v3273
    %v3552 = vunpack.c.l.b16 %v3274
    %v3553 = vunpack.c.h.b16 %v3274
    %v3554 = vunpack.c.l.b16 %v3275
    %v3555 = vunpack.c.h.b16 %v3275
    %v3556 = vunpack.c.l.b16 %v3276
    %v3557 = vunpack.c.h.b16 %v3276
    %v3558 = vunpack.c.l.b16 %v3277
    %v3559 = vunpack.c.h.b16 %v3277
    %v3560 = vunpack.c.l.b16 %v3278
    %v3561 = vunpack.c.h.b16 %v3278
    %v3562 = vunpack.c.l.b16 %v3279
    %v3563 = vunpack.c.h.b16 %v3279
    %v3564 = vunpack.c.l.b16 %v3280
    %v3565 = vunpack.c.h.b16 %v3280
    %v3566 = vunpack.c.l.b16 %v3281
    %v3567 = vunpack.c.h.b16 %v3281
    %v3568 = vunpack.c.l.b16 %v3282
    %v3569 = vunpack.c.h.b16 %v3282
    %v3570 = vunpack.c.l.b16 %v3283
    %v3571 = vunpack.c.h.b16 %v3283
    %v3572 = vunpack.c.l.b16 %v3284
    %v3573 = vunpack.c.h.b16 %v3284
    %v3574 = vunpack.c.l.b16 %v3285
    %v3575 = vunpack.c.h.b16 %v3285
    %v3576 = vunpack.c.l.b16 %v3286
    %v3577 = vunpack.c.h.b16 %v3286
    %v3578 = vunpack.c.l.b16 %v3287
    %v3579 = vunpack.c.h.b16 %v3287
    %v3580 = vunpack.c.l.b16 %v3288
    %v3581 = vunpack.c.h.b16 %v3288
    %v3582 = vunpack.c.l.b16 %v3289
    %v3583 = vunpack.c.h.b16 %v3289
    %v3584 = vunpack.c.l.b16 %v3290
    %v3585 = vunpack.c.h.b16 %v3290
    %v3586 = vunpack.c.l.b16 %v3291
    %v3587 = vunpack.c.h.b16 %v3291
    %v3588 = vunpack.c.l.b16 %v3292
    %v3589 = vunpack.c.h.b16 %v3292
    %v3590 = vunpack.c.l.b16 %v3293
    %v3591 = vunpack.c.h.b16 %v3293
    %v3592 = vunpack.c.l.b16 %v3294
    %v3593 = vunpack.c.h.b16 %v3294
    %v3594 = vunpack.c.l.b16 %v3295
    %v3595 = vunpack.c.h.b16 %v3295
    %v3596 = vunpack.c.l.b16 %v3296
    %v3597 = vunpack.c.h.b16 %v3296
    %v3598 = vunpack.c.l.b16 %v3297
    %v3599 = vunpack.c.h.b16 %v3297
    %v3600 = vunpack.c.l.b16 %v3298
    %v3601 = vunpack.c.h.b16 %v3298
    %v3602 = vunpack.c.l.b16 %v3299
    %v3603 = vunpack.c.h.b16 %v3299
    %v3604 = vunpack.c.l.b16 %v3300
    %v3605 = vunpack.c.h.b16 %v3300
    %v3606 = vunpack.c.l.b16 %v3301
    %v3607 = vunpack.c.h.b16 %v3301
    %v3608 = vunpack.c.l.b16 %v3302
    %v3609 = vunpack.c.h.b16 %v3302
    %v3610 = vunpack.c.l.b16 %v3303
    %v3611 = vunpack.c.h.b16 %v3303
    %v3612 = vunpack.c.l.b16 %v3304
    %v3613 = vunpack.c.h.b16 %v3304
    %v3614 = vunpack.c.l.b16 %v3305
    %v3615 = vunpack.c.h.b16 %v3305
    %v3616 = vunpack.c.l.b16 %v3306
    %v3617 = vunpack.c.h.b16 %v3306
    %v3618 = vunpack.c.l.b16 %v3307
    %v3619 = vunpack.c.h.b16 %v3307
    %v3620 = vunpack.c.l.b16 %v3308
    %v3621 = vunpack.c.h.b16 %v3308
    %v3622 = vunpack.c.l.b16 %v3309
    %v3623 = vunpack.c.h.b16 %v3309
    %v3624 = vunpack.c.l.b16 %v3310
    %v3625 = vunpack.c.h.b16 %v3310
    %v3626 = vunpack.c.l.b16 %v3311
    %v3627 = vunpack.c.h.b16 %v3311
    %v3628 = vunpack.c.l.b16 %v3312
    %v3629 = vunpack.c.h.b16 %v3312
    %v3630 = vunpack.c.l.b16 %v3313
    %v3631 = vunpack.c.h.b16 %v3313
    %v3632 = vunpack.c.l.b16 %v3314
    %v3633 = vunpack.c.h.b16 %v3314
    %v3634 = vunpack.c.l.b16 %v3315
    %v3635 = vunpack.c.h.b16 %v3315
    %v3636 = vunpack.c.l.b16 %v3316
    %v3637 = vunpack.c.h.b16 %v3316
    %v3638 = vunpack.c.l.b16 %v3317
    %v3639 = vunpack.c.h.b16 %v3317
    %v3640 = vunpack.c.l.b16 %v3318
    %v3641 = vunpack.c.h.b16 %v3318
    %v3642 = vunpack.c.l.b16 %v3319
    %v3643 = vunpack.c.h.b16 %v3319
    %v3644 = vunpack.c.l.b16 %v3320
    %v3645 = vunpack.c.h.b16 %v3320
    %v3646 = vunpack.c.l.b16 %v3321
    %v3647 = vunpack.c.h.b16 %v3321
    %v3648 = vunpack.c.l.b16 %v3322
    %v3649 = vunpack.c.h.b16 %v3322
    %v3650 = vunpack.c.l.b16 %v3323
    %v3651 = vunpack.c.h.b16 %v3323
    %v3652 = vunpack.c.l.b16 %v3324
    %v3653 = vunpack.c.h.b16 %v3324
    %v3654 = vunpack.c.l.b16 %v3325
    %v3655 = vunpack.c.h.b16 %v3325
    %v3656 = vunpack.c.l.b16 %v3326
    %v3657 = vunpack.c.h.b16 %v3326
    %v3658 = vunpack.c.l.b16 %v3327
    %v3659 = vunpack.c.h.b16 %v3327
    %v3660 = vunpack.c.l.b16 %v3328
    %v3661 = vunpack.c.h.b16 %v3328
    %v3662 = vunpack.c.l.b16 %v3329
    %v3663 = vunpack.c.h.b16 %v3329
    %v3664 = vunpack.c.l.b16 %v3330
    %v3665 = vunpack.c.h.b16 %v3330
    %v3666 = vunpack.c.l.b16 %v3331
    %v3667 = vunpack.c.h.b16 %v3331
    %v3668 = vunpack.c.l.b16 %v3332
    %v3669 = vunpack.c.h.b16 %v3332
    %v3670 = vunpack.c.l.b16 %v3333
    %v3671 = vunpack.c.h.b16 %v3333
    %v3672 = vunpack.c.l.b16 %v3334
    %v3673 = vunpack.c.h.b16 %v3334
    %v3674 = vunpack.c.l.b16 %v3335
    %v3675 = vunpack.c.h.b16 %v3335
    %v3676 = vunpack.c.l.b16 %v3336
    %v3677 = vunpack.c.h.b16 %v3336
    %v3678 = vunpack.c.l.b16 %v3337
    %v3679 = vunpack.c.h.b16 %v3337
    %v3680 = vunpack.c.l.b16 %v3338
    %v3681 = vunpack.c.h.b16 %v3338
    %v3682 = vunpack.c.l.b16 %v3339
    %v3683 = vunpack.c.h.b16 %v3339
    %v3684 = vunpack.c.l.b16 %v3340
    %v3685 = vunpack.c.h.b16 %v3340
    %v3686 = vunpack.c.l.b16 %v3341
    %v3687 = vunpack.c.h.b16 %v3341
    %v3688 = vunpack.c.l.b16 %v3342
    %v3689 = vunpack.c.h.b16 %v3342
    %v3690 = vunpack.c.l.b16 %v3343
    %v3691 = vunpack.c.h.b16 %v3343
    %v3692 = vunpack.c.l.b16 %v3344
    %v3693 = vunpack.c.h.b16 %v3344
    %v3694 = vunpack.c.l.b16 %v3345
    %v3695 = vunpack.c.h.b16 %v3345
    %v3696 = vunpack.c.l.b16 %v3346
    %v3697 = vunpack.c.h.b16 %v3346
    %v3698 = vunpack.c.l.b16 %v3347
    %v3699 = vunpack.c.h.b16 %v3347
    %v3700 = vunpack.c.l.b16 %v3348
    %v3701 = vunpack.c.h.b16 %v3348
    %v3702 = vunpack.c.l.b16 %v3349
    %v3703 = vunpack.c.h.b16 %v3349
    %v3704 = vunpack.c.l.b16 %v3350
    %v3705 = vunpack.c.h.b16 %v3350
    %v3706 = vunpack.c.l.b16 %v3351
    %v3707 = vunpack.c.h.b16 %v3351
    %v3708 = vunpack.c.l.b16 %v3352
    %v3709 = vunpack.c.h.b16 %v3352
    %v3710 = vunpack.c.l.b16 %v3353
    %v3711 = vunpack.c.h.b16 %v3353
    %v3712 = vunpack.c.l.b16 %v3354
    %v3713 = vunpack.c.h.b16 %v3354
    %v3714 = vunpack.c.l.b16 %v3355
    %v3715 = vunpack.c.h.b16 %v3355
    %v3716 = vpack.c.b16 %v3526, %v3524
    %v3717 = vpack.c.b16 %v3527, %v3525
    %v3718 = vpack.c.b16 %v3530, %v3528
    %v3719 = vpack.c.b16 %v3531, %v3529
    %v3720 = vpack.c.b16 %v3534, %v3532
    %v3721 = vpack.c.b16 %v3535, %v3533
    %v3722 = vpack.c.b16 %v3538, %v3536
    %v3723 = vpack.c.b16 %v3539, %v3537
    %v3724 = vpack.c.b16 %v3542, %v3540
    %v3725 = vpack.c.b16 %v3543, %v3541
    %v3726 = vpack.c.b16 %v3546, %v3544
    %v3727 = vpack.c.b16 %v3547, %v3545
    %v3728 = vpack.c.b16 %v3550, %v3548
    %v3729 = vpack.c.b16 %v3551, %v3549
    %v3730 = vpack.c.b16 %v3554, %v3552
    %v3731 = vpack.c.b16 %v3555, %v3553
    %v3732 = vpack.c.b16 %v3558, %v3556
    %v3733 = vpack.c.b16 %v3559, %v3557
    %v3734 = vpack.c.b16 %v3562, %v3560
    %v3735 = vpack.c.b16 %v3563, %v3561
    %v3736 = vpack.c.b16 %v3566, %v3564
    %v3737 = vpack.c.b16 %v3567, %v3565
    %v3738 = vpack.c.b16 %v3570, %v3568
    %v3739 = vpack.c.b16 %v3571, %v3569
    %v3740 = vpack.c.b16 %v3574, %v3572
    %v3741 = vpack.c.b16 %v3575, %v3573
    %v3742 = vpack.c.b16 %v3578, %v3576
    %v3743 = vpack.c.b16 %v3579, %v3577
    %v3744 = vpack.c.b16 %v3582, %v3580
    %v3745 = vpack.c.b16 %v3583, %v3581
    %v3746 = vpack.c.b16 %v3586, %v3584
    %v3747 = vpack.c.b16 %v3587, %v3585
    %v3748 = vpack.c.b16 %v3590, %v3588
    %v3749 = vpack.c.b16 %v3591, %v3589
    %v3750 = vpack.c.b16 %v3594, %v3592
    %v3751 = vpack.c.b16 %v3595, %v3593
    %v3752 = vpack.c.b16 %v3598, %v3596
    %v3753 = vpack.c.b16 %v3599, %v3597
    %v3754 = vpack.c.b16 %v3602, %v3600
    %v3755 = vpack.c.b16 %v3603, %v3601
    %v3756 = vpack.c.b16 %v3606, %v3604
    %v3757 = vpack.c.b16 %v3607, %v3605
    %v3758 = vpack.c.b16 %v3610, %v3608
    %v3759 = vpack.c.b16 %v3611, %v3609
    %v3760 = vpack.c.b16 %v3614, %v3612
    %v3761 = vpack.c.b16 %v3615, %v3613
    %v3762 = vpack.c.b16 %v3618, %v3616
    %v3763 = vpack.c.b16 %v3619, %v3617
    %v3764 = vpack.c.b16 %v3622, %v3620
    %v3765 = vpack.c.b16 %v3623, %v3621
    %v3766 = vpack.c.b16 %v3626, %v3624
    %v3767 = vpack.c.b16 %v3627, %v3625
    %v3768 = vpack.c.b16 %v3630, %v3628
    %v3769 = vpack.c.b16 %v3631, %v3629
    %v3770 = vpack.c.b16 %v3634, %v3632
    %v3771 = vpack.c.b16 %v3635, %v3633
    %v3772 = vpack.c.b16 %v3638, %v3636
    %v3773 = vpack.c.b16 %v3639, %v3637
    %v3774 = vpack.c.b16 %v3642, %v3640
    %v3775 = vpack.c.b16 %v3643, %v3641
    %v3776 = vpack.c.b16 %v3646, %v3644
    %v3777 = vpack.c.b16 %v3647, %v3645
    %v3778 = vpack.c.b16 %v3650, %v3648
    %v3779 = vpack.c.b16 %v3651, %v3649
    %v3780 = vpack.c.b16 %v3654, %v3652
    %v3781 = vpack.c.b16 %v3655, %v3653
    %v3782 = vpack.c.b16 %v3658, %v3656
    %v3783 = vpack.c.b16 %v3659, %v3657
    %v3784 = vpack.c.b16 %v3662, %v3660
    %v3785 = vpack.c.b16 %v3663, %v3661
    %v3786 = vpack.c.b16 %v3666, %v3664
    %v3787 = vpack.c.b16 %v3667, %v3665
    %v3788 = vpack.c.b16 %v3670, %v3668
    %v3789 = vpack.c.b16 %v3671, %v3669
    %v3790 = vpack.c.b16 %v3674, %v3672
    %v3791 = vpack.c.b16 %v3675, %v3673
    %v3792 = vpack.c.b16 %v3678, %v3676
    %v3793 = vpack.c.b16 %v3679, %v3677
    %v3794 = vpack.c.b16 %v3682, %v3680
    %v3795 = vpack.c.b16 %v3683, %v3681
    %v3796 = vpack.c.b16 %v3686, %v3684
    %v3797 = vpack.c.b16 %v3687, %v3685
    %v3798 = vpack.c.b16 %v3690, %v3688
    %v3799 = vpack.c.b16 %v3691, %v3689
    %v3800 = vpack.c.b16 %v3694, %v3692
    %v3801 = vpack.c.b16 %v3695, %v3693
    %v3802 = vpack.c.b16 %v3698, %v3696
    %v3803 = vpack.c.b16 %v3699, %v3697
    %v3804 = vpack.c.b16 %v3702, %v3700
    %v3805 = vpack.c.b16 %v3703, %v3701
    %v3806 = vpack.c.b16 %v3706, %v3704
    %v3807 = vpack.c.b16 %v3707, %v3705
    %v3808 = vpack.c.b16 %v3710, %v3708
    %v3809 = vpack.c.b16 %v3711, %v3709
    %v3810 = vpack.c.b16 %v3714, %v3712
    %v3811 = vpack.c.b16 %v3715, %v3713
    %3908 = vmatprep.subr.bf16.mxu0 %v3717
    %3909 = vmatpush1.bf16.msra.mxu0 %v3716
    %3910 = vmatprep.subr.bf16.mxu0 %v3719
    %3911 = vmatpush1.bf16.msra.mxu0 %v3718
    %3912 = vmatprep.subr.bf16.mxu0 %v3721
    %3913 = vmatpush1.bf16.msra.mxu0 %v3720
    %3914 = vmatprep.subr.bf16.mxu0 %v3723
    %3915 = vmatpush1.bf16.msra.mxu0 %v3722
    %3916 = vmatprep.subr.bf16.mxu0 %v3725
    %3917 = vmatpush1.bf16.msra.mxu0 %v3724
    %3918 = vmatprep.subr.bf16.mxu0 %v3727
    %3919 = vmatpush1.bf16.msra.mxu0 %v3726
    %3920 = vmatprep.subr.bf16.mxu0 %v3729
    %3921 = vmatpush1.bf16.msra.mxu0 %v3728
    %3922 = vmatprep.subr.bf16.mxu0 %v3731
    %3923 = vmatpush1.bf16.msra.mxu0 %v3730
    %3924 = vmatprep.subr.bf16.mxu0 %v3733
    %3925 = vmatpush1.bf16.msra.mxu0 %v3732
    %3926 = vmatprep.subr.bf16.mxu0 %v3735
    %3927 = vmatpush1.bf16.msra.mxu0 %v3734
    %3928 = vmatprep.subr.bf16.mxu0 %v3737
    %3929 = vmatpush1.bf16.msra.mxu0 %v3736
    %3930 = vmatprep.subr.bf16.mxu0 %v3739
    %3931 = vmatpush1.bf16.msra.mxu0 %v3738
    %3932 = vmatprep.subr.bf16.mxu0 %v3741
    %3933 = vmatpush1.bf16.msra.mxu0 %v3740
    %3934 = vmatprep.subr.bf16.mxu0 %v3743
    %3935 = vmatpush1.bf16.msra.mxu0 %v3742
    %3936 = vmatprep.subr.bf16.mxu0 %v3745
    %3937 = vmatpush1.bf16.msra.mxu0 %v3744
    %3938 = vmatprep.subr.bf16.mxu0 %v3747
    %3939 = vmatpush1.bf16.msra.mxu0 %v3746
    %3940 = vmatprep.mubr.bf16.mxu0 %v3405
    %3941 = vmatmul.mubr.bf16.gmra.mrb[0].mxu0 %v3404
    %v3942 = vpop.f32.mrb[0].mxu0
    %v3943 = vadd.f32 %v3361, %v3942
    %v3944 = vpop.f32.mrb[0].mxu0
    %v3945 = vadd.f32 %v3365, %v3944
    %v3946 = vpop.f32.mrb[0].mxu0
    %v3947 = vadd.f32 %v3361, %v3946
    %v3948 = vpop.f32.mrb[0].mxu0
    %v3949 = vadd.f32 %v3365, %v3948
    %3950 = vmatprep.mubr.bf16.mxu0 %v3411
    %3951 = vmatmul.mubr.bf16.gmra.mrb[0].mxu0 %v3410
    %v3952 = vpop.f32.mrb[0].mxu0
    %v3953 = vadd.f32 %v3361, %v3952
    %v3954 = vpop.f32.mrb[0].mxu0
    %v3955 = vadd.f32 %v3365, %v3954
    %v3956 = vpop.f32.mrb[0].mxu0
    %v3957 = vadd.f32 %v3361, %v3956
    %v3958 = vpop.f32.mrb[0].mxu0
    %v3959 = vadd.f32 %v3365, %v3958
    %3960 = vdwg.mxu0
    %3961 = vmatprep.subr.bf16.mxu0 %v3749
    %3962 = vmatpush1.bf16.msra.mxu0 %v3748
    %3963 = vmatprep.subr.bf16.mxu0 %v3751
    %3964 = vmatpush1.bf16.msra.mxu0 %v3750
    %3965 = vmatprep.subr.bf16.mxu0 %v3753
    %3966 = vmatpush1.bf16.msra.mxu0 %v3752
    %3967 = vmatprep.subr.bf16.mxu0 %v3755
    %3968 = vmatpush1.bf16.msra.mxu0 %v3754
    %3969 = vmatprep.subr.bf16.mxu0 %v3757
    %3970 = vmatpush1.bf16.msra.mxu0 %v3756
    %3971 = vmatprep.subr.bf16.mxu0 %v3759
    %3972 = vmatpush1.bf16.msra.mxu0 %v3758
    %3973 = vmatprep.subr.bf16.mxu0 %v3761
    %3974 = vmatpush1.bf16.msra.mxu0 %v3760
    %3975 = vmatprep.subr.bf16.mxu0 %v3763
    %3976 = vmatpush1.bf16.msra.mxu0 %v3762
    %3977 = vmatprep.subr.bf16.mxu0 %v3765
    %3978 = vmatpush1.bf16.msra.mxu0 %v3764
    %3979 = vmatprep.subr.bf16.mxu0 %v3767
    %3980 = vmatpush1.bf16.msra.mxu0 %v3766
    %3981 = vmatprep.subr.bf16.mxu0 %v3769
    %3982 = vmatpush1.bf16.msra.mxu0 %v3768
    %3983 = vmatprep.subr.bf16.mxu0 %v3771
    %3984 = vmatpush1.bf16.msra.mxu0 %v3770
    %3985 = vmatprep.subr.bf16.mxu0 %v3773
    %3986 = vmatpush1.bf16.msra.mxu0 %v3772
    %3987 = vmatprep.subr.bf16.mxu0 %v3775
    %3988 = vmatpush1.bf16.msra.mxu0 %v3774
    %3989 = vmatprep.subr.bf16.mxu0 %v3777
    %3990 = vmatpush1.bf16.msra.mxu0 %v3776
    %3991 = vmatprep.subr.bf16.mxu0 %v3779
    %3992 = vmatpush1.bf16.msra.mxu0 %v3778
    %3993 = vmatprep.mubr.bf16.mxu0 %v3407
    %3994 = vmatmul.mubr.bf16.gmra.mrb[0].mxu0 %v3406
    %v3995 = vpop.f32.mrb[0].mxu0
    %v3996 = vadd.f32 %v3943, %v3995
    %v3997 = vpop.f32.mrb[0].mxu0
    %v3998 = vadd.f32 %v3945, %v3997
    %v3999 = vpop.f32.mrb[0].mxu0
    %v4000 = vadd.f32 %v3947, %v3999
    %v4001 = vpop.f32.mrb[0].mxu0
    %v4002 = vadd.f32 %v3949, %v4001
    %4003 = vmatprep.mubr.bf16.mxu0 %v3413
    %4004 = vmatmul.mubr.bf16.gmra.mrb[0].mxu0 %v3412
    %v4005 = vpop.f32.mrb[0].mxu0
    %v4006 = vadd.f32 %v3953, %v4005
    %v4007 = vpop.f32.mrb[0].mxu0
    %v4008 = vadd.f32 %v3955, %v4007
    %v4009 = vpop.f32.mrb[0].mxu0
    %v4010 = vadd.f32 %v3957, %v4009
    %v4011 = vpop.f32.mrb[0].mxu0
    %v4012 = vadd.f32 %v3959, %v4011
    %4013 = vdwg.mxu0
    %4014 = vmatprep.subr.bf16.mxu0 %v3781
    %4015 = vmatpush1.bf16.msra.mxu0 %v3780
    %4016 = vmatprep.subr.bf16.mxu0 %v3783
    %4017 = vmatpush1.bf16.msra.mxu0 %v3782
    %4018 = vmatprep.subr.bf16.mxu0 %v3785
    %4019 = vmatpush1.bf16.msra.mxu0 %v3784
    %4020 = vmatprep.subr.bf16.mxu0 %v3787
    %4021 = vmatpush1.bf16.msra.mxu0 %v3786
    %4022 = vmatprep.subr.bf16.mxu0 %v3789
    %4023 = vmatpush1.bf16.msra.mxu0 %v3788
    %4024 = vmatprep.subr.bf16.mxu0 %v3791
    %4025 = vmatpush1.bf16.msra.mxu0 %v3790
    %4026 = vmatprep.subr.bf16.mxu0 %v3793
    %4027 = vmatpush1.bf16.msra.mxu0 %v3792
    %4028 = vmatprep.subr.bf16.mxu0 %v3795
    %4029 = vmatpush1.bf16.msra.mxu0 %v3794
    %4030 = vmatprep.subr.bf16.mxu0 %v3797
    %4031 = vmatpush1.bf16.msra.mxu0 %v3796
    %4032 = vmatprep.subr.bf16.mxu0 %v3799
    %4033 = vmatpush1.bf16.msra.mxu0 %v3798
    %4034 = vmatprep.subr.bf16.mxu0 %v3801
    %4035 = vmatpush1.bf16.msra.mxu0 %v3800
    %4036 = vmatprep.subr.bf16.mxu0 %v3803
    %4037 = vmatpush1.bf16.msra.mxu0 %v3802
    %4038 = vmatprep.subr.bf16.mxu0 %v3805
    %4039 = vmatpush1.bf16.msra.mxu0 %v3804
    %4040 = vmatprep.subr.bf16.mxu0 %v3807
    %4041 = vmatpush1.bf16.msra.mxu0 %v3806
    %4042 = vmatprep.subr.bf16.mxu0 %v3809
    %4043 = vmatpush1.bf16.msra.mxu0 %v3808
    %4044 = vmatprep.subr.bf16.mxu0 %v3811
    %4045 = vmatpush1.bf16.msra.mxu0 %v3810
    %4046 = vmatprep.mubr.bf16.mxu0 %v3409
    %4047 = vmatmul.mubr.bf16.gmra.mrb[0].mxu0 %v3408
    %v4048 = vpop.f32.mrb[0].mxu0
    %v4049 = vadd.f32 %v3996, %v4048
    %v4050 = vpop.f32.mrb[0].mxu0
    %v4051 = vadd.f32 %v3998, %v4050
    %v4052 = vpop.f32.mrb[0].mxu0
    %v4053 = vadd.f32 %v4000, %v4052
    %v4054 = vpop.f32.mrb[0].mxu0
    %v4055 = vadd.f32 %v4002, %v4054
    %4056 = vmatprep.mubr.bf16.mxu0 %v3415
    %4057 = vmatmul.mubr.bf16.gmra.mrb[0].mxu0 %v3414
    %v4058 = vpop.f32.mrb[0].mxu0
    %v4059 = vadd.f32 %v4006, %v4058
    %v4060 = vpop.f32.mrb[0].mxu0
    %v4061 = vadd.f32 %v4008, %v4060
    %v4062 = vpop.f32.mrb[0].mxu0
    %v4063 = vadd.f32 %v4010, %v4062
    %v4064 = vpop.f32.mrb[0].mxu0
    %v4065 = vadd.f32 %v4012, %v4064
    %4066 = vdwg.mxu0
    %v4067 = vmax.f32 %v4049, 0.0
    %v4068 = vmax.f32 %v4051, 0.0
    %v4069 = vmax.f32 %v4053, 0.0
    %v4070 = vmax.f32 %v4055, 0.0
    %v4071 = vmax.f32 %v4059, 0.0
    %v4072 = vmax.f32 %v4061, 0.0
    %v4073 = vmax.f32 %v4063, 0.0
    %v4074 = vmax.f32 %v4065, 0.0
    %v4075 = vpack.c.bf16 %v4069, %v4067
    %v4076 = vpack.c.bf16 %v4070, %v4068
    %v4077 = vpack.c.bf16 %v4073, %v4071
    %v4078 = vpack.c.bf16 %v4074, %v4072
    %v4079 = vld [vmem:[%s10] sm:$0xff]
    %v4080 = vld [vmem:[%s10 + $0x8] sm:$0xff]
    %v4081 = vld [vmem:[%s10 + $0x10] sm:$0xff]
    %v4082 = vld [vmem:[%s10 + $0x18] sm:$0xff]
    %v4083 = vld [vmem:[%s10 + $0x20] sm:$0xff]
    %v4084 = vld [vmem:[%s10 + $0x28] sm:$0xff]
    %v4085 = vld [vmem:[%s10 + $0x30] sm:$0xff]
    %v4086 = vld [vmem:[%s10 + $0x38] sm:$0xff]
    %v4087 = vld [vmem:[%s10 + $0x40] sm:$0xff]
    %v4088 = vld [vmem:[%s10 + $0x48] sm:$0xff]
    %v4089 = vld [vmem:[%s10 + $0x50] sm:$0xff]
    %v4090 = vld [vmem:[%s10 + $0x58] sm:$0xff]
    %v4091 = vld [vmem:[%s10 + $0x60] sm:$0xff]
    %v4092 = vld [vmem:[%s10 + $0x68] sm:$0xff]
    %v4093 = vld [vmem:[%s10 + $0x70] sm:$0xff]
    %v4094 = vld [vmem:[%s10 + $0x78] sm:$0xff]
    %v4095 = vld [vmem:[%s10 + $0x80] sm:$0xff]
    %v4096 = vld [vmem:[%s10 + $0x88] sm:$0xff]
    %v4097 = vld [vmem:[%s10 + $0x90] sm:$0xff]
    %v4098 = vld [vmem:[%s10 + $0x98] sm:$0xff]
    %v4099 = vld [vmem:[%s10 + $0xa0] sm:$0xff]
    %v4100 = vld [vmem:[%s10 + $0xa8] sm:$0xff]
    %v4101 = vld [vmem:[%s10 + $0xb0] sm:$0xff]
    %v4102 = vld [vmem:[%s10 + $0xb8] sm:$0xff]
    %v4103 = vld [vmem:[%s10 + $0xc0] sm:$0xff]
    %v4104 = vld [vmem:[%s10 + $0xc8] sm:$0xff]
    %v4105 = vld [vmem:[%s10 + $0xd0] sm:$0xff]
    %v4106 = vld [vmem:[%s10 + $0xd8] sm:$0xff]
    %v4107 = vld [vmem:[%s10 + $0xe0] sm:$0xff]
    %v4108 = vld [vmem:[%s10 + $0xe8] sm:$0xff]
    %v4109 = vld [vmem:[%s10 + $0xf0] sm:$0xff]
    %v4110 = vld [vmem:[%s10 + $0xf8] sm:$0xff]
    %v4111 = vld [vmem:[%s10 + $0x100] sm:$0xff]
    %v4112 = vld [vmem:[%s10 + $0x108] sm:$0xff]
    %v4113 = vld [vmem:[%s10 + $0x110] sm:$0xff]
    %v4114 = vld [vmem:[%s10 + $0x118] sm:$0xff]
    %v4115 = vld [vmem:[%s10 + $0x120] sm:$0xff]
    %v4116 = vld [vmem:[%s10 + $0x128] sm:$0xff]
    %v4117 = vld [vmem:[%s10 + $0x130] sm:$0xff]
    %v4118 = vld [vmem:[%s10 + $0x138] sm:$0xff]
    %v4119 = vld [vmem:[%s10 + $0x140] sm:$0xff]
    %v4120 = vld [vmem:[%s10 + $0x148] sm:$0xff]
    %v4121 = vld [vmem:[%s10 + $0x150] sm:$0xff]
    %v4122 = vld [vmem:[%s10 + $0x158] sm:$0xff]
    %v4123 = vld [vmem:[%s10 + $0x160] sm:$0xff]
    %v4124 = vld [vmem:[%s10 + $0x168] sm:$0xff]
    %v4125 = vld [vmem:[%s10 + $0x170] sm:$0xff]
    %v4126 = vld [vmem:[%s10 + $0x178] sm:$0xff]
    %v4127 = vld [vmem:[%s10 + $0x180] sm:$0xff]
    %v4128 = vld [vmem:[%s10 + $0x188] sm:$0xff]
    %v4129 = vld [vmem:[%s10 + $0x190] sm:$0xff]
    %v4130 = vld [vmem:[%s10 + $0x198] sm:$0xff]
    %v4131 = vld [vmem:[%s10 + $0x1a0] sm:$0xff]
    %v4132 = vld [vmem:[%s10 + $0x1a8] sm:$0xff]
    %v4133 = vld [vmem:[%s10 + $0x1b0] sm:$0xff]
    %v4134 = vld [vmem:[%s10 + $0x1b8] sm:$0xff]
    %v4135 = vld [vmem:[%s10 + $0x1c0] sm:$0xff]
    %v4136 = vld [vmem:[%s10 + $0x1c8] sm:$0xff]
    %v4137 = vld [vmem:[%s10 + $0x1d0] sm:$0xff]
    %v4138 = vld [vmem:[%s10 + $0x1d8] sm:$0xff]
    %v4139 = vld [vmem:[%s10 + $0x1e0] sm:$0xff]
    %v4140 = vld [vmem:[%s10 + $0x1e8] sm:$0xff]
    %v4141 = vld [vmem:[%s10 + $0x1f0] sm:$0xff]
    %v4142 = vld [vmem:[%s10 + $0x1f8] sm:$0xff]
    %s4143 = scalar_lea.vmem %s10, 512
    %v4144 = vld [vmem:[%s4143] sm:$0xff]
    %v4145 = vld [vmem:[%s4143 + $0x8] sm:$0xff]
    %v4146 = vld [vmem:[%s4143 + $0x10] sm:$0xff]
    %v4147 = vld [vmem:[%s4143 + $0x18] sm:$0xff]
    %v4148 = vld [vmem:[%s4143 + $0x20] sm:$0xff]
    %v4149 = vld [vmem:[%s4143 + $0x28] sm:$0xff]
    %v4150 = vld [vmem:[%s4143 + $0x30] sm:$0xff]
    %v4151 = vld [vmem:[%s4143 + $0x38] sm:$0xff]
    %v4152 = vld [vmem:[%s4143 + $0x40] sm:$0xff]
    %v4153 = vld [vmem:[%s4143 + $0x48] sm:$0xff]
    %v4154 = vld [vmem:[%s4143 + $0x50] sm:$0xff]
    %v4155 = vld [vmem:[%s4143 + $0x58] sm:$0xff]
    %v4156 = vld [vmem:[%s4143 + $0x60] sm:$0xff]
    %v4157 = vld [vmem:[%s4143 + $0x68] sm:$0xff]
    %v4158 = vld [vmem:[%s4143 + $0x70] sm:$0xff]
    %v4159 = vld [vmem:[%s4143 + $0x78] sm:$0xff]
    %v4160 = vld [vmem:[%s4143 + $0x80] sm:$0xff]
    %v4161 = vld [vmem:[%s4143 + $0x88] sm:$0xff]
    %v4162 = vld [vmem:[%s4143 + $0x90] sm:$0xff]
    %v4163 = vld [vmem:[%s4143 + $0x98] sm:$0xff]
    %v4164 = vld [vmem:[%s4143 + $0xa0] sm:$0xff]
    %v4165 = vld [vmem:[%s4143 + $0xa8] sm:$0xff]
    %v4166 = vld [vmem:[%s4143 + $0xb0] sm:$0xff]
    %v4167 = vld [vmem:[%s4143 + $0xb8] sm:$0xff]
    %v4168 = vld [vmem:[%s4143 + $0xc0] sm:$0xff]
    %v4169 = vld [vmem:[%s4143 + $0xc8] sm:$0xff]
    %v4170 = vld [vmem:[%s4143 + $0xd0] sm:$0xff]
    %v4171 = vld [vmem:[%s4143 + $0xd8] sm:$0xff]
    %v4172 = vld [vmem:[%s4143 + $0xe0] sm:$0xff]
    %v4173 = vld [vmem:[%s4143 + $0xe8] sm:$0xff]
    %v4174 = vld [vmem:[%s4143 + $0xf0] sm:$0xff]
    %v4175 = vld [vmem:[%s4143 + $0xf8] sm:$0xff]
    %v4176 = vld [vmem:[%s4143 + $0x100] sm:$0xff]
    %v4177 = vld [vmem:[%s4143 + $0x108] sm:$0xff]
    %v4178 = vld [vmem:[%s4143 + $0x110] sm:$0xff]
    %v4179 = vld [vmem:[%s4143 + $0x118] sm:$0xff]
    %v4180 = vld [vmem:[%s4143 + $0x120] sm:$0xff]
    %v4181 = vld [vmem:[%s4143 + $0x128] sm:$0xff]
    %v4182 = vld [vmem:[%s4143 + $0x130] sm:$0xff]
    %v4183 = vld [vmem:[%s4143 + $0x138] sm:$0xff]
    %v4184 = vld [vmem:[%s4143 + $0x140] sm:$0xff]
    %v4185 = vld [vmem:[%s4143 + $0x148] sm:$0xff]
    %v4186 = vld [vmem:[%s4143 + $0x150] sm:$0xff]
    %v4187 = vld [vmem:[%s4143 + $0x158] sm:$0xff]
    %v4188 = vld [vmem:[%s4143 + $0x160] sm:$0xff]
    %v4189 = vld [vmem:[%s4143 + $0x168] sm:$0xff]
    %v4190 = vld [vmem:[%s4143 + $0x170] sm:$0xff]
    %v4191 = vld [vmem:[%s4143 + $0x178] sm:$0xff]
    %v4192 = vld [vmem:[%s4143 + $0x180] sm:$0xff]
    %v4193 = vld [vmem:[%s4143 + $0x188] sm:$0xff]
    %v4194 = vld [vmem:[%s4143 + $0x190] sm:$0xff]
    %v4195 = vld [vmem:[%s4143 + $0x198] sm:$0xff]
    %v4196 = vld [vmem:[%s4143 + $0x1a0] sm:$0xff]
    %v4197 = vld [vmem:[%s4143 + $0x1a8] sm:$0xff]
    %v4198 = vld [vmem:[%s4143 + $0x1b0] sm:$0xff]
    %v4199 = vld [vmem:[%s4143 + $0x1b8] sm:$0xff]
    %v4200 = vld [vmem:[%s4143 + $0x1c0] sm:$0xff]
    %v4201 = vld [vmem:[%s4143 + $0x1c8] sm:$0xff]
    %v4202 = vld [vmem:[%s4143 + $0x1d0] sm:$0xff]
    %v4203 = vld [vmem:[%s4143 + $0x1d8] sm:$0xff]
    %v4204 = vld [vmem:[%s4143 + $0x1e0] sm:$0xff]
    %v4205 = vld [vmem:[%s4143 + $0x1e8] sm:$0xff]
    %v4206 = vld [vmem:[%s4143 + $0x1f0] sm:$0xff]
    %v4207 = vld [vmem:[%s4143 + $0x1f8] sm:$0xff]
    %v4272 = vunpack.c.l.b16 %v4144
    %v4273 = vunpack.c.h.b16 %v4144
    %v4274 = vunpack.c.l.b16 %v4145
    %v4275 = vunpack.c.h.b16 %v4145
    %v4276 = vunpack.c.l.b16 %v4146
    %v4277 = vunpack.c.h.b16 %v4146
    %v4278 = vunpack.c.l.b16 %v4147
    %v4279 = vunpack.c.h.b16 %v4147
    %v4280 = vunpack.c.l.b16 %v4148
    %v4281 = vunpack.c.h.b16 %v4148
    %v4282 = vunpack.c.l.b16 %v4149
    %v4283 = vunpack.c.h.b16 %v4149
    %v4284 = vunpack.c.l.b16 %v4150
    %v4285 = vunpack.c.h.b16 %v4150
    %v4286 = vunpack.c.l.b16 %v4151
    %v4287 = vunpack.c.h.b16 %v4151
    %v4288 = vunpack.c.l.b16 %v4152
    %v4289 = vunpack.c.h.b16 %v4152
    %v4290 = vunpack.c.l.b16 %v4153
    %v4291 = vunpack.c.h.b16 %v4153
    %v4292 = vunpack.c.l.b16 %v4154
    %v4293 = vunpack.c.h.b16 %v4154
    %v4294 = vunpack.c.l.b16 %v4155
    %v4295 = vunpack.c.h.b16 %v4155
    %v4296 = vunpack.c.l.b16 %v4156
    %v4297 = vunpack.c.h.b16 %v4156
    %v4298 = vunpack.c.l.b16 %v4157
    %v4299 = vunpack.c.h.b16 %v4157
    %v4300 = vunpack.c.l.b16 %v4158
    %v4301 = vunpack.c.h.b16 %v4158
    %v4302 = vunpack.c.l.b16 %v4159
    %v4303 = vunpack.c.h.b16 %v4159
    %v4304 = vunpack.c.l.b16 %v4160
    %v4305 = vunpack.c.h.b16 %v4160
    %v4306 = vunpack.c.l.b16 %v4161
    %v4307 = vunpack.c.h.b16 %v4161
    %v4308 = vunpack.c.l.b16 %v4162
    %v4309 = vunpack.c.h.b16 %v4162
    %v4310 = vunpack.c.l.b16 %v4163
    %v4311 = vunpack.c.h.b16 %v4163
    %v4312 = vunpack.c.l.b16 %v4164
    %v4313 = vunpack.c.h.b16 %v4164
    %v4314 = vunpack.c.l.b16 %v4165
    %v4315 = vunpack.c.h.b16 %v4165
    %v4316 = vunpack.c.l.b16 %v4166
    %v4317 = vunpack.c.h.b16 %v4166
    %v4318 = vunpack.c.l.b16 %v4167
    %v4319 = vunpack.c.h.b16 %v4167
    %v4320 = vunpack.c.l.b16 %v4168
    %v4321 = vunpack.c.h.b16 %v4168
    %v4322 = vunpack.c.l.b16 %v4169
    %v4323 = vunpack.c.h.b16 %v4169
    %v4324 = vunpack.c.l.b16 %v4170
    %v4325 = vunpack.c.h.b16 %v4170
    %v4326 = vunpack.c.l.b16 %v4171
    %v4327 = vunpack.c.h.b16 %v4171
    %v4328 = vunpack.c.l.b16 %v4172
    %v4329 = vunpack.c.h.b16 %v4172
    %v4330 = vunpack.c.l.b16 %v4173
    %v4331 = vunpack.c.h.b16 %v4173
    %v4332 = vunpack.c.l.b16 %v4174
    %v4333 = vunpack.c.h.b16 %v4174
    %v4334 = vunpack.c.l.b16 %v4175
    %v4335 = vunpack.c.h.b16 %v4175
    %v4336 = vunpack.c.l.b16 %v4176
    %v4337 = vunpack.c.h.b16 %v4176
    %v4338 = vunpack.c.l.b16 %v4177
    %v4339 = vunpack.c.h.b16 %v4177
    %v4340 = vunpack.c.l.b16 %v4178
    %v4341 = vunpack.c.h.b16 %v4178
    %v4342 = vunpack.c.l.b16 %v4179
    %v4343 = vunpack.c.h.b16 %v4179
    %v4344 = vunpack.c.l.b16 %v4180
    %v4345 = vunpack.c.h.b16 %v4180
    %v4346 = vunpack.c.l.b16 %v4181
    %v4347 = vunpack.c.h.b16 %v4181
    %v4348 = vunpack.c.l.b16 %v4182
    %v4349 = vunpack.c.h.b16 %v4182
    %v4350 = vunpack.c.l.b16 %v4183
    %v4351 = vunpack.c.h.b16 %v4183
    %v4352 = vunpack.c.l.b16 %v4184
    %v4353 = vunpack.c.h.b16 %v4184
    %v4354 = vunpack.c.l.b16 %v4185
    %v4355 = vunpack.c.h.b16 %v4185
    %v4356 = vunpack.c.l.b16 %v4186
    %v4357 = vunpack.c.h.b16 %v4186
    %v4358 = vunpack.c.l.b16 %v4187
    %v4359 = vunpack.c.h.b16 %v4187
    %v4360 = vunpack.c.l.b16 %v4188
    %v4361 = vunpack.c.h.b16 %v4188
    %v4362 = vunpack.c.l.b16 %v4189
    %v4363 = vunpack.c.h.b16 %v4189
    %v4364 = vunpack.c.l.b16 %v4190
    %v4365 = vunpack.c.h.b16 %v4190
    %v4366 = vunpack.c.l.b16 %v4191
    %v4367 = vunpack.c.h.b16 %v4191
    %v4368 = vunpack.c.l.b16 %v4192
    %v4369 = vunpack.c.h.b16 %v4192
    %v4370 = vunpack.c.l.b16 %v4193
    %v4371 = vunpack.c.h.b16 %v4193
    %v4372 = vunpack.c.l.b16 %v4194
    %v4373 = vunpack.c.h.b16 %v4194
    %v4374 = vunpack.c.l.b16 %v4195
    %v4375 = vunpack.c.h.b16 %v4195
    %v4376 = vunpack.c.l.b16 %v4196
    %v4377 = vunpack.c.h.b16 %v4196
    %v4378 = vunpack.c.l.b16 %v4197
    %v4379 = vunpack.c.h.b16 %v4197
    %v4380 = vunpack.c.l.b16 %v4198
    %v4381 = vunpack.c.h.b16 %v4198
    %v4382 = vunpack.c.l.b16 %v4199
    %v4383 = vunpack.c.h.b16 %v4199
    %v4384 = vunpack.c.l.b16 %v4200
    %v4385 = vunpack.c.h.b16 %v4200
    %v4386 = vunpack.c.l.b16 %v4201
    %v4387 = vunpack.c.h.b16 %v4201
    %v4388 = vunpack.c.l.b16 %v4202
    %v4389 = vunpack.c.h.b16 %v4202
    %v4390 = vunpack.c.l.b16 %v4203
    %v4391 = vunpack.c.h.b16 %v4203
    %v4392 = vunpack.c.l.b16 %v4204
    %v4393 = vunpack.c.h.b16 %v4204
    %v4394 = vunpack.c.l.b16 %v4205
    %v4395 = vunpack.c.h.b16 %v4205
    %v4396 = vunpack.c.l.b16 %v4206
    %v4397 = vunpack.c.h.b16 %v4206
    %v4398 = vunpack.c.l.b16 %v4207
    %v4399 = vunpack.c.h.b16 %v4207
    %v4400 = vpack.c.b16 %v4276, %v4272
    %v4401 = vpack.c.b16 %v4277, %v4273
    %v4402 = vpack.c.b16 %v4278, %v4274
    %v4403 = vpack.c.b16 %v4279, %v4275
    %v4404 = vpack.c.b16 %v4284, %v4280
    %v4405 = vpack.c.b16 %v4285, %v4281
    %v4406 = vpack.c.b16 %v4286, %v4282
    %v4407 = vpack.c.b16 %v4287, %v4283
    %v4408 = vpack.c.b16 %v4292, %v4288
    %v4409 = vpack.c.b16 %v4293, %v4289
    %v4410 = vpack.c.b16 %v4294, %v4290
    %v4411 = vpack.c.b16 %v4295, %v4291
    %v4412 = vpack.c.b16 %v4300, %v4296
    %v4413 = vpack.c.b16 %v4301, %v4297
    %v4414 = vpack.c.b16 %v4302, %v4298
    %v4415 = vpack.c.b16 %v4303, %v4299
    %v4416 = vpack.c.b16 %v4308, %v4304
    %v4417 = vpack.c.b16 %v4309, %v4305
    %v4418 = vpack.c.b16 %v4310, %v4306
    %v4419 = vpack.c.b16 %v4311, %v4307
    %v4420 = vpack.c.b16 %v4316, %v4312
    %v4421 = vpack.c.b16 %v4317, %v4313
    %v4422 = vpack.c.b16 %v4318, %v4314
    %v4423 = vpack.c.b16 %v4319, %v4315
    %v4424 = vpack.c.b16 %v4324, %v4320
    %v4425 = vpack.c.b16 %v4325, %v4321
    %v4426 = vpack.c.b16 %v4326, %v4322
    %v4427 = vpack.c.b16 %v4327, %v4323
    %v4428 = vpack.c.b16 %v4332, %v4328
    %v4429 = vpack.c.b16 %v4333, %v4329
    %v4430 = vpack.c.b16 %v4334, %v4330
    %v4431 = vpack.c.b16 %v4335, %v4331
    %v4432 = vpack.c.b16 %v4340, %v4336
    %v4433 = vpack.c.b16 %v4341, %v4337
    %v4434 = vpack.c.b16 %v4342, %v4338
    %v4435 = vpack.c.b16 %v4343, %v4339
    %v4436 = vpack.c.b16 %v4348, %v4344
    %v4437 = vpack.c.b16 %v4349, %v4345
    %v4438 = vpack.c.b16 %v4350, %v4346
    %v4439 = vpack.c.b16 %v4351, %v4347
    %v4440 = vpack.c.b16 %v4356, %v4352
    %v4441 = vpack.c.b16 %v4357, %v4353
    %v4442 = vpack.c.b16 %v4358, %v4354
    %v4443 = vpack.c.b16 %v4359, %v4355
    %v4444 = vpack.c.b16 %v4364, %v4360
    %v4445 = vpack.c.b16 %v4365, %v4361
    %v4446 = vpack.c.b16 %v4366, %v4362
    %v4447 = vpack.c.b16 %v4367, %v4363
    %v4448 = vpack.c.b16 %v4372, %v4368
    %v4449 = vpack.c.b16 %v4373, %v4369
    %v4450 = vpack.c.b16 %v4374, %v4370
    %v4451 = vpack.c.b16 %v4375, %v4371
    %v4452 = vpack.c.b16 %v4380, %v4376
    %v4453 = vpack.c.b16 %v4381, %v4377
    %v4454 = vpack.c.b16 %v4382, %v4378
    %v4455 = vpack.c.b16 %v4383, %v4379
    %v4456 = vpack.c.b16 %v4388, %v4384
    %v4457 = vpack.c.b16 %v4389, %v4385
    %v4458 = vpack.c.b16 %v4390, %v4386
    %v4459 = vpack.c.b16 %v4391, %v4387
    %v4460 = vpack.c.b16 %v4396, %v4392
    %v4461 = vpack.c.b16 %v4397, %v4393
    %v4462 = vpack.c.b16 %v4398, %v4394
    %v4463 = vpack.c.b16 %v4399, %v4395
    %4528 = vmatprep.subr.bf16.mxu0 %v4401
    %4529 = vmatpush1.bf16.msra.mxu0 %v4400
    %4530 = vmatprep.subr.bf16.mxu0 %v4405
    %4531 = vmatpush1.bf16.msra.mxu0 %v4404
    %4532 = vmatprep.subr.bf16.mxu0 %v4409
    %4533 = vmatpush1.bf16.msra.mxu0 %v4408
    %4534 = vmatprep.subr.bf16.mxu0 %v4413
    %4535 = vmatpush1.bf16.msra.mxu0 %v4412
    %4536 = vmatprep.subr.bf16.mxu0 %v4417
    %4537 = vmatpush1.bf16.msra.mxu0 %v4416
    %4538 = vmatprep.subr.bf16.mxu0 %v4421
    %4539 = vmatpush1.bf16.msra.mxu0 %v4420
    %4540 = vmatprep.subr.bf16.mxu0 %v4425
    %4541 = vmatpush1.bf16.msra.mxu0 %v4424
    %4542 = vmatprep.subr.bf16.mxu0 %v4429
    %4543 = vmatpush1.bf16.msra.mxu0 %v4428
    %4544 = vmatprep.subr.bf16.mxu0 %v4433
    %4545 = vmatpush1.bf16.msra.mxu0 %v4432
    %4546 = vmatprep.subr.bf16.mxu0 %v4437
    %4547 = vmatpush1.bf16.msra.mxu0 %v4436
    %4548 = vmatprep.subr.bf16.mxu0 %v4441
    %4549 = vmatpush1.bf16.msra.mxu0 %v4440
    %4550 = vmatprep.subr.bf16.mxu0 %v4445
    %4551 = vmatpush1.bf16.msra.mxu0 %v4444
    %4552 = vmatprep.subr.bf16.mxu0 %v4449
    %4553 = vmatpush1.bf16.msra.mxu0 %v4448
    %4554 = vmatprep.subr.bf16.mxu0 %v4453
    %4555 = vmatpush1.bf16.msra.mxu0 %v4452
    %4556 = vmatprep.subr.bf16.mxu0 %v4457
    %4557 = vmatpush1.bf16.msra.mxu0 %v4456
    %4558 = vmatprep.subr.bf16.mxu0 %v4461
    %4559 = vmatpush1.bf16.msra.mxu0 %v4460
    %4560 = vmatprep.mubr.bf16.mxu0 %v4078
    %4561 = vmatmul.mubr.bf16.gmra.mrb[0].mxu0 %v4077
    %v4562 = vpop.f32.mrb[0].mxu0
    %v4563 = vadd.f32 0.0, %v4562
    %v4564 = vpop.f32.mrb[0].mxu0
    %v4565 = vadd.f32 0.0, %v4564
    %v4566 = vpop.f32.mrb[0].mxu0
    %v4567 = vadd.f32 0.0, %v4566
    %v4568 = vpop.f32.mrb[0].mxu0
    %v4569 = vadd.f32 0.0, %v4568
    %4570 = vdwg.mxu0
    %4571 = vmatprep.subr.bf16.mxu0 %v4403
    %4572 = vmatpush1.bf16.msra.mxu0 %v4402
    %4573 = vmatprep.subr.bf16.mxu0 %v4407
    %4574 = vmatpush1.bf16.msra.mxu0 %v4406
    %4575 = vmatprep.subr.bf16.mxu0 %v4411
    %4576 = vmatpush1.bf16.msra.mxu0 %v4410
    %4577 = vmatprep.subr.bf16.mxu0 %v4415
    %4578 = vmatpush1.bf16.msra.mxu0 %v4414
    %4579 = vmatprep.subr.bf16.mxu0 %v4419
    %4580 = vmatpush1.bf16.msra.mxu0 %v4418
    %4581 = vmatprep.subr.bf16.mxu0 %v4423
    %4582 = vmatpush1.bf16.msra.mxu0 %v4422
    %4583 = vmatprep.subr.bf16.mxu0 %v4427
    %4584 = vmatpush1.bf16.msra.mxu0 %v4426
    %4585 = vmatprep.subr.bf16.mxu0 %v4431
    %4586 = vmatpush1.bf16.msra.mxu0 %v4430
    %4587 = vmatprep.subr.bf16.mxu0 %v4435
    %4588 = vmatpush1.bf16.msra.mxu0 %v4434
    %4589 = vmatprep.subr.bf16.mxu0 %v4439
    %4590 = vmatpush1.bf16.msra.mxu0 %v4438
    %4591 = vmatprep.subr.bf16.mxu0 %v4443
    %4592 = vmatpush1.bf16.msra.mxu0 %v4442
    %4593 = vmatprep.subr.bf16.mxu0 %v4447
    %4594 = vmatpush1.bf16.msra.mxu0 %v4446
    %4595 = vmatprep.subr.bf16.mxu0 %v4451
    %4596 = vmatpush1.bf16.msra.mxu0 %v4450
    %4597 = vmatprep.subr.bf16.mxu0 %v4455
    %4598 = vmatpush1.bf16.msra.mxu0 %v4454
    %4599 = vmatprep.subr.bf16.mxu0 %v4459
    %4600 = vmatpush1.bf16.msra.mxu0 %v4458
    %4601 = vmatprep.subr.bf16.mxu0 %v4463
    %4602 = vmatpush1.bf16.msra.mxu0 %v4462
    %4603 = vmatprep.mubr.bf16.mxu0 %v4078
    %4604 = vmatmul.mubr.bf16.gmra.mrb[0].mxu0 %v4077
    %v4605 = vpop.f32.mrb[0].mxu0
    %v4606 = vadd.f32 0.0, %v4605
    %v4607 = vpop.f32.mrb[0].mxu0
    %v4608 = vadd.f32 0.0, %v4607
    %v4609 = vpop.f32.mrb[0].mxu0
    %v4610 = vadd.f32 0.0, %v4609
    %v4611 = vpop.f32.mrb[0].mxu0
    %v4612 = vadd.f32 0.0, %v4611
    %4613 = vdwg.mxu0
    %v4678 = vunpack.c.l.b16 %v4079
    %v4679 = vunpack.c.h.b16 %v4079
    %v4680 = vunpack.c.l.b16 %v4080
    %v4681 = vunpack.c.h.b16 %v4080
    %v4682 = vunpack.c.l.b16 %v4081
    %v4683 = vunpack.c.h.b16 %v4081
    %v4684 = vunpack.c.l.b16 %v4082
    %v4685 = vunpack.c.h.b16 %v4082
    %v4686 = vunpack.c.l.b16 %v4083
    %v4687 = vunpack.c.h.b16 %v4083
    %v4688 = vunpack.c.l.b16 %v4084
    %v4689 = vunpack.c.h.b16 %v4084
    %v4690 = vunpack.c.l.b16 %v4085
    %v4691 = vunpack.c.h.b16 %v4085
    %v4692 = vunpack.c.l.b16 %v4086
    %v4693 = vunpack.c.h.b16 %v4086
    %v4694 = vunpack.c.l.b16 %v4087
    %v4695 = vunpack.c.h.b16 %v4087
    %v4696 = vunpack.c.l.b16 %v4088
    %v4697 = vunpack.c.h.b16 %v4088
    %v4698 = vunpack.c.l.b16 %v4089
    %v4699 = vunpack.c.h.b16 %v4089
    %v4700 = vunpack.c.l.b16 %v4090
    %v4701 = vunpack.c.h.b16 %v4090
    %v4702 = vunpack.c.l.b16 %v4091
    %v4703 = vunpack.c.h.b16 %v4091
    %v4704 = vunpack.c.l.b16 %v4092
    %v4705 = vunpack.c.h.b16 %v4092
    %v4706 = vunpack.c.l.b16 %v4093
    %v4707 = vunpack.c.h.b16 %v4093
    %v4708 = vunpack.c.l.b16 %v4094
    %v4709 = vunpack.c.h.b16 %v4094
    %v4710 = vunpack.c.l.b16 %v4095
    %v4711 = vunpack.c.h.b16 %v4095
    %v4712 = vunpack.c.l.b16 %v4096
    %v4713 = vunpack.c.h.b16 %v4096
    %v4714 = vunpack.c.l.b16 %v4097
    %v4715 = vunpack.c.h.b16 %v4097
    %v4716 = vunpack.c.l.b16 %v4098
    %v4717 = vunpack.c.h.b16 %v4098
    %v4718 = vunpack.c.l.b16 %v4099
    %v4719 = vunpack.c.h.b16 %v4099
    %v4720 = vunpack.c.l.b16 %v4100
    %v4721 = vunpack.c.h.b16 %v4100
    %v4722 = vunpack.c.l.b16 %v4101
    %v4723 = vunpack.c.h.b16 %v4101
    %v4724 = vunpack.c.l.b16 %v4102
    %v4725 = vunpack.c.h.b16 %v4102
    %v4726 = vunpack.c.l.b16 %v4103
    %v4727 = vunpack.c.h.b16 %v4103
    %v4728 = vunpack.c.l.b16 %v4104
    %v4729 = vunpack.c.h.b16 %v4104
    %v4730 = vunpack.c.l.b16 %v4105
    %v4731 = vunpack.c.h.b16 %v4105
    %v4732 = vunpack.c.l.b16 %v4106
    %v4733 = vunpack.c.h.b16 %v4106
    %v4734 = vunpack.c.l.b16 %v4107
    %v4735 = vunpack.c.h.b16 %v4107
    %v4736 = vunpack.c.l.b16 %v4108
    %v4737 = vunpack.c.h.b16 %v4108
    %v4738 = vunpack.c.l.b16 %v4109
    %v4739 = vunpack.c.h.b16 %v4109
    %v4740 = vunpack.c.l.b16 %v4110
    %v4741 = vunpack.c.h.b16 %v4110
    %v4742 = vunpack.c.l.b16 %v4111
    %v4743 = vunpack.c.h.b16 %v4111
    %v4744 = vunpack.c.l.b16 %v4112
    %v4745 = vunpack.c.h.b16 %v4112
    %v4746 = vunpack.c.l.b16 %v4113
    %v4747 = vunpack.c.h.b16 %v4113
    %v4748 = vunpack.c.l.b16 %v4114
    %v4749 = vunpack.c.h.b16 %v4114
    %v4750 = vunpack.c.l.b16 %v4115
    %v4751 = vunpack.c.h.b16 %v4115
    %v4752 = vunpack.c.l.b16 %v4116
    %v4753 = vunpack.c.h.b16 %v4116
    %v4754 = vunpack.c.l.b16 %v4117
    %v4755 = vunpack.c.h.b16 %v4117
    %v4756 = vunpack.c.l.b16 %v4118
    %v4757 = vunpack.c.h.b16 %v4118
    %v4758 = vunpack.c.l.b16 %v4119
    %v4759 = vunpack.c.h.b16 %v4119
    %v4760 = vunpack.c.l.b16 %v4120
    %v4761 = vunpack.c.h.b16 %v4120
    %v4762 = vunpack.c.l.b16 %v4121
    %v4763 = vunpack.c.h.b16 %v4121
    %v4764 = vunpack.c.l.b16 %v4122
    %v4765 = vunpack.c.h.b16 %v4122
    %v4766 = vunpack.c.l.b16 %v4123
    %v4767 = vunpack.c.h.b16 %v4123
    %v4768 = vunpack.c.l.b16 %v4124
    %v4769 = vunpack.c.h.b16 %v4124
    %v4770 = vunpack.c.l.b16 %v4125
    %v4771 = vunpack.c.h.b16 %v4125
    %v4772 = vunpack.c.l.b16 %v4126
    %v4773 = vunpack.c.h.b16 %v4126
    %v4774 = vunpack.c.l.b16 %v4127
    %v4775 = vunpack.c.h.b16 %v4127
    %v4776 = vunpack.c.l.b16 %v4128
    %v4777 = vunpack.c.h.b16 %v4128
    %v4778 = vunpack.c.l.b16 %v4129
    %v4779 = vunpack.c.h.b16 %v4129
    %v4780 = vunpack.c.l.b16 %v4130
    %v4781 = vunpack.c.h.b16 %v4130
    %v4782 = vunpack.c.l.b16 %v4131
    %v4783 = vunpack.c.h.b16 %v4131
    %v4784 = vunpack.c.l.b16 %v4132
    %v4785 = vunpack.c.h.b16 %v4132
    %v4786 = vunpack.c.l.b16 %v4133
    %v4787 = vunpack.c.h.b16 %v4133
    %v4788 = vunpack.c.l.b16 %v4134
    %v4789 = vunpack.c.h.b16 %v4134
    %v4790 = vunpack.c.l.b16 %v4135
    %v4791 = vunpack.c.h.b16 %v4135
    %v4792 = vunpack.c.l.b16 %v4136
    %v4793 = vunpack.c.h.b16 %v4136
    %v4794 = vunpack.c.l.b16 %v4137
    %v4795 = vunpack.c.h.b16 %v4137
    %v4796 = vunpack.c.l.b16 %v4138
    %v4797 = vunpack.c.h.b16 %v4138
    %v4798 = vunpack.c.l.b16 %v4139
    %v4799 = vunpack.c.h.b16 %v4139
    %v4800 = vunpack.c.l.b16 %v4140
    %v4801 = vunpack.c.h.b16 %v4140
    %v4802 = vunpack.c.l.b16 %v4141
    %v4803 = vunpack.c.h.b16 %v4141
    %v4804 = vunpack.c.l.b16 %v4142
    %v4805 = vunpack.c.h.b16 %v4142
    %v4806 = vpack.c.b16 %v4682, %v4678
    %v4807 = vpack.c.b16 %v4683, %v4679
    %v4808 = vpack.c.b16 %v4684, %v4680
    %v4809 = vpack.c.b16 %v4685, %v4681
    %v4810 = vpack.c.b16 %v4690, %v4686
    %v4811 = vpack.c.b16 %v4691, %v4687
    %v4812 = vpack.c.b16 %v4692, %v4688
    %v4813 = vpack.c.b16 %v4693, %v4689
    %v4814 = vpack.c.b16 %v4698, %v4694
    %v4815 = vpack.c.b16 %v4699, %v4695
    %v4816 = vpack.c.b16 %v4700, %v4696
    %v4817 = vpack.c.b16 %v4701, %v4697
    %v4818 = vpack.c.b16 %v4706, %v4702
    %v4819 = vpack.c.b16 %v4707, %v4703
    %v4820 = vpack.c.b16 %v4708, %v4704
    %v4821 = vpack.c.b16 %v4709, %v4705
    %v4822 = vpack.c.b16 %v4714, %v4710
    %v4823 = vpack.c.b16 %v4715, %v4711
    %v4824 = vpack.c.b16 %v4716, %v4712
    %v4825 = vpack.c.b16 %v4717, %v4713
    %v4826 = vpack.c.b16 %v4722, %v4718
    %v4827 = vpack.c.b16 %v4723, %v4719
    %v4828 = vpack.c.b16 %v4724, %v4720
    %v4829 = vpack.c.b16 %v4725, %v4721
    %v4830 = vpack.c.b16 %v4730, %v4726
    %v4831 = vpack.c.b16 %v4731, %v4727
    %v4832 = vpack.c.b16 %v4732, %v4728
    %v4833 = vpack.c.b16 %v4733, %v4729
    %v4834 = vpack.c.b16 %v4738, %v4734
    %v4835 = vpack.c.b16 %v4739, %v4735
    %v4836 = vpack.c.b16 %v4740, %v4736
    %v4837 = vpack.c.b16 %v4741, %v4737
    %v4838 = vpack.c.b16 %v4746, %v4742
    %v4839 = vpack.c.b16 %v4747, %v4743
    %v4840 = vpack.c.b16 %v4748, %v4744
    %v4841 = vpack.c.b16 %v4749, %v4745
    %v4842 = vpack.c.b16 %v4754, %v4750
    %v4843 = vpack.c.b16 %v4755, %v4751
    %v4844 = vpack.c.b16 %v4756, %v4752
    %v4845 = vpack.c.b16 %v4757, %v4753
    %v4846 = vpack.c.b16 %v4762, %v4758
    %v4847 = vpack.c.b16 %v4763, %v4759
    %v4848 = vpack.c.b16 %v4764, %v4760
    %v4849 = vpack.c.b16 %v4765, %v4761
    %v4850 = vpack.c.b16 %v4770, %v4766
    %v4851 = vpack.c.b16 %v4771, %v4767
    %v4852 = vpack.c.b16 %v4772, %v4768
    %v4853 = vpack.c.b16 %v4773, %v4769
    %v4854 = vpack.c.b16 %v4778, %v4774
    %v4855 = vpack.c.b16 %v4779, %v4775
    %v4856 = vpack.c.b16 %v4780, %v4776
    %v4857 = vpack.c.b16 %v4781, %v4777
    %v4858 = vpack.c.b16 %v4786, %v4782
    %v4859 = vpack.c.b16 %v4787, %v4783
    %v4860 = vpack.c.b16 %v4788, %v4784
    %v4861 = vpack.c.b16 %v4789, %v4785
    %v4862 = vpack.c.b16 %v4794, %v4790
    %v4863 = vpack.c.b16 %v4795, %v4791
    %v4864 = vpack.c.b16 %v4796, %v4792
    %v4865 = vpack.c.b16 %v4797, %v4793
    %v4866 = vpack.c.b16 %v4802, %v4798
    %v4867 = vpack.c.b16 %v4803, %v4799
    %v4868 = vpack.c.b16 %v4804, %v4800
    %v4869 = vpack.c.b16 %v4805, %v4801
    %4934 = vmatprep.subr.bf16.mxu0 %v4807
    %4935 = vmatpush1.bf16.msra.mxu0 %v4806
    %4936 = vmatprep.subr.bf16.mxu0 %v4811
    %4937 = vmatpush1.bf16.msra.mxu0 %v4810
    %4938 = vmatprep.subr.bf16.mxu0 %v4815
    %4939 = vmatpush1.bf16.msra.mxu0 %v4814
    %4940 = vmatprep.subr.bf16.mxu0 %v4819
    %4941 = vmatpush1.bf16.msra.mxu0 %v4818
    %4942 = vmatprep.subr.bf16.mxu0 %v4823
    %4943 = vmatpush1.bf16.msra.mxu0 %v4822
    %4944 = vmatprep.subr.bf16.mxu0 %v4827
    %4945 = vmatpush1.bf16.msra.mxu0 %v4826
    %4946 = vmatprep.subr.bf16.mxu0 %v4831
    %4947 = vmatpush1.bf16.msra.mxu0 %v4830
    %4948 = vmatprep.subr.bf16.mxu0 %v4835
    %4949 = vmatpush1.bf16.msra.mxu0 %v4834
    %4950 = vmatprep.subr.bf16.mxu0 %v4839
    %4951 = vmatpush1.bf16.msra.mxu0 %v4838
    %4952 = vmatprep.subr.bf16.mxu0 %v4843
    %4953 = vmatpush1.bf16.msra.mxu0 %v4842
    %4954 = vmatprep.subr.bf16.mxu0 %v4847
    %4955 = vmatpush1.bf16.msra.mxu0 %v4846
    %4956 = vmatprep.subr.bf16.mxu0 %v4851
    %4957 = vmatpush1.bf16.msra.mxu0 %v4850
    %4958 = vmatprep.subr.bf16.mxu0 %v4855
    %4959 = vmatpush1.bf16.msra.mxu0 %v4854
    %4960 = vmatprep.subr.bf16.mxu0 %v4859
    %4961 = vmatpush1.bf16.msra.mxu0 %v4858
    %4962 = vmatprep.subr.bf16.mxu0 %v4863
    %4963 = vmatpush1.bf16.msra.mxu0 %v4862
    %4964 = vmatprep.subr.bf16.mxu0 %v4867
    %4965 = vmatpush1.bf16.msra.mxu0 %v4866
    %4966 = vmatprep.mubr.bf16.mxu0 %v4076
    %4967 = vmatmul.mubr.bf16.gmra.mrb[0].mxu0 %v4075
    %v4968 = vpop.f32.mrb[0].mxu0
    %v4969 = vadd.f32 %v4563, %v4968
    %v4970 = vpop.f32.mrb[0].mxu0
    %v4971 = vadd.f32 %v4565, %v4970
    %v4972 = vpop.f32.mrb[0].mxu0
    %v4973 = vadd.f32 %v4567, %v4972
    %v4974 = vpop.f32.mrb[0].mxu0
    %v4975 = vadd.f32 %v4569, %v4974
    %4976 = vdwg.mxu0
    %4977 = vmatprep.subr.bf16.mxu0 %v4809
    %4978 = vmatpush1.bf16.msra.mxu0 %v4808
    %4979 = vmatprep.subr.bf16.mxu0 %v4813
    %4980 = vmatpush1.bf16.msra.mxu0 %v4812
    %4981 = vmatprep.subr.bf16.mxu0 %v4817
    %4982 = vmatpush1.bf16.msra.mxu0 %v4816
    %4983 = vmatprep.subr.bf16.mxu0 %v4821
    %4984 = vmatpush1.bf16.msra.mxu0 %v4820
    %4985 = vmatprep.subr.bf16.mxu0 %v4825
    %4986 = vmatpush1.bf16.msra.mxu0 %v4824
    %4987 = vmatprep.subr.bf16.mxu0 %v4829
    %4988 = vmatpush1.bf16.msra.mxu0 %v4828
    %4989 = vmatprep.subr.bf16.mxu0 %v4833
    %4990 = vmatpush1.bf16.msra.mxu0 %v4832
    %4991 = vmatprep.subr.bf16.mxu0 %v4837
    %4992 = vmatpush1.bf16.msra.mxu0 %v4836
    %4993 = vmatprep.subr.bf16.mxu0 %v4841
    %4994 = vmatpush1.bf16.msra.mxu0 %v4840
    %4995 = vmatprep.subr.bf16.mxu0 %v4845
    %4996 = vmatpush1.bf16.msra.mxu0 %v4844
    %4997 = vmatprep.subr.bf16.mxu0 %v4849
    %4998 = vmatpush1.bf16.msra.mxu0 %v4848
    %4999 = vmatprep.subr.bf16.mxu0 %v4853
    %5000 = vmatpush1.bf16.msra.mxu0 %v4852
    %5001 = vmatprep.subr.bf16.mxu0 %v4857
    %5002 = vmatpush1.bf16.msra.mxu0 %v4856
    %5003 = vmatprep.subr.bf16.mxu0 %v4861
    %5004 = vmatpush1.bf16.msra.mxu0 %v4860
    %5005 = vmatprep.subr.bf16.mxu0 %v4865
    %5006 = vmatpush1.bf16.msra.mxu0 %v4864
    %5007 = vmatprep.subr.bf16.mxu0 %v4869
    %5008 = vmatpush1.bf16.msra.mxu0 %v4868
    %5009 = vmatprep.mubr.bf16.mxu0 %v4076
    %5010 = vmatmul.mubr.bf16.gmra.mrb[0].mxu0 %v4075
    %v5011 = vpop.f32.mrb[0].mxu0
    %v5012 = vadd.f32 %v4606, %v5011
    %v5013 = vpop.f32.mrb[0].mxu0
    %v5014 = vadd.f32 %v4608, %v5013
    %v5015 = vpop.f32.mrb[0].mxu0
    %v5016 = vadd.f32 %v4610, %v5015
    %v5017 = vpop.f32.mrb[0].mxu0
    %v5018 = vadd.f32 %v4612, %v5017
    %5019 = vdwg.mxu0
    %v5020 = vld [vmem:[%s11] sm:$0xf]
    %v5022 = vlaneseq
    %v5023 = vshrl.u32 %v5022, 7
    %v5024 = vsub.s32 0, %v5023
    %v5025 = vrot.slane %v5020, %v5024
    %v5026 = vlaneseq
    %v5027 = vshrl.u32 %v5026, 7
    %v5028 = vsub.s32 1, %v5027
    %v5029 = vrot.slane %v5020, %v5028
    %v5030 = vlaneseq
    %v5031 = vshrl.u32 %v5030, 7
    %v5032 = vsub.s32 2, %v5031
    %v5033 = vrot.slane %v5020, %v5032
    %v5034 = vlaneseq
    %v5035 = vshrl.u32 %v5034, 7
    %v5036 = vsub.s32 3, %v5035
    %v5037 = vrot.slane %v5020, %v5036
    %v5042 = vadd.f32 %v4969, %v5025
    %v5043 = vadd.f32 %v4971, %v5029
    %v5044 = vadd.f32 %v5012, %v5033
    %v5045 = vadd.f32 %v5014, %v5037
    %v5046 = vadd.f32 %v4973, %v5025
    %v5047 = vadd.f32 %v4975, %v5029
    %v5048 = vadd.f32 %v5016, %v5033
    %v5049 = vadd.f32 %v5018, %v5037
    %v5050 = vmax.f32 %v5042, 0.0
    %v5051 = vmax.f32 %v5043, 0.0
    %v5052 = vmax.f32 %v5044, 0.0
    %v5053 = vmax.f32 %v5045, 0.0
    %v5054 = vmax.f32 %v5046, 0.0
    %v5055 = vmax.f32 %v5047, 0.0
    %v5056 = vmax.f32 %v5048, 0.0
    %v5057 = vmax.f32 %v5049, 0.0
    %v5058 = vpack.c.bf16 %v5054, %v5050
    %v5059 = vpack.c.bf16 %v5055, %v5051
    %v5060 = vpack.c.bf16 %v5056, %v5052
    %v5061 = vpack.c.bf16 %v5057, %v5053
    %v5062 = vld [vmem:[#allocation7] sm:$0xf]
    %v5063 = vld [vmem:[#allocation7 + $0x4] sm:$0xf]
    %v5064 = vld [vmem:[#allocation7 + $0x8] sm:$0xf]
    %v5065 = vld [vmem:[#allocation7 + $0xc] sm:$0xf]
    %v5066 = vld [vmem:[#allocation7 + $0x10] sm:$0xf]
    %v5067 = vld [vmem:[#allocation7 + $0x14] sm:$0xf]
    %v5068 = vld [vmem:[#allocation7 + $0x18] sm:$0xf]
    %v5069 = vld [vmem:[#allocation7 + $0x1c] sm:$0xf]
    %v5070 = vld [vmem:[#allocation7 + $0x20] sm:$0xf]
    %v5071 = vld [vmem:[#allocation7 + $0x24] sm:$0xf]
    %v5072 = vld [vmem:[#allocation7 + $0x28] sm:$0xf]
    %v5073 = vld [vmem:[#allocation7 + $0x2c] sm:$0xf]
    %v5074 = vld [vmem:[#allocation7 + $0x30] sm:$0xf]
    %v5075 = vld [vmem:[#allocation7 + $0x34] sm:$0xf]
    %v5076 = vld [vmem:[#allocation7 + $0x38] sm:$0xf]
    %v5077 = vld [vmem:[#allocation7 + $0x3c] sm:$0xf]
    %v5078 = vld [vmem:[#allocation7 + $0x40] sm:$0xf]
    %v5079 = vld [vmem:[#allocation7 + $0x44] sm:$0xf]
    %v5080 = vld [vmem:[#allocation7 + $0x48] sm:$0xf]
    %v5081 = vld [vmem:[#allocation7 + $0x4c] sm:$0xf]
    %v5082 = vld [vmem:[#allocation7 + $0x50] sm:$0xf]
    %v5083 = vld [vmem:[#allocation7 + $0x54] sm:$0xf]
    %v5084 = vld [vmem:[#allocation7 + $0x58] sm:$0xf]
    %v5085 = vld [vmem:[#allocation7 + $0x5c] sm:$0xf]
    %v5086 = vld [vmem:[#allocation7 + $0x60] sm:$0xf]
    %v5087 = vld [vmem:[#allocation7 + $0x64] sm:$0xf]
    %v5088 = vld [vmem:[#allocation7 + $0x68] sm:$0xf]
    %v5089 = vld [vmem:[#allocation7 + $0x6c] sm:$0xf]
    %v5090 = vld [vmem:[#allocation7 + $0x70] sm:$0xf]
    %v5091 = vld [vmem:[#allocation7 + $0x74] sm:$0xf]
    %v5092 = vld [vmem:[#allocation7 + $0x78] sm:$0xf]
    %v5093 = vld [vmem:[#allocation7 + $0x7c] sm:$0xf]
    %v5094 = vld [vmem:[#allocation7 + $0x80] sm:$0xf]
    %v5095 = vld [vmem:[#allocation7 + $0x84] sm:$0xf]
    %v5096 = vld [vmem:[#allocation7 + $0x88] sm:$0xf]
    %v5097 = vld [vmem:[#allocation7 + $0x8c] sm:$0xf]
    %v5098 = vld [vmem:[#allocation7 + $0x90] sm:$0xf]
    %v5099 = vld [vmem:[#allocation7 + $0x94] sm:$0xf]
    %v5100 = vld [vmem:[#allocation7 + $0x98] sm:$0xf]
    %v5101 = vld [vmem:[#allocation7 + $0x9c] sm:$0xf]
    %v5102 = vld [vmem:[#allocation7 + $0xa0] sm:$0xf]
    %v5103 = vld [vmem:[#allocation7 + $0xa4] sm:$0xf]
    %v5104 = vld [vmem:[#allocation7 + $0xa8] sm:$0xf]
    %v5105 = vld [vmem:[#allocation7 + $0xac] sm:$0xf]
    %v5106 = vld [vmem:[#allocation7 + $0xb0] sm:$0xf]
    %v5107 = vld [vmem:[#allocation7 + $0xb4] sm:$0xf]
    %v5108 = vld [vmem:[#allocation7 + $0xb8] sm:$0xf]
    %v5109 = vld [vmem:[#allocation7 + $0xbc] sm:$0xf]
    %v5110 = vld [vmem:[#allocation7 + $0xc0] sm:$0xf]
    %v5111 = vld [vmem:[#allocation7 + $0xc4] sm:$0xf]
    %v5112 = vld [vmem:[#allocation7 + $0xc8] sm:$0xf]
    %v5113 = vld [vmem:[#allocation7 + $0xcc] sm:$0xf]
    %v5114 = vld [vmem:[#allocation7 + $0xd0] sm:$0xf]
    %v5115 = vld [vmem:[#allocation7 + $0xd4] sm:$0xf]
    %v5116 = vld [vmem:[#allocation7 + $0xd8] sm:$0xf]
    %v5117 = vld [vmem:[#allocation7 + $0xdc] sm:$0xf]
    %v5118 = vld [vmem:[#allocation7 + $0xe0] sm:$0xf]
    %v5119 = vld [vmem:[#allocation7 + $0xe4] sm:$0xf]
    %v5120 = vld [vmem:[#allocation7 + $0xe8] sm:$0xf]
    %v5121 = vld [vmem:[#allocation7 + $0xec] sm:$0xf]
    %v5122 = vld [vmem:[#allocation7 + $0xf0] sm:$0xf]
    %v5123 = vld [vmem:[#allocation7 + $0xf4] sm:$0xf]
    %v5124 = vld [vmem:[#allocation7 + $0xf8] sm:$0xf]
    %v5125 = vld [vmem:[#allocation7 + $0xfc] sm:$0xf]
    %v5126 = vld [vmem:[%s13] sm:$0x1]
    %v5128 = vlaneseq
    %v5129 = vshrl.u32 %v5128, 7
    %v5130 = vsub.s32 0, %v5129
    %v5131 = vrot.slane %v5126, %v5130
    %v5197 = vunpack.c.l.b16 %v5062
    %v5198 = vunpack.c.l.b16 %v5063
    %v5199 = vunpack.c.l.b16 %v5064
    %v5200 = vunpack.c.l.b16 %v5065
    %v5201 = vunpack.c.l.b16 %v5066
    %v5202 = vunpack.c.l.b16 %v5067
    %v5203 = vunpack.c.l.b16 %v5068
    %v5204 = vunpack.c.l.b16 %v5069
    %v5205 = vunpack.c.l.b16 %v5070
    %v5206 = vunpack.c.l.b16 %v5071
    %v5207 = vunpack.c.l.b16 %v5072
    %v5208 = vunpack.c.l.b16 %v5073
    %v5209 = vunpack.c.l.b16 %v5074
    %v5210 = vunpack.c.l.b16 %v5075
    %v5211 = vunpack.c.l.b16 %v5076
    %v5212 = vunpack.c.l.b16 %v5077
    %v5213 = vunpack.c.l.b16 %v5078
    %v5214 = vunpack.c.l.b16 %v5079
    %v5215 = vunpack.c.l.b16 %v5080
    %v5216 = vunpack.c.l.b16 %v5081
    %v5217 = vunpack.c.l.b16 %v5082
    %v5218 = vunpack.c.l.b16 %v5083
    %v5219 = vunpack.c.l.b16 %v5084
    %v5220 = vunpack.c.l.b16 %v5085
    %v5221 = vunpack.c.l.b16 %v5086
    %v5222 = vunpack.c.l.b16 %v5087
    %v5223 = vunpack.c.l.b16 %v5088
    %v5224 = vunpack.c.l.b16 %v5089
    %v5225 = vunpack.c.l.b16 %v5090
    %v5226 = vunpack.c.l.b16 %v5091
    %v5227 = vunpack.c.l.b16 %v5092
    %v5228 = vunpack.c.l.b16 %v5093
    %v5229 = vunpack.c.l.b16 %v5094
    %v5230 = vunpack.c.l.b16 %v5095
    %v5231 = vunpack.c.l.b16 %v5096
    %v5232 = vunpack.c.l.b16 %v5097
    %v5233 = vunpack.c.l.b16 %v5098
    %v5234 = vunpack.c.l.b16 %v5099
    %v5235 = vunpack.c.l.b16 %v5100
    %v5236 = vunpack.c.l.b16 %v5101
    %v5237 = vunpack.c.l.b16 %v5102
    %v5238 = vunpack.c.l.b16 %v5103
    %v5239 = vunpack.c.l.b16 %v5104
    %v5240 = vunpack.c.l.b16 %v5105
    %v5241 = vunpack.c.l.b16 %v5106
    %v5242 = vunpack.c.l.b16 %v5107
    %v5243 = vunpack.c.l.b16 %v5108
    %v5244 = vunpack.c.l.b16 %v5109
    %v5245 = vunpack.c.l.b16 %v5110
    %v5246 = vunpack.c.l.b16 %v5111
    %v5247 = vunpack.c.l.b16 %v5112
    %v5248 = vunpack.c.l.b16 %v5113
    %v5249 = vunpack.c.l.b16 %v5114
    %v5250 = vunpack.c.l.b16 %v5115
    %v5251 = vunpack.c.l.b16 %v5116
    %v5252 = vunpack.c.l.b16 %v5117
    %v5253 = vunpack.c.l.b16 %v5118
    %v5254 = vunpack.c.l.b16 %v5119
    %v5255 = vunpack.c.l.b16 %v5120
    %v5256 = vunpack.c.l.b16 %v5121
    %v5257 = vunpack.c.l.b16 %v5122
    %v5258 = vunpack.c.l.b16 %v5123
    %v5259 = vunpack.c.l.b16 %v5124
    %v5260 = vunpack.c.l.b16 %v5125
    %v5261 = vpack.c.b16 %v5198, %v5197
    %v5262 = vpack.c.b16 %v5200, %v5199
    %v5263 = vpack.c.b16 %v5202, %v5201
    %v5264 = vpack.c.b16 %v5204, %v5203
    %v5265 = vpack.c.b16 %v5206, %v5205
    %v5266 = vpack.c.b16 %v5208, %v5207
    %v5267 = vpack.c.b16 %v5210, %v5209
    %v5268 = vpack.c.b16 %v5212, %v5211
    %v5269 = vpack.c.b16 %v5214, %v5213
    %v5270 = vpack.c.b16 %v5216, %v5215
    %v5271 = vpack.c.b16 %v5218, %v5217
    %v5272 = vpack.c.b16 %v5220, %v5219
    %v5273 = vpack.c.b16 %v5222, %v5221
    %v5274 = vpack.c.b16 %v5224, %v5223
    %v5275 = vpack.c.b16 %v5226, %v5225
    %v5276 = vpack.c.b16 %v5228, %v5227
    %v5277 = vpack.c.b16 %v5230, %v5229
    %v5278 = vpack.c.b16 %v5232, %v5231
    %v5279 = vpack.c.b16 %v5234, %v5233
    %v5280 = vpack.c.b16 %v5236, %v5235
    %v5281 = vpack.c.b16 %v5238, %v5237
    %v5282 = vpack.c.b16 %v5240, %v5239
    %v5283 = vpack.c.b16 %v5242, %v5241
    %v5284 = vpack.c.b16 %v5244, %v5243
    %v5285 = vpack.c.b16 %v5246, %v5245
    %v5286 = vpack.c.b16 %v5248, %v5247
    %v5287 = vpack.c.b16 %v5250, %v5249
    %v5288 = vpack.c.b16 %v5252, %v5251
    %v5289 = vpack.c.b16 %v5254, %v5253
    %v5290 = vpack.c.b16 %v5256, %v5255
    %v5291 = vpack.c.b16 %v5258, %v5257
    %v5292 = vpack.c.b16 %v5260, %v5259
    %5325 = vmatprep.subr.bf16.mxu0 0
    %5326 = vmatpush1.bf16.msra.mxu0 %v5261
    %5327 = vmatprep.subr.bf16.mxu0 0
    %5328 = vmatpush1.bf16.msra.mxu0 %v5262
    %5329 = vmatprep.subr.bf16.mxu0 0
    %5330 = vmatpush1.bf16.msra.mxu0 %v5263
    %5331 = vmatprep.subr.bf16.mxu0 0
    %5332 = vmatpush1.bf16.msra.mxu0 %v5264
    %5333 = vmatprep.subr.bf16.mxu0 0
    %5334 = vmatpush1.bf16.msra.mxu0 %v5265
    %5335 = vmatprep.subr.bf16.mxu0 0
    %5336 = vmatpush1.bf16.msra.mxu0 %v5266
    %5337 = vmatprep.subr.bf16.mxu0 0
    %5338 = vmatpush1.bf16.msra.mxu0 %v5267
    %5339 = vmatprep.subr.bf16.mxu0 0
    %5340 = vmatpush1.bf16.msra.mxu0 %v5268
    %5341 = vmatprep.subr.bf16.mxu0 0
    %5342 = vmatpush1.bf16.msra.mxu0 %v5269
    %5343 = vmatprep.subr.bf16.mxu0 0
    %5344 = vmatpush1.bf16.msra.mxu0 %v5270
    %5345 = vmatprep.subr.bf16.mxu0 0
    %5346 = vmatpush1.bf16.msra.mxu0 %v5271
    %5347 = vmatprep.subr.bf16.mxu0 0
    %5348 = vmatpush1.bf16.msra.mxu0 %v5272
    %5349 = vmatprep.subr.bf16.mxu0 0
    %5350 = vmatpush1.bf16.msra.mxu0 %v5273
    %5351 = vmatprep.subr.bf16.mxu0 0
    %5352 = vmatpush1.bf16.msra.mxu0 %v5274
    %5353 = vmatprep.subr.bf16.mxu0 0
    %5354 = vmatpush1.bf16.msra.mxu0 %v5275
    %5355 = vmatprep.subr.bf16.mxu0 0
    %5356 = vmatpush1.bf16.msra.mxu0 %v5276
    %5357 = vmatprep.mubr.bf16.mxu0 %v5059
    %5358 = vmatmul.mubr.bf16.gmra.mrb[0].mxu0 %v5058
    %v5359 = vpop.f32.mrb[0].mxu0
    %v5360 = vadd.f32 %v5131, %v5359
    %v5361 = vpop.f32.mrb[0].mxu0
    %v5362 = vpop.f32.mrb[0].mxu0
    %v5363 = vadd.f32 %v5131, %v5362
    %v5364 = vpop.f32.mrb[0].mxu0
    %5365 = vdwg.mxu0
    %5366 = vmatprep.subr.bf16.mxu0 0
    %5367 = vmatpush1.bf16.msra.mxu0 %v5277
    %5368 = vmatprep.subr.bf16.mxu0 0
    %5369 = vmatpush1.bf16.msra.mxu0 %v5278
    %5370 = vmatprep.subr.bf16.mxu0 0
    %5371 = vmatpush1.bf16.msra.mxu0 %v5279
    %5372 = vmatprep.subr.bf16.mxu0 0
    %5373 = vmatpush1.bf16.msra.mxu0 %v5280
    %5374 = vmatprep.subr.bf16.mxu0 0
    %5375 = vmatpush1.bf16.msra.mxu0 %v5281
    %5376 = vmatprep.subr.bf16.mxu0 0
    %5377 = vmatpush1.bf16.msra.mxu0 %v5282
    %5378 = vmatprep.subr.bf16.mxu0 0
    %5379 = vmatpush1.bf16.msra.mxu0 %v5283
    %5380 = vmatprep.subr.bf16.mxu0 0
    %5381 = vmatpush1.bf16.msra.mxu0 %v5284
    %5382 = vmatprep.subr.bf16.mxu0 0
    %5383 = vmatpush1.bf16.msra.mxu0 %v5285
    %5384 = vmatprep.subr.bf16.mxu0 0
    %5385 = vmatpush1.bf16.msra.mxu0 %v5286
    %5386 = vmatprep.subr.bf16.mxu0 0
    %5387 = vmatpush1.bf16.msra.mxu0 %v5287
    %5388 = vmatprep.subr.bf16.mxu0 0
    %5389 = vmatpush1.bf16.msra.mxu0 %v5288
    %5390 = vmatprep.subr.bf16.mxu0 0
    %5391 = vmatpush1.bf16.msra.mxu0 %v5289
    %5392 = vmatprep.subr.bf16.mxu0 0
    %5393 = vmatpush1.bf16.msra.mxu0 %v5290
    %5394 = vmatprep.subr.bf16.mxu0 0
    %5395 = vmatpush1.bf16.msra.mxu0 %v5291
    %5396 = vmatprep.subr.bf16.mxu0 0
    %5397 = vmatpush1.bf16.msra.mxu0 %v5292
    %5398 = vmatprep.mubr.bf16.mxu0 %v5061
    %5399 = vmatmul.mubr.bf16.gmra.mrb[0].mxu0 %v5060
    %v5400 = vpop.f32.mrb[0].mxu0
    %v5401 = vadd.f32 %v5360, %v5400
    %v5402 = vpop.f32.mrb[0].mxu0
    %v5403 = vpop.f32.mrb[0].mxu0
    %v5404 = vadd.f32 %v5363, %v5403
    %v5405 = vpop.f32.mrb[0].mxu0
    %5406 = vdwg.mxu0
    %v5407 = vld [vmem:[#allocation9] sm:$0xff]
    %v5408 = vld [vmem:[#allocation9 + $0x8] sm:$0xff]
    %v5409 = vld [vmem:[#allocation9 + $0x10] sm:$0xff]
    %v5410 = vld [vmem:[#allocation9 + $0x18] sm:$0xff]
    %v5411 = vld [vmem:[#allocation9 + $0x20] sm:$0xff]
    %v5412 = vld [vmem:[#allocation9 + $0x28] sm:$0xff]
    %v5413 = vld [vmem:[#allocation9 + $0x30] sm:$0xff]
    %v5414 = vld [vmem:[#allocation9 + $0x38] sm:$0xff]
    %v5415 = vld [vmem:[#allocation9 + $0x40] sm:$0xff]
    %v5416 = vld [vmem:[#allocation9 + $0x48] sm:$0xff]
    %v5417 = vld [vmem:[#allocation9 + $0x50] sm:$0xff]
    %v5418 = vld [vmem:[#allocation9 + $0x58] sm:$0xff]
    %v5419 = vld [vmem:[#allocation9 + $0x60] sm:$0xff]
    %v5420 = vld [vmem:[#allocation9 + $0x68] sm:$0xff]
    %v5421 = vld [vmem:[#allocation9 + $0x70] sm:$0xff]
    %v5422 = vld [vmem:[#allocation9 + $0x78] sm:$0xff]
    %v5423 = vld [vmem:[#allocation9 + $0x80] sm:$0xff]
    %v5424 = vld [vmem:[#allocation9 + $0x88] sm:$0xff]
    %v5425 = vld [vmem:[#allocation9 + $0x90] sm:$0xff]
    %v5426 = vld [vmem:[#allocation9 + $0x98] sm:$0xff]
    %v5427 = vld [vmem:[#allocation9 + $0xa0] sm:$0xff]
    %v5428 = vld [vmem:[#allocation9 + $0xa8] sm:$0xff]
    %v5429 = vld [vmem:[#allocation9 + $0xb0] sm:$0xff]
    %v5430 = vld [vmem:[#allocation9 + $0xb8] sm:$0xff]
    %v5431 = vld [vmem:[#allocation9 + $0xc0] sm:$0xff]
    %v5432 = vld [vmem:[#allocation9 + $0xc8] sm:$0xff]
    %v5433 = vld [vmem:[#allocation9 + $0xd0] sm:$0xff]
    %v5434 = vld [vmem:[#allocation9 + $0xd8] sm:$0xff]
    %v5435 = vld [vmem:[#allocation9 + $0xe0] sm:$0xff]
    %v5436 = vld [vmem:[#allocation9 + $0xe8] sm:$0xff]
    %v5437 = vld [vmem:[#allocation9 + $0xf0] sm:$0xff]
    %v5438 = vld [vmem:[#allocation9 + $0xf8] sm:$0xff]
    %v5439 = vld [vmem:[#allocation9 + $0x100] sm:$0xff]
    %v5440 = vld [vmem:[#allocation9 + $0x108] sm:$0xff]
    %v5441 = vld [vmem:[#allocation9 + $0x110] sm:$0xff]
    %v5442 = vld [vmem:[#allocation9 + $0x118] sm:$0xff]
    %v5443 = vld [vmem:[#allocation9 + $0x120] sm:$0xff]
    %v5444 = vld [vmem:[#allocation9 + $0x128] sm:$0xff]
    %v5445 = vld [vmem:[#allocation9 + $0x130] sm:$0xff]
    %v5446 = vld [vmem:[#allocation9 + $0x138] sm:$0xff]
    %v5447 = vld [vmem:[#allocation9 + $0x140] sm:$0xff]
    %v5448 = vld [vmem:[#allocation9 + $0x148] sm:$0xff]
    %v5449 = vld [vmem:[#allocation9 + $0x150] sm:$0xff]
    %v5450 = vld [vmem:[#allocation9 + $0x158] sm:$0xff]
    %v5451 = vld [vmem:[#allocation9 + $0x160] sm:$0xff]
    %v5452 = vld [vmem:[#allocation9 + $0x168] sm:$0xff]
    %v5453 = vld [vmem:[#allocation9 + $0x170] sm:$0xff]
    %v5454 = vld [vmem:[#allocation9 + $0x178] sm:$0xff]
    %v5455 = vld [vmem:[#allocation9 + $0x180] sm:$0xff]
    %v5456 = vld [vmem:[#allocation9 + $0x188] sm:$0xff]
    %v5457 = vld [vmem:[#allocation9 + $0x190] sm:$0xff]
    %v5458 = vld [vmem:[#allocation9 + $0x198] sm:$0xff]
    %v5459 = vld [vmem:[#allocation9 + $0x1a0] sm:$0xff]
    %v5460 = vld [vmem:[#allocation9 + $0x1a8] sm:$0xff]
    %v5461 = vld [vmem:[#allocation9 + $0x1b0] sm:$0xff]
    %v5462 = vld [vmem:[#allocation9 + $0x1b8] sm:$0xff]
    %v5463 = vld [vmem:[#allocation9 + $0x1c0] sm:$0xff]
    %v5464 = vld [vmem:[#allocation9 + $0x1c8] sm:$0xff]
    %v5465 = vld [vmem:[#allocation9 + $0x1d0] sm:$0xff]
    %v5466 = vld [vmem:[#allocation9 + $0x1d8] sm:$0xff]
    %v5467 = vld [vmem:[#allocation9 + $0x1e0] sm:$0xff]
    %v5468 = vld [vmem:[#allocation9 + $0x1e8] sm:$0xff]
    %v5469 = vld [vmem:[#allocation9 + $0x1f0] sm:$0xff]
    %v5470 = vld [vmem:[#allocation9 + $0x1f8] sm:$0xff]
    %s5471 = scalar_lea.vmem [#allocation9], 512
    %v5472 = vld [vmem:[%s5471] sm:$0xff]
    %v5473 = vld [vmem:[%s5471 + $0x8] sm:$0xff]
    %v5474 = vld [vmem:[%s5471 + $0x10] sm:$0xff]
    %v5475 = vld [vmem:[%s5471 + $0x18] sm:$0xff]
    %v5476 = vld [vmem:[%s5471 + $0x20] sm:$0xff]
    %v5477 = vld [vmem:[%s5471 + $0x28] sm:$0xff]
    %v5478 = vld [vmem:[%s5471 + $0x30] sm:$0xff]
    %v5479 = vld [vmem:[%s5471 + $0x38] sm:$0xff]
    %v5480 = vld [vmem:[%s5471 + $0x40] sm:$0xff]
    %v5481 = vld [vmem:[%s5471 + $0x48] sm:$0xff]
    %v5482 = vld [vmem:[%s5471 + $0x50] sm:$0xff]
    %v5483 = vld [vmem:[%s5471 + $0x58] sm:$0xff]
    %v5484 = vld [vmem:[%s5471 + $0x60] sm:$0xff]
    %v5485 = vld [vmem:[%s5471 + $0x68] sm:$0xff]
    %v5486 = vld [vmem:[%s5471 + $0x70] sm:$0xff]
    %v5487 = vld [vmem:[%s5471 + $0x78] sm:$0xff]
    %v5488 = vld [vmem:[%s5471 + $0x80] sm:$0xff]
    %v5489 = vld [vmem:[%s5471 + $0x88] sm:$0xff]
    %v5490 = vld [vmem:[%s5471 + $0x90] sm:$0xff]
    %v5491 = vld [vmem:[%s5471 + $0x98] sm:$0xff]
    %v5492 = vld [vmem:[%s5471 + $0xa0] sm:$0xff]
    %v5493 = vld [vmem:[%s5471 + $0xa8] sm:$0xff]
    %v5494 = vld [vmem:[%s5471 + $0xb0] sm:$0xff]
    %v5495 = vld [vmem:[%s5471 + $0xb8] sm:$0xff]
    %v5496 = vld [vmem:[%s5471 + $0xc0] sm:$0xff]
    %v5497 = vld [vmem:[%s5471 + $0xc8] sm:$0xff]
    %v5498 = vld [vmem:[%s5471 + $0xd0] sm:$0xff]
    %v5499 = vld [vmem:[%s5471 + $0xd8] sm:$0xff]
    %v5500 = vld [vmem:[%s5471 + $0xe0] sm:$0xff]
    %v5501 = vld [vmem:[%s5471 + $0xe8] sm:$0xff]
    %v5502 = vld [vmem:[%s5471 + $0xf0] sm:$0xff]
    %v5503 = vld [vmem:[%s5471 + $0xf8] sm:$0xff]
    %v5504 = vld [vmem:[%s5471 + $0x100] sm:$0xff]
    %v5505 = vld [vmem:[%s5471 + $0x108] sm:$0xff]
    %v5506 = vld [vmem:[%s5471 + $0x110] sm:$0xff]
    %v5507 = vld [vmem:[%s5471 + $0x118] sm:$0xff]
    %v5508 = vld [vmem:[%s5471 + $0x120] sm:$0xff]
    %v5509 = vld [vmem:[%s5471 + $0x128] sm:$0xff]
    %v5510 = vld [vmem:[%s5471 + $0x130] sm:$0xff]
    %v5511 = vld [vmem:[%s5471 + $0x138] sm:$0xff]
    %v5512 = vld [vmem:[%s5471 + $0x140] sm:$0xff]
    %v5513 = vld [vmem:[%s5471 + $0x148] sm:$0xff]
    %v5514 = vld [vmem:[%s5471 + $0x150] sm:$0xff]
    %v5515 = vld [vmem:[%s5471 + $0x158] sm:$0xff]
    %v5516 = vld [vmem:[%s5471 + $0x160] sm:$0xff]
    %v5517 = vld [vmem:[%s5471 + $0x168] sm:$0xff]
    %v5518 = vld [vmem:[%s5471 + $0x170] sm:$0xff]
    %v5519 = vld [vmem:[%s5471 + $0x178] sm:$0xff]
    %v5520 = vld [vmem:[%s5471 + $0x180] sm:$0xff]
    %v5521 = vld [vmem:[%s5471 + $0x188] sm:$0xff]
    %v5522 = vld [vmem:[%s5471 + $0x190] sm:$0xff]
    %v5523 = vld [vmem:[%s5471 + $0x198] sm:$0xff]
    %v5524 = vld [vmem:[%s5471 + $0x1a0] sm:$0xff]
    %v5525 = vld [vmem:[%s5471 + $0x1a8] sm:$0xff]
    %v5526 = vld [vmem:[%s5471 + $0x1b0] sm:$0xff]
    %v5527 = vld [vmem:[%s5471 + $0x1b8] sm:$0xff]
    %v5528 = vld [vmem:[%s5471 + $0x1c0] sm:$0xff]
    %v5529 = vld [vmem:[%s5471 + $0x1c8] sm:$0xff]
    %v5530 = vld [vmem:[%s5471 + $0x1d0] sm:$0xff]
    %v5531 = vld [vmem:[%s5471 + $0x1d8] sm:$0xff]
    %v5532 = vld [vmem:[%s5471 + $0x1e0] sm:$0xff]
    %v5533 = vld [vmem:[%s5471 + $0x1e8] sm:$0xff]
    %v5534 = vld [vmem:[%s5471 + $0x1f0] sm:$0xff]
    %v5535 = vld [vmem:[%s5471 + $0x1f8] sm:$0xff]
    %v5600 = vunpack.c.l.b16 %v5472
    %v5601 = vunpack.c.h.b16 %v5472
    %v5602 = vunpack.c.l.b16 %v5473
    %v5603 = vunpack.c.h.b16 %v5473
    %v5604 = vunpack.c.l.b16 %v5474
    %v5605 = vunpack.c.h.b16 %v5474
    %v5606 = vunpack.c.l.b16 %v5475
    %v5607 = vunpack.c.h.b16 %v5475
    %v5608 = vunpack.c.l.b16 %v5476
    %v5609 = vunpack.c.h.b16 %v5476
    %v5610 = vunpack.c.l.b16 %v5477
    %v5611 = vunpack.c.h.b16 %v5477
    %v5612 = vunpack.c.l.b16 %v5478
    %v5613 = vunpack.c.h.b16 %v5478
    %v5614 = vunpack.c.l.b16 %v5479
    %v5615 = vunpack.c.h.b16 %v5479
    %v5616 = vunpack.c.l.b16 %v5480
    %v5617 = vunpack.c.h.b16 %v5480
    %v5618 = vunpack.c.l.b16 %v5481
    %v5619 = vunpack.c.h.b16 %v5481
    %v5620 = vunpack.c.l.b16 %v5482
    %v5621 = vunpack.c.h.b16 %v5482
    %v5622 = vunpack.c.l.b16 %v5483
    %v5623 = vunpack.c.h.b16 %v5483
    %v5624 = vunpack.c.l.b16 %v5484
    %v5625 = vunpack.c.h.b16 %v5484
    %v5626 = vunpack.c.l.b16 %v5485
    %v5627 = vunpack.c.h.b16 %v5485
    %v5628 = vunpack.c.l.b16 %v5486
    %v5629 = vunpack.c.h.b16 %v5486
    %v5630 = vunpack.c.l.b16 %v5487
    %v5631 = vunpack.c.h.b16 %v5487
    %v5632 = vunpack.c.l.b16 %v5488
    %v5633 = vunpack.c.h.b16 %v5488
    %v5634 = vunpack.c.l.b16 %v5489
    %v5635 = vunpack.c.h.b16 %v5489
    %v5636 = vunpack.c.l.b16 %v5490
    %v5637 = vunpack.c.h.b16 %v5490
    %v5638 = vunpack.c.l.b16 %v5491
    %v5639 = vunpack.c.h.b16 %v5491
    %v5640 = vunpack.c.l.b16 %v5492
    %v5641 = vunpack.c.h.b16 %v5492
    %v5642 = vunpack.c.l.b16 %v5493
    %v5643 = vunpack.c.h.b16 %v5493
    %v5644 = vunpack.c.l.b16 %v5494
    %v5645 = vunpack.c.h.b16 %v5494
    %v5646 = vunpack.c.l.b16 %v5495
    %v5647 = vunpack.c.h.b16 %v5495
    %v5648 = vunpack.c.l.b16 %v5496
    %v5649 = vunpack.c.h.b16 %v5496
    %v5650 = vunpack.c.l.b16 %v5497
    %v5651 = vunpack.c.h.b16 %v5497
    %v5652 = vunpack.c.l.b16 %v5498
    %v5653 = vunpack.c.h.b16 %v5498
    %v5654 = vunpack.c.l.b16 %v5499
    %v5655 = vunpack.c.h.b16 %v5499
    %v5656 = vunpack.c.l.b16 %v5500
    %v5657 = vunpack.c.h.b16 %v5500
    %v5658 = vunpack.c.l.b16 %v5501
    %v5659 = vunpack.c.h.b16 %v5501
    %v5660 = vunpack.c.l.b16 %v5502
    %v5661 = vunpack.c.h.b16 %v5502
    %v5662 = vunpack.c.l.b16 %v5503
    %v5663 = vunpack.c.h.b16 %v5503
    %v5664 = vunpack.c.l.b16 %v5504
    %v5665 = vunpack.c.h.b16 %v5504
    %v5666 = vunpack.c.l.b16 %v5505
    %v5667 = vunpack.c.h.b16 %v5505
    %v5668 = vunpack.c.l.b16 %v5506
    %v5669 = vunpack.c.h.b16 %v5506
    %v5670 = vunpack.c.l.b16 %v5507
    %v5671 = vunpack.c.h.b16 %v5507
    %v5672 = vunpack.c.l.b16 %v5508
    %v5673 = vunpack.c.h.b16 %v5508
    %v5674 = vunpack.c.l.b16 %v5509
    %v5675 = vunpack.c.h.b16 %v5509
    %v5676 = vunpack.c.l.b16 %v5510
    %v5677 = vunpack.c.h.b16 %v5510
    %v5678 = vunpack.c.l.b16 %v5511
    %v5679 = vunpack.c.h.b16 %v5511
    %v5680 = vunpack.c.l.b16 %v5512
    %v5681 = vunpack.c.h.b16 %v5512
    %v5682 = vunpack.c.l.b16 %v5513
    %v5683 = vunpack.c.h.b16 %v5513
    %v5684 = vunpack.c.l.b16 %v5514
    %v5685 = vunpack.c.h.b16 %v5514
    %v5686 = vunpack.c.l.b16 %v5515
    %v5687 = vunpack.c.h.b16 %v5515
    %v5688 = vunpack.c.l.b16 %v5516
    %v5689 = vunpack.c.h.b16 %v5516
    %v5690 = vunpack.c.l.b16 %v5517
    %v5691 = vunpack.c.h.b16 %v5517
    %v5692 = vunpack.c.l.b16 %v5518
    %v5693 = vunpack.c.h.b16 %v5518
    %v5694 = vunpack.c.l.b16 %v5519
    %v5695 = vunpack.c.h.b16 %v5519
    %v5696 = vunpack.c.l.b16 %v5520
    %v5697 = vunpack.c.h.b16 %v5520
    %v5698 = vunpack.c.l.b16 %v5521
    %v5699 = vunpack.c.h.b16 %v5521
    %v5700 = vunpack.c.l.b16 %v5522
    %v5701 = vunpack.c.h.b16 %v5522
    %v5702 = vunpack.c.l.b16 %v5523
    %v5703 = vunpack.c.h.b16 %v5523
    %v5704 = vunpack.c.l.b16 %v5524
    %v5705 = vunpack.c.h.b16 %v5524
    %v5706 = vunpack.c.l.b16 %v5525
    %v5707 = vunpack.c.h.b16 %v5525
    %v5708 = vunpack.c.l.b16 %v5526
    %v5709 = vunpack.c.h.b16 %v5526
    %v5710 = vunpack.c.l.b16 %v5527
    %v5711 = vunpack.c.h.b16 %v5527
    %v5712 = vunpack.c.l.b16 %v5528
    %v5713 = vunpack.c.h.b16 %v5528
    %v5714 = vunpack.c.l.b16 %v5529
    %v5715 = vunpack.c.h.b16 %v5529
    %v5716 = vunpack.c.l.b16 %v5530
    %v5717 = vunpack.c.h.b16 %v5530
    %v5718 = vunpack.c.l.b16 %v5531
    %v5719 = vunpack.c.h.b16 %v5531
    %v5720 = vunpack.c.l.b16 %v5532
    %v5721 = vunpack.c.h.b16 %v5532
    %v5722 = vunpack.c.l.b16 %v5533
    %v5723 = vunpack.c.h.b16 %v5533
    %v5724 = vunpack.c.l.b16 %v5534
    %v5725 = vunpack.c.h.b16 %v5534
    %v5726 = vunpack.c.l.b16 %v5535
    %v5727 = vunpack.c.h.b16 %v5535
    %v5728 = vpack.c.b16 %v5604, %v5600
    %v5729 = vpack.c.b16 %v5605, %v5601
    %v5730 = vpack.c.b16 %v5606, %v5602
    %v5731 = vpack.c.b16 %v5607, %v5603
    %v5732 = vpack.c.b16 %v5612, %v5608
    %v5733 = vpack.c.b16 %v5613, %v5609
    %v5734 = vpack.c.b16 %v5614, %v5610
    %v5735 = vpack.c.b16 %v5615, %v5611
    %v5736 = vpack.c.b16 %v5620, %v5616
    %v5737 = vpack.c.b16 %v5621, %v5617
    %v5738 = vpack.c.b16 %v5622, %v5618
    %v5739 = vpack.c.b16 %v5623, %v5619
    %v5740 = vpack.c.b16 %v5628, %v5624
    %v5741 = vpack.c.b16 %v5629, %v5625
    %v5742 = vpack.c.b16 %v5630, %v5626
    %v5743 = vpack.c.b16 %v5631, %v5627
    %v5744 = vpack.c.b16 %v5636, %v5632
    %v5745 = vpack.c.b16 %v5637, %v5633
    %v5746 = vpack.c.b16 %v5638, %v5634
    %v5747 = vpack.c.b16 %v5639, %v5635
    %v5748 = vpack.c.b16 %v5644, %v5640
    %v5749 = vpack.c.b16 %v5645, %v5641
    %v5750 = vpack.c.b16 %v5646, %v5642
    %v5751 = vpack.c.b16 %v5647, %v5643
    %v5752 = vpack.c.b16 %v5652, %v5648
    %v5753 = vpack.c.b16 %v5653, %v5649
    %v5754 = vpack.c.b16 %v5654, %v5650
    %v5755 = vpack.c.b16 %v5655, %v5651
    %v5756 = vpack.c.b16 %v5660, %v5656
    %v5757 = vpack.c.b16 %v5661, %v5657
    %v5758 = vpack.c.b16 %v5662, %v5658
    %v5759 = vpack.c.b16 %v5663, %v5659
    %v5760 = vpack.c.b16 %v5668, %v5664
    %v5761 = vpack.c.b16 %v5669, %v5665
    %v5762 = vpack.c.b16 %v5670, %v5666
    %v5763 = vpack.c.b16 %v5671, %v5667
    %v5764 = vpack.c.b16 %v5676, %v5672
    %v5765 = vpack.c.b16 %v5677, %v5673
    %v5766 = vpack.c.b16 %v5678, %v5674
    %v5767 = vpack.c.b16 %v5679, %v5675
    %v5768 = vpack.c.b16 %v5684, %v5680
    %v5769 = vpack.c.b16 %v5685, %v5681
    %v5770 = vpack.c.b16 %v5686, %v5682
    %v5771 = vpack.c.b16 %v5687, %v5683
    %v5772 = vpack.c.b16 %v5692, %v5688
    %v5773 = vpack.c.b16 %v5693, %v5689
    %v5774 = vpack.c.b16 %v5694, %v5690
    %v5775 = vpack.c.b16 %v5695, %v5691
    %v5776 = vpack.c.b16 %v5700, %v5696
    %v5777 = vpack.c.b16 %v5701, %v5697
    %v5778 = vpack.c.b16 %v5702, %v5698
    %v5779 = vpack.c.b16 %v5703, %v5699
    %v5780 = vpack.c.b16 %v5708, %v5704
    %v5781 = vpack.c.b16 %v5709, %v5705
    %v5782 = vpack.c.b16 %v5710, %v5706
    %v5783 = vpack.c.b16 %v5711, %v5707
    %v5784 = vpack.c.b16 %v5716, %v5712
    %v5785 = vpack.c.b16 %v5717, %v5713
    %v5786 = vpack.c.b16 %v5718, %v5714
    %v5787 = vpack.c.b16 %v5719, %v5715
    %v5788 = vpack.c.b16 %v5724, %v5720
    %v5789 = vpack.c.b16 %v5725, %v5721
    %v5790 = vpack.c.b16 %v5726, %v5722
    %v5791 = vpack.c.b16 %v5727, %v5723
    %5856 = vmatprep.subr.bf16.mxu0 %v5729
    %5857 = vmatpush1.bf16.msra.mxu0 %v5728
    %5858 = vmatprep.subr.bf16.mxu0 %v5733
    %5859 = vmatpush1.bf16.msra.mxu0 %v5732
    %5860 = vmatprep.subr.bf16.mxu0 %v5737
    %5861 = vmatpush1.bf16.msra.mxu0 %v5736
    %5862 = vmatprep.subr.bf16.mxu0 %v5741
    %5863 = vmatpush1.bf16.msra.mxu0 %v5740
    %5864 = vmatprep.subr.bf16.mxu0 %v5745
    %5865 = vmatpush1.bf16.msra.mxu0 %v5744
    %5866 = vmatprep.subr.bf16.mxu0 %v5749
    %5867 = vmatpush1.bf16.msra.mxu0 %v5748
    %5868 = vmatprep.subr.bf16.mxu0 %v5753
    %5869 = vmatpush1.bf16.msra.mxu0 %v5752
    %5870 = vmatprep.subr.bf16.mxu0 %v5757
    %5871 = vmatpush1.bf16.msra.mxu0 %v5756
    %5872 = vmatprep.subr.bf16.mxu0 %v5761
    %5873 = vmatpush1.bf16.msra.mxu0 %v5760
    %5874 = vmatprep.subr.bf16.mxu0 %v5765
    %5875 = vmatpush1.bf16.msra.mxu0 %v5764
    %5876 = vmatprep.subr.bf16.mxu0 %v5769
    %5877 = vmatpush1.bf16.msra.mxu0 %v5768
    %5878 = vmatprep.subr.bf16.mxu0 %v5773
    %5879 = vmatpush1.bf16.msra.mxu0 %v5772
    %5880 = vmatprep.subr.bf16.mxu0 %v5777
    %5881 = vmatpush1.bf16.msra.mxu0 %v5776
    %5882 = vmatprep.subr.bf16.mxu0 %v5781
    %5883 = vmatpush1.bf16.msra.mxu0 %v5780
    %5884 = vmatprep.subr.bf16.mxu0 %v5785
    %5885 = vmatpush1.bf16.msra.mxu0 %v5784
    %5886 = vmatprep.subr.bf16.mxu0 %v5789
    %5887 = vmatpush1.bf16.msra.mxu0 %v5788
    %5888 = vmatprep.mubr.bf16.mxu0 %v4078
    %5889 = vmatmul.mubr.bf16.gmra.mrb[0].mxu0 %v4077
    %v5890 = vpop.f32.mrb[0].mxu0
    %v5891 = vadd.f32 0.0, %v5890
    %v5892 = vpop.f32.mrb[0].mxu0
    %v5893 = vadd.f32 0.0, %v5892
    %v5894 = vpop.f32.mrb[0].mxu0
    %v5895 = vadd.f32 0.0, %v5894
    %v5896 = vpop.f32.mrb[0].mxu0
    %v5897 = vadd.f32 0.0, %v5896
    %5898 = vdwg.mxu0
    %5899 = vmatprep.subr.bf16.mxu0 %v5731
    %5900 = vmatpush1.bf16.msra.mxu0 %v5730
    %5901 = vmatprep.subr.bf16.mxu0 %v5735
    %5902 = vmatpush1.bf16.msra.mxu0 %v5734
    %5903 = vmatprep.subr.bf16.mxu0 %v5739
    %5904 = vmatpush1.bf16.msra.mxu0 %v5738
    %5905 = vmatprep.subr.bf16.mxu0 %v5743
    %5906 = vmatpush1.bf16.msra.mxu0 %v5742
    %5907 = vmatprep.subr.bf16.mxu0 %v5747
    %5908 = vmatpush1.bf16.msra.mxu0 %v5746
    %5909 = vmatprep.subr.bf16.mxu0 %v5751
    %5910 = vmatpush1.bf16.msra.mxu0 %v5750
    %5911 = vmatprep.subr.bf16.mxu0 %v5755
    %5912 = vmatpush1.bf16.msra.mxu0 %v5754
    %5913 = vmatprep.subr.bf16.mxu0 %v5759
    %5914 = vmatpush1.bf16.msra.mxu0 %v5758
    %5915 = vmatprep.subr.bf16.mxu0 %v5763
    %5916 = vmatpush1.bf16.msra.mxu0 %v5762
    %5917 = vmatprep.subr.bf16.mxu0 %v5767
    %5918 = vmatpush1.bf16.msra.mxu0 %v5766
    %5919 = vmatprep.subr.bf16.mxu0 %v5771
    %5920 = vmatpush1.bf16.msra.mxu0 %v5770
    %5921 = vmatprep.subr.bf16.mxu0 %v5775
    %5922 = vmatpush1.bf16.msra.mxu0 %v5774
    %5923 = vmatprep.subr.bf16.mxu0 %v5779
    %5924 = vmatpush1.bf16.msra.mxu0 %v5778
    %5925 = vmatprep.subr.bf16.mxu0 %v5783
    %5926 = vmatpush1.bf16.msra.mxu0 %v5782
    %5927 = vmatprep.subr.bf16.mxu0 %v5787
    %5928 = vmatpush1.bf16.msra.mxu0 %v5786
    %5929 = vmatprep.subr.bf16.mxu0 %v5791
    %5930 = vmatpush1.bf16.msra.mxu0 %v5790
    %5931 = vmatprep.mubr.bf16.mxu0 %v4078
    %5932 = vmatmul.mubr.bf16.gmra.mrb[0].mxu0 %v4077
    %v5933 = vpop.f32.mrb[0].mxu0
    %v5934 = vadd.f32 0.0, %v5933
    %v5935 = vpop.f32.mrb[0].mxu0
    %v5936 = vadd.f32 0.0, %v5935
    %v5937 = vpop.f32.mrb[0].mxu0
    %v5938 = vadd.f32 0.0, %v5937
    %v5939 = vpop.f32.mrb[0].mxu0
    %v5940 = vadd.f32 0.0, %v5939
    %5941 = vdwg.mxu0
    %v6006 = vunpack.c.l.b16 %v5407
    %v6007 = vunpack.c.h.b16 %v5407
    %v6008 = vunpack.c.l.b16 %v5408
    %v6009 = vunpack.c.h.b16 %v5408
    %v6010 = vunpack.c.l.b16 %v5409
    %v6011 = vunpack.c.h.b16 %v5409
    %v6012 = vunpack.c.l.b16 %v5410
    %v6013 = vunpack.c.h.b16 %v5410
    %v6014 = vunpack.c.l.b16 %v5411
    %v6015 = vunpack.c.h.b16 %v5411
    %v6016 = vunpack.c.l.b16 %v5412
    %v6017 = vunpack.c.h.b16 %v5412
    %v6018 = vunpack.c.l.b16 %v5413
    %v6019 = vunpack.c.h.b16 %v5413
    %v6020 = vunpack.c.l.b16 %v5414
    %v6021 = vunpack.c.h.b16 %v5414
    %v6022 = vunpack.c.l.b16 %v5415
    %v6023 = vunpack.c.h.b16 %v5415
    %v6024 = vunpack.c.l.b16 %v5416
    %v6025 = vunpack.c.h.b16 %v5416
    %v6026 = vunpack.c.l.b16 %v5417
    %v6027 = vunpack.c.h.b16 %v5417
    %v6028 = vunpack.c.l.b16 %v5418
    %v6029 = vunpack.c.h.b16 %v5418
    %v6030 = vunpack.c.l.b16 %v5419
    %v6031 = vunpack.c.h.b16 %v5419
    %v6032 = vunpack.c.l.b16 %v5420
    %v6033 = vunpack.c.h.b16 %v5420
    %v6034 = vunpack.c.l.b16 %v5421
    %v6035 = vunpack.c.h.b16 %v5421
    %v6036 = vunpack.c.l.b16 %v5422
    %v6037 = vunpack.c.h.b16 %v5422
    %v6038 = vunpack.c.l.b16 %v5423
    %v6039 = vunpack.c.h.b16 %v5423
    %v6040 = vunpack.c.l.b16 %v5424
    %v6041 = vunpack.c.h.b16 %v5424
    %v6042 = vunpack.c.l.b16 %v5425
    %v6043 = vunpack.c.h.b16 %v5425
    %v6044 = vunpack.c.l.b16 %v5426
    %v6045 = vunpack.c.h.b16 %v5426
    %v6046 = vunpack.c.l.b16 %v5427
    %v6047 = vunpack.c.h.b16 %v5427
    %v6048 = vunpack.c.l.b16 %v5428
    %v6049 = vunpack.c.h.b16 %v5428
    %v6050 = vunpack.c.l.b16 %v5429
    %v6051 = vunpack.c.h.b16 %v5429
    %v6052 = vunpack.c.l.b16 %v5430
    %v6053 = vunpack.c.h.b16 %v5430
    %v6054 = vunpack.c.l.b16 %v5431
    %v6055 = vunpack.c.h.b16 %v5431
    %v6056 = vunpack.c.l.b16 %v5432
    %v6057 = vunpack.c.h.b16 %v5432
    %v6058 = vunpack.c.l.b16 %v5433
    %v6059 = vunpack.c.h.b16 %v5433
    %v6060 = vunpack.c.l.b16 %v5434
    %v6061 = vunpack.c.h.b16 %v5434
    %v6062 = vunpack.c.l.b16 %v5435
    %v6063 = vunpack.c.h.b16 %v5435
    %v6064 = vunpack.c.l.b16 %v5436
    %v6065 = vunpack.c.h.b16 %v5436
    %v6066 = vunpack.c.l.b16 %v5437
    %v6067 = vunpack.c.h.b16 %v5437
    %v6068 = vunpack.c.l.b16 %v5438
    %v6069 = vunpack.c.h.b16 %v5438
    %v6070 = vunpack.c.l.b16 %v5439
    %v6071 = vunpack.c.h.b16 %v5439
    %v6072 = vunpack.c.l.b16 %v5440
    %v6073 = vunpack.c.h.b16 %v5440
    %v6074 = vunpack.c.l.b16 %v5441
    %v6075 = vunpack.c.h.b16 %v5441
    %v6076 = vunpack.c.l.b16 %v5442
    %v6077 = vunpack.c.h.b16 %v5442
    %v6078 = vunpack.c.l.b16 %v5443
    %v6079 = vunpack.c.h.b16 %v5443
    %v6080 = vunpack.c.l.b16 %v5444
    %v6081 = vunpack.c.h.b16 %v5444
    %v6082 = vunpack.c.l.b16 %v5445
    %v6083 = vunpack.c.h.b16 %v5445
    %v6084 = vunpack.c.l.b16 %v5446
    %v6085 = vunpack.c.h.b16 %v5446
    %v6086 = vunpack.c.l.b16 %v5447
    %v6087 = vunpack.c.h.b16 %v5447
    %v6088 = vunpack.c.l.b16 %v5448
    %v6089 = vunpack.c.h.b16 %v5448
    %v6090 = vunpack.c.l.b16 %v5449
    %v6091 = vunpack.c.h.b16 %v5449
    %v6092 = vunpack.c.l.b16 %v5450
    %v6093 = vunpack.c.h.b16 %v5450
    %v6094 = vunpack.c.l.b16 %v5451
    %v6095 = vunpack.c.h.b16 %v5451
    %v6096 = vunpack.c.l.b16 %v5452
    %v6097 = vunpack.c.h.b16 %v5452
    %v6098 = vunpack.c.l.b16 %v5453
    %v6099 = vunpack.c.h.b16 %v5453
    %v6100 = vunpack.c.l.b16 %v5454
    %v6101 = vunpack.c.h.b16 %v5454
    %v6102 = vunpack.c.l.b16 %v5455
    %v6103 = vunpack.c.h.b16 %v5455
    %v6104 = vunpack.c.l.b16 %v5456
    %v6105 = vunpack.c.h.b16 %v5456
    %v6106 = vunpack.c.l.b16 %v5457
    %v6107 = vunpack.c.h.b16 %v5457
    %v6108 = vunpack.c.l.b16 %v5458
    %v6109 = vunpack.c.h.b16 %v5458
    %v6110 = vunpack.c.l.b16 %v5459
    %v6111 = vunpack.c.h.b16 %v5459
    %v6112 = vunpack.c.l.b16 %v5460
    %v6113 = vunpack.c.h.b16 %v5460
    %v6114 = vunpack.c.l.b16 %v5461
    %v6115 = vunpack.c.h.b16 %v5461
    %v6116 = vunpack.c.l.b16 %v5462
    %v6117 = vunpack.c.h.b16 %v5462
    %v6118 = vunpack.c.l.b16 %v5463
    %v6119 = vunpack.c.h.b16 %v5463
    %v6120 = vunpack.c.l.b16 %v5464
    %v6121 = vunpack.c.h.b16 %v5464
    %v6122 = vunpack.c.l.b16 %v5465
    %v6123 = vunpack.c.h.b16 %v5465
    %v6124 = vunpack.c.l.b16 %v5466
    %v6125 = vunpack.c.h.b16 %v5466
    %v6126 = vunpack.c.l.b16 %v5467
    %v6127 = vunpack.c.h.b16 %v5467
    %v6128 = vunpack.c.l.b16 %v5468
    %v6129 = vunpack.c.h.b16 %v5468
    %v6130 = vunpack.c.l.b16 %v5469
    %v6131 = vunpack.c.h.b16 %v5469
    %v6132 = vunpack.c.l.b16 %v5470
    %v6133 = vunpack.c.h.b16 %v5470
    %v6134 = vpack.c.b16 %v6010, %v6006
    %v6135 = vpack.c.b16 %v6011, %v6007
    %v6136 = vpack.c.b16 %v6012, %v6008
    %v6137 = vpack.c.b16 %v6013, %v6009
    %v6138 = vpack.c.b16 %v6018, %v6014
    %v6139 = vpack.c.b16 %v6019, %v6015
    %v6140 = vpack.c.b16 %v6020, %v6016
    %v6141 = vpack.c.b16 %v6021, %v6017
    %v6142 = vpack.c.b16 %v6026, %v6022
    %v6143 = vpack.c.b16 %v6027, %v6023
    %v6144 = vpack.c.b16 %v6028, %v6024
    %v6145 = vpack.c.b16 %v6029, %v6025
    %v6146 = vpack.c.b16 %v6034, %v6030
    %v6147 = vpack.c.b16 %v6035, %v6031
    %v6148 = vpack.c.b16 %v6036, %v6032
    %v6149 = vpack.c.b16 %v6037, %v6033
    %v6150 = vpack.c.b16 %v6042, %v6038
    %v6151 = vpack.c.b16 %v6043, %v6039
    %v6152 = vpack.c.b16 %v6044, %v6040
    %v6153 = vpack.c.b16 %v6045, %v6041
    %v6154 = vpack.c.b16 %v6050, %v6046
    %v6155 = vpack.c.b16 %v6051, %v6047
    %v6156 = vpack.c.b16 %v6052, %v6048
    %v6157 = vpack.c.b16 %v6053, %v6049
    %v6158 = vpack.c.b16 %v6058, %v6054
    %v6159 = vpack.c.b16 %v6059, %v6055
    %v6160 = vpack.c.b16 %v6060, %v6056
    %v6161 = vpack.c.b16 %v6061, %v6057
    %v6162 = vpack.c.b16 %v6066, %v6062
    %v6163 = vpack.c.b16 %v6067, %v6063
    %v6164 = vpack.c.b16 %v6068, %v6064
    %v6165 = vpack.c.b16 %v6069, %v6065
    %v6166 = vpack.c.b16 %v6074, %v6070
    %v6167 = vpack.c.b16 %v6075, %v6071
    %v6168 = vpack.c.b16 %v6076, %v6072
    %v6169 = vpack.c.b16 %v6077, %v6073
    %v6170 = vpack.c.b16 %v6082, %v6078
    %v6171 = vpack.c.b16 %v6083, %v6079
    %v6172 = vpack.c.b16 %v6084, %v6080
    %v6173 = vpack.c.b16 %v6085, %v6081
    %v6174 = vpack.c.b16 %v6090, %v6086
    %v6175 = vpack.c.b16 %v6091, %v6087
    %v6176 = vpack.c.b16 %v6092, %v6088
    %v6177 = vpack.c.b16 %v6093, %v6089
    %v6178 = vpack.c.b16 %v6098, %v6094
    %v6179 = vpack.c.b16 %v6099, %v6095
    %v6180 = vpack.c.b16 %v6100, %v6096
    %v6181 = vpack.c.b16 %v6101, %v6097
    %v6182 = vpack.c.b16 %v6106, %v6102
    %v6183 = vpack.c.b16 %v6107, %v6103
    %v6184 = vpack.c.b16 %v6108, %v6104
    %v6185 = vpack.c.b16 %v6109, %v6105
    %v6186 = vpack.c.b16 %v6114, %v6110
    %v6187 = vpack.c.b16 %v6115, %v6111
    %v6188 = vpack.c.b16 %v6116, %v6112
    %v6189 = vpack.c.b16 %v6117, %v6113
    %v6190 = vpack.c.b16 %v6122, %v6118
    %v6191 = vpack.c.b16 %v6123, %v6119
    %v6192 = vpack.c.b16 %v6124, %v6120
    %v6193 = vpack.c.b16 %v6125, %v6121
    %v6194 = vpack.c.b16 %v6130, %v6126
    %v6195 = vpack.c.b16 %v6131, %v6127
    %v6196 = vpack.c.b16 %v6132, %v6128
    %v6197 = vpack.c.b16 %v6133, %v6129
    %6262 = vmatprep.subr.bf16.mxu0 %v6135
    %6263 = vmatpush1.bf16.msra.mxu0 %v6134
    %6264 = vmatprep.subr.bf16.mxu0 %v6139
    %6265 = vmatpush1.bf16.msra.mxu0 %v6138
    %6266 = vmatprep.subr.bf16.mxu0 %v6143
    %6267 = vmatpush1.bf16.msra.mxu0 %v6142
    %6268 = vmatprep.subr.bf16.mxu0 %v6147
    %6269 = vmatpush1.bf16.msra.mxu0 %v6146
    %6270 = vmatprep.subr.bf16.mxu0 %v6151
    %6271 = vmatpush1.bf16.msra.mxu0 %v6150
    %6272 = vmatprep.subr.bf16.mxu0 %v6155
    %6273 = vmatpush1.bf16.msra.mxu0 %v6154
    %6274 = vmatprep.subr.bf16.mxu0 %v6159
    %6275 = vmatpush1.bf16.msra.mxu0 %v6158
    %6276 = vmatprep.subr.bf16.mxu0 %v6163
    %6277 = vmatpush1.bf16.msra.mxu0 %v6162
    %6278 = vmatprep.subr.bf16.mxu0 %v6167
    %6279 = vmatpush1.bf16.msra.mxu0 %v6166
    %6280 = vmatprep.subr.bf16.mxu0 %v6171
    %6281 = vmatpush1.bf16.msra.mxu0 %v6170
    %6282 = vmatprep.subr.bf16.mxu0 %v6175
    %6283 = vmatpush1.bf16.msra.mxu0 %v6174
    %6284 = vmatprep.subr.bf16.mxu0 %v6179
    %6285 = vmatpush1.bf16.msra.mxu0 %v6178
    %6286 = vmatprep.subr.bf16.mxu0 %v6183
    %6287 = vmatpush1.bf16.msra.mxu0 %v6182
    %6288 = vmatprep.subr.bf16.mxu0 %v6187
    %6289 = vmatpush1.bf16.msra.mxu0 %v6186
    %6290 = vmatprep.subr.bf16.mxu0 %v6191
    %6291 = vmatpush1.bf16.msra.mxu0 %v6190
    %6292 = vmatprep.subr.bf16.mxu0 %v6195
    %6293 = vmatpush1.bf16.msra.mxu0 %v6194
    %6294 = vmatprep.mubr.bf16.mxu0 %v4076
    %6295 = vmatmul.mubr.bf16.gmra.mrb[0].mxu0 %v4075
    %v6296 = vpop.f32.mrb[0].mxu0
    %v6297 = vadd.f32 %v5891, %v6296
    %v6298 = vpop.f32.mrb[0].mxu0
    %v6299 = vadd.f32 %v5893, %v6298
    %v6300 = vpop.f32.mrb[0].mxu0
    %v6301 = vadd.f32 %v5895, %v6300
    %v6302 = vpop.f32.mrb[0].mxu0
    %v6303 = vadd.f32 %v5897, %v6302
    %6304 = vdwg.mxu0
    %6305 = vmatprep.subr.bf16.mxu0 %v6137
    %6306 = vmatpush1.bf16.msra.mxu0 %v6136
    %6307 = vmatprep.subr.bf16.mxu0 %v6141
    %6308 = vmatpush1.bf16.msra.mxu0 %v6140
    %6309 = vmatprep.subr.bf16.mxu0 %v6145
    %6310 = vmatpush1.bf16.msra.mxu0 %v6144
    %6311 = vmatprep.subr.bf16.mxu0 %v6149
    %6312 = vmatpush1.bf16.msra.mxu0 %v6148
    %6313 = vmatprep.subr.bf16.mxu0 %v6153
    %6314 = vmatpush1.bf16.msra.mxu0 %v6152
    %6315 = vmatprep.subr.bf16.mxu0 %v6157
    %6316 = vmatpush1.bf16.msra.mxu0 %v6156
    %6317 = vmatprep.subr.bf16.mxu0 %v6161
    %6318 = vmatpush1.bf16.msra.mxu0 %v6160
    %6319 = vmatprep.subr.bf16.mxu0 %v6165
    %6320 = vmatpush1.bf16.msra.mxu0 %v6164
    %6321 = vmatprep.subr.bf16.mxu0 %v6169
    %6322 = vmatpush1.bf16.msra.mxu0 %v6168
    %6323 = vmatprep.subr.bf16.mxu0 %v6173
    %6324 = vmatpush1.bf16.msra.mxu0 %v6172
    %6325 = vmatprep.subr.bf16.mxu0 %v6177
    %6326 = vmatpush1.bf16.msra.mxu0 %v6176
    %6327 = vmatprep.subr.bf16.mxu0 %v6181
    %6328 = vmatpush1.bf16.msra.mxu0 %v6180
    %6329 = vmatprep.subr.bf16.mxu0 %v6185
    %6330 = vmatpush1.bf16.msra.mxu0 %v6184
    %6331 = vmatprep.subr.bf16.mxu0 %v6189
    %6332 = vmatpush1.bf16.msra.mxu0 %v6188
    %6333 = vmatprep.subr.bf16.mxu0 %v6193
    %6334 = vmatpush1.bf16.msra.mxu0 %v6192
    %6335 = vmatprep.subr.bf16.mxu0 %v6197
    %6336 = vmatpush1.bf16.msra.mxu0 %v6196
    %6337 = vmatprep.mubr.bf16.mxu0 %v4076
    %6338 = vmatmul.mubr.bf16.gmra.mrb[0].mxu0 %v4075
    %v6339 = vpop.f32.mrb[0].mxu0
    %v6340 = vadd.f32 %v5934, %v6339
    %v6341 = vpop.f32.mrb[0].mxu0
    %v6342 = vadd.f32 %v5936, %v6341
    %v6343 = vpop.f32.mrb[0].mxu0
    %v6344 = vadd.f32 %v5938, %v6343
    %v6345 = vpop.f32.mrb[0].mxu0
    %v6346 = vadd.f32 %v5940, %v6345
    %6347 = vdwg.mxu0
    %v6348 = vld [vmem:[%s15] sm:$0xf]
    %v6350 = vlaneseq
    %v6351 = vshrl.u32 %v6350, 7
    %v6352 = vsub.s32 0, %v6351
    %v6353 = vrot.slane %v6348, %v6352
    %v6354 = vlaneseq
    %v6355 = vshrl.u32 %v6354, 7
    %v6356 = vsub.s32 1, %v6355
    %v6357 = vrot.slane %v6348, %v6356
    %v6358 = vlaneseq
    %v6359 = vshrl.u32 %v6358, 7
    %v6360 = vsub.s32 2, %v6359
    %v6361 = vrot.slane %v6348, %v6360
    %v6362 = vlaneseq
    %v6363 = vshrl.u32 %v6362, 7
    %v6364 = vsub.s32 3, %v6363
    %v6365 = vrot.slane %v6348, %v6364
    %v6370 = vadd.f32 %v6297, %v6353
    %v6371 = vadd.f32 %v6299, %v6357
    %v6372 = vadd.f32 %v6340, %v6361
    %v6373 = vadd.f32 %v6342, %v6365
    %v6374 = vadd.f32 %v6301, %v6353
    %v6375 = vadd.f32 %v6303, %v6357
    %v6376 = vadd.f32 %v6344, %v6361
    %v6377 = vadd.f32 %v6346, %v6365
    %v6378 = vmax.f32 %v6370, 0.0
    %v6379 = vmax.f32 %v6371, 0.0
    %v6380 = vmax.f32 %v6372, 0.0
    %v6381 = vmax.f32 %v6373, 0.0
    %v6382 = vmax.f32 %v6374, 0.0
    %v6383 = vmax.f32 %v6375, 0.0
    %v6384 = vmax.f32 %v6376, 0.0
    %v6385 = vmax.f32 %v6377, 0.0
    %v6386 = vpack.c.bf16 %v6382, %v6378
    %v6387 = vpack.c.bf16 %v6383, %v6379
    %v6388 = vpack.c.bf16 %v6384, %v6380
    %v6389 = vpack.c.bf16 %v6385, %v6381
    %v6390 = vld [vmem:[#allocation10] sm:$0xff]
    %v6391 = vld [vmem:[#allocation10 + $0x8] sm:$0xff]
    %v6392 = vld [vmem:[#allocation10 + $0x10] sm:$0xff]
    %v6393 = vld [vmem:[#allocation10 + $0x18] sm:$0xff]
    %v6394 = vld [vmem:[#allocation10 + $0x20] sm:$0xff]
    %v6395 = vld [vmem:[#allocation10 + $0x28] sm:$0xff]
    %v6396 = vld [vmem:[#allocation10 + $0x30] sm:$0xff]
    %v6397 = vld [vmem:[#allocation10 + $0x38] sm:$0xff]
    %v6398 = vld [vmem:[#allocation10 + $0x40] sm:$0xff]
    %v6399 = vld [vmem:[#allocation10 + $0x48] sm:$0xff]
    %v6400 = vld [vmem:[#allocation10 + $0x50] sm:$0xff]
    %v6401 = vld [vmem:[#allocation10 + $0x58] sm:$0xff]
    %v6402 = vld [vmem:[#allocation10 + $0x60] sm:$0xff]
    %v6403 = vld [vmem:[#allocation10 + $0x68] sm:$0xff]
    %v6404 = vld [vmem:[#allocation10 + $0x70] sm:$0xff]
    %v6405 = vld [vmem:[#allocation10 + $0x78] sm:$0xff]
    %v6406 = vld [vmem:[#allocation10 + $0x80] sm:$0xff]
    %v6407 = vld [vmem:[#allocation10 + $0x88] sm:$0xff]
    %v6408 = vld [vmem:[#allocation10 + $0x90] sm:$0xff]
    %v6409 = vld [vmem:[#allocation10 + $0x98] sm:$0xff]
    %v6410 = vld [vmem:[#allocation10 + $0xa0] sm:$0xff]
    %v6411 = vld [vmem:[#allocation10 + $0xa8] sm:$0xff]
    %v6412 = vld [vmem:[#allocation10 + $0xb0] sm:$0xff]
    %v6413 = vld [vmem:[#allocation10 + $0xb8] sm:$0xff]
    %v6414 = vld [vmem:[#allocation10 + $0xc0] sm:$0xff]
    %v6415 = vld [vmem:[#allocation10 + $0xc8] sm:$0xff]
    %v6416 = vld [vmem:[#allocation10 + $0xd0] sm:$0xff]
    %v6417 = vld [vmem:[#allocation10 + $0xd8] sm:$0xff]
    %v6418 = vld [vmem:[#allocation10 + $0xe0] sm:$0xff]
    %v6419 = vld [vmem:[#allocation10 + $0xe8] sm:$0xff]
    %v6420 = vld [vmem:[#allocation10 + $0xf0] sm:$0xff]
    %v6421 = vld [vmem:[#allocation10 + $0xf8] sm:$0xff]
    %v6422 = vld [vmem:[#allocation10 + $0x100] sm:$0xff]
    %v6423 = vld [vmem:[#allocation10 + $0x108] sm:$0xff]
    %v6424 = vld [vmem:[#allocation10 + $0x110] sm:$0xff]
    %v6425 = vld [vmem:[#allocation10 + $0x118] sm:$0xff]
    %v6426 = vld [vmem:[#allocation10 + $0x120] sm:$0xff]
    %v6427 = vld [vmem:[#allocation10 + $0x128] sm:$0xff]
    %v6428 = vld [vmem:[#allocation10 + $0x130] sm:$0xff]
    %v6429 = vld [vmem:[#allocation10 + $0x138] sm:$0xff]
    %v6430 = vld [vmem:[#allocation10 + $0x140] sm:$0xff]
    %v6431 = vld [vmem:[#allocation10 + $0x148] sm:$0xff]
    %v6432 = vld [vmem:[#allocation10 + $0x150] sm:$0xff]
    %v6433 = vld [vmem:[#allocation10 + $0x158] sm:$0xff]
    %v6434 = vld [vmem:[#allocation10 + $0x160] sm:$0xff]
    %v6435 = vld [vmem:[#allocation10 + $0x168] sm:$0xff]
    %v6436 = vld [vmem:[#allocation10 + $0x170] sm:$0xff]
    %v6437 = vld [vmem:[#allocation10 + $0x178] sm:$0xff]
    %v6438 = vld [vmem:[#allocation10 + $0x180] sm:$0xff]
    %v6439 = vld [vmem:[#allocation10 + $0x188] sm:$0xff]
    %v6440 = vld [vmem:[#allocation10 + $0x190] sm:$0xff]
    %v6441 = vld [vmem:[#allocation10 + $0x198] sm:$0xff]
    %v6442 = vld [vmem:[#allocation10 + $0x1a0] sm:$0xff]
    %v6443 = vld [vmem:[#allocation10 + $0x1a8] sm:$0xff]
    %v6444 = vld [vmem:[#allocation10 + $0x1b0] sm:$0xff]
    %v6445 = vld [vmem:[#allocation10 + $0x1b8] sm:$0xff]
    %v6446 = vld [vmem:[#allocation10 + $0x1c0] sm:$0xff]
    %v6447 = vld [vmem:[#allocation10 + $0x1c8] sm:$0xff]
    %v6448 = vld [vmem:[#allocation10 + $0x1d0] sm:$0xff]
    %v6449 = vld [vmem:[#allocation10 + $0x1d8] sm:$0xff]
    %v6450 = vld [vmem:[#allocation10 + $0x1e0] sm:$0xff]
    %v6451 = vld [vmem:[#allocation10 + $0x1e8] sm:$0xff]
    %v6452 = vld [vmem:[#allocation10 + $0x1f0] sm:$0xff]
    %v6453 = vld [vmem:[#allocation10 + $0x1f8] sm:$0xff]
    %v6454 = vld [vmem:[%s17] sm:$0x3]
    %v6456 = vlaneseq
    %v6457 = vshrl.u32 %v6456, 7
    %v6458 = vsub.s32 0, %v6457
    %v6459 = vrot.slane %v6454, %v6458
    %v6460 = vlaneseq
    %v6461 = vshrl.u32 %v6460, 7
    %v6462 = vsub.s32 1, %v6461
    %v6463 = vrot.slane %v6454, %v6462
    %v6530 = vunpack.c.l.b16 %v6390
    %v6531 = vunpack.c.h.b16 %v6390
    %v6532 = vunpack.c.l.b16 %v6391
    %v6533 = vunpack.c.h.b16 %v6391
    %v6534 = vunpack.c.l.b16 %v6392
    %v6535 = vunpack.c.h.b16 %v6392
    %v6536 = vunpack.c.l.b16 %v6393
    %v6537 = vunpack.c.h.b16 %v6393
    %v6538 = vunpack.c.l.b16 %v6394
    %v6539 = vunpack.c.h.b16 %v6394
    %v6540 = vunpack.c.l.b16 %v6395
    %v6541 = vunpack.c.h.b16 %v6395
    %v6542 = vunpack.c.l.b16 %v6396
    %v6543 = vunpack.c.h.b16 %v6396
    %v6544 = vunpack.c.l.b16 %v6397
    %v6545 = vunpack.c.h.b16 %v6397
    %v6546 = vunpack.c.l.b16 %v6398
    %v6547 = vunpack.c.h.b16 %v6398
    %v6548 = vunpack.c.l.b16 %v6399
    %v6549 = vunpack.c.h.b16 %v6399
    %v6550 = vunpack.c.l.b16 %v6400
    %v6551 = vunpack.c.h.b16 %v6400
    %v6552 = vunpack.c.l.b16 %v6401
    %v6553 = vunpack.c.h.b16 %v6401
    %v6554 = vunpack.c.l.b16 %v6402
    %v6555 = vunpack.c.h.b16 %v6402
    %v6556 = vunpack.c.l.b16 %v6403
    %v6557 = vunpack.c.h.b16 %v6403
    %v6558 = vunpack.c.l.b16 %v6404
    %v6559 = vunpack.c.h.b16 %v6404
    %v6560 = vunpack.c.l.b16 %v6405
    %v6561 = vunpack.c.h.b16 %v6405
    %v6562 = vunpack.c.l.b16 %v6406
    %v6563 = vunpack.c.h.b16 %v6406
    %v6564 = vunpack.c.l.b16 %v6407
    %v6565 = vunpack.c.h.b16 %v6407
    %v6566 = vunpack.c.l.b16 %v6408
    %v6567 = vunpack.c.h.b16 %v6408
    %v6568 = vunpack.c.l.b16 %v6409
    %v6569 = vunpack.c.h.b16 %v6409
    %v6570 = vunpack.c.l.b16 %v6410
    %v6571 = vunpack.c.h.b16 %v6410
    %v6572 = vunpack.c.l.b16 %v6411
    %v6573 = vunpack.c.h.b16 %v6411
    %v6574 = vunpack.c.l.b16 %v6412
    %v6575 = vunpack.c.h.b16 %v6412
    %v6576 = vunpack.c.l.b16 %v6413
    %v6577 = vunpack.c.h.b16 %v6413
    %v6578 = vunpack.c.l.b16 %v6414
    %v6579 = vunpack.c.h.b16 %v6414
    %v6580 = vunpack.c.l.b16 %v6415
    %v6581 = vunpack.c.h.b16 %v6415
    %v6582 = vunpack.c.l.b16 %v6416
    %v6583 = vunpack.c.h.b16 %v6416
    %v6584 = vunpack.c.l.b16 %v6417
    %v6585 = vunpack.c.h.b16 %v6417
    %v6586 = vunpack.c.l.b16 %v6418
    %v6587 = vunpack.c.h.b16 %v6418
    %v6588 = vunpack.c.l.b16 %v6419
    %v6589 = vunpack.c.h.b16 %v6419
    %v6590 = vunpack.c.l.b16 %v6420
    %v6591 = vunpack.c.h.b16 %v6420
    %v6592 = vunpack.c.l.b16 %v6421
    %v6593 = vunpack.c.h.b16 %v6421
    %v6594 = vunpack.c.l.b16 %v6422
    %v6595 = vunpack.c.h.b16 %v6422
    %v6596 = vunpack.c.l.b16 %v6423
    %v6597 = vunpack.c.h.b16 %v6423
    %v6598 = vunpack.c.l.b16 %v6424
    %v6599 = vunpack.c.h.b16 %v6424
    %v6600 = vunpack.c.l.b16 %v6425
    %v6601 = vunpack.c.h.b16 %v6425
    %v6602 = vunpack.c.l.b16 %v6426
    %v6603 = vunpack.c.h.b16 %v6426
    %v6604 = vunpack.c.l.b16 %v6427
    %v6605 = vunpack.c.h.b16 %v6427
    %v6606 = vunpack.c.l.b16 %v6428
    %v6607 = vunpack.c.h.b16 %v6428
    %v6608 = vunpack.c.l.b16 %v6429
    %v6609 = vunpack.c.h.b16 %v6429
    %v6610 = vunpack.c.l.b16 %v6430
    %v6611 = vunpack.c.h.b16 %v6430
    %v6612 = vunpack.c.l.b16 %v6431
    %v6613 = vunpack.c.h.b16 %v6431
    %v6614 = vunpack.c.l.b16 %v6432
    %v6615 = vunpack.c.h.b16 %v6432
    %v6616 = vunpack.c.l.b16 %v6433
    %v6617 = vunpack.c.h.b16 %v6433
    %v6618 = vunpack.c.l.b16 %v6434
    %v6619 = vunpack.c.h.b16 %v6434
    %v6620 = vunpack.c.l.b16 %v6435
    %v6621 = vunpack.c.h.b16 %v6435
    %v6622 = vunpack.c.l.b16 %v6436
    %v6623 = vunpack.c.h.b16 %v6436
    %v6624 = vunpack.c.l.b16 %v6437
    %v6625 = vunpack.c.h.b16 %v6437
    %v6626 = vunpack.c.l.b16 %v6438
    %v6627 = vunpack.c.h.b16 %v6438
    %v6628 = vunpack.c.l.b16 %v6439
    %v6629 = vunpack.c.h.b16 %v6439
    %v6630 = vunpack.c.l.b16 %v6440
    %v6631 = vunpack.c.h.b16 %v6440
    %v6632 = vunpack.c.l.b16 %v6441
    %v6633 = vunpack.c.h.b16 %v6441
    %v6634 = vunpack.c.l.b16 %v6442
    %v6635 = vunpack.c.h.b16 %v6442
    %v6636 = vunpack.c.l.b16 %v6443
    %v6637 = vunpack.c.h.b16 %v6443
    %v6638 = vunpack.c.l.b16 %v6444
    %v6639 = vunpack.c.h.b16 %v6444
    %v6640 = vunpack.c.l.b16 %v6445
    %v6641 = vunpack.c.h.b16 %v6445
    %v6642 = vunpack.c.l.b16 %v6446
    %v6643 = vunpack.c.h.b16 %v6446
    %v6644 = vunpack.c.l.b16 %v6447
    %v6645 = vunpack.c.h.b16 %v6447
    %v6646 = vunpack.c.l.b16 %v6448
    %v6647 = vunpack.c.h.b16 %v6448
    %v6648 = vunpack.c.l.b16 %v6449
    %v6649 = vunpack.c.h.b16 %v6449
    %v6650 = vunpack.c.l.b16 %v6450
    %v6651 = vunpack.c.h.b16 %v6450
    %v6652 = vunpack.c.l.b16 %v6451
    %v6653 = vunpack.c.h.b16 %v6451
    %v6654 = vunpack.c.l.b16 %v6452
    %v6655 = vunpack.c.h.b16 %v6452
    %v6656 = vunpack.c.l.b16 %v6453
    %v6657 = vunpack.c.h.b16 %v6453
    %v6658 = vpack.c.b16 %v6532, %v6530
    %v6659 = vpack.c.b16 %v6533, %v6531
    %v6660 = vpack.c.b16 %v6536, %v6534
    %v6661 = vpack.c.b16 %v6537, %v6535
    %v6662 = vpack.c.b16 %v6540, %v6538
    %v6663 = vpack.c.b16 %v6541, %v6539
    %v6664 = vpack.c.b16 %v6544, %v6542
    %v6665 = vpack.c.b16 %v6545, %v6543
    %v6666 = vpack.c.b16 %v6548, %v6546
    %v6667 = vpack.c.b16 %v6549, %v6547
    %v6668 = vpack.c.b16 %v6552, %v6550
    %v6669 = vpack.c.b16 %v6553, %v6551
    %v6670 = vpack.c.b16 %v6556, %v6554
    %v6671 = vpack.c.b16 %v6557, %v6555
    %v6672 = vpack.c.b16 %v6560, %v6558
    %v6673 = vpack.c.b16 %v6561, %v6559
    %v6674 = vpack.c.b16 %v6564, %v6562
    %v6675 = vpack.c.b16 %v6565, %v6563
    %v6676 = vpack.c.b16 %v6568, %v6566
    %v6677 = vpack.c.b16 %v6569, %v6567
    %v6678 = vpack.c.b16 %v6572, %v6570
    %v6679 = vpack.c.b16 %v6573, %v6571
    %v6680 = vpack.c.b16 %v6576, %v6574
    %v6681 = vpack.c.b16 %v6577, %v6575
    %v6682 = vpack.c.b16 %v6580, %v6578
    %v6683 = vpack.c.b16 %v6581, %v6579
    %v6684 = vpack.c.b16 %v6584, %v6582
    %v6685 = vpack.c.b16 %v6585, %v6583
    %v6686 = vpack.c.b16 %v6588, %v6586
    %v6687 = vpack.c.b16 %v6589, %v6587
    %v6688 = vpack.c.b16 %v6592, %v6590
    %v6689 = vpack.c.b16 %v6593, %v6591
    %v6690 = vpack.c.b16 %v6596, %v6594
    %v6691 = vpack.c.b16 %v6597, %v6595
    %v6692 = vpack.c.b16 %v6600, %v6598
    %v6693 = vpack.c.b16 %v6601, %v6599
    %v6694 = vpack.c.b16 %v6604, %v6602
    %v6695 = vpack.c.b16 %v6605, %v6603
    %v6696 = vpack.c.b16 %v6608, %v6606
    %v6697 = vpack.c.b16 %v6609, %v6607
    %v6698 = vpack.c.b16 %v6612, %v6610
    %v6699 = vpack.c.b16 %v6613, %v6611
    %v6700 = vpack.c.b16 %v6616, %v6614
    %v6701 = vpack.c.b16 %v6617, %v6615
    %v6702 = vpack.c.b16 %v6620, %v6618
    %v6703 = vpack.c.b16 %v6621, %v6619
    %v6704 = vpack.c.b16 %v6624, %v6622
    %v6705 = vpack.c.b16 %v6625, %v6623
    %v6706 = vpack.c.b16 %v6628, %v6626
    %v6707 = vpack.c.b16 %v6629, %v6627
    %v6708 = vpack.c.b16 %v6632, %v6630
    %v6709 = vpack.c.b16 %v6633, %v6631
    %v6710 = vpack.c.b16 %v6636, %v6634
    %v6711 = vpack.c.b16 %v6637, %v6635
    %v6712 = vpack.c.b16 %v6640, %v6638
    %v6713 = vpack.c.b16 %v6641, %v6639
    %v6714 = vpack.c.b16 %v6644, %v6642
    %v6715 = vpack.c.b16 %v6645, %v6643
    %v6716 = vpack.c.b16 %v6648, %v6646
    %v6717 = vpack.c.b16 %v6649, %v6647
    %v6718 = vpack.c.b16 %v6652, %v6650
    %v6719 = vpack.c.b16 %v6653, %v6651
    %v6720 = vpack.c.b16 %v6656, %v6654
    %v6721 = vpack.c.b16 %v6657, %v6655
    %6786 = vmatprep.subr.bf16.mxu0 %v6659
    %6787 = vmatpush1.bf16.msra.mxu0 %v6658
    %6788 = vmatprep.subr.bf16.mxu0 %v6661
    %6789 = vmatpush1.bf16.msra.mxu0 %v6660
    %6790 = vmatprep.subr.bf16.mxu0 %v6663
    %6791 = vmatpush1.bf16.msra.mxu0 %v6662
    %6792 = vmatprep.subr.bf16.mxu0 %v6665
    %6793 = vmatpush1.bf16.msra.mxu0 %v6664
    %6794 = vmatprep.subr.bf16.mxu0 %v6667
    %6795 = vmatpush1.bf16.msra.mxu0 %v6666
    %6796 = vmatprep.subr.bf16.mxu0 %v6669
    %6797 = vmatpush1.bf16.msra.mxu0 %v6668
    %6798 = vmatprep.subr.bf16.mxu0 %v6671
    %6799 = vmatpush1.bf16.msra.mxu0 %v6670
    %6800 = vmatprep.subr.bf16.mxu0 %v6673
    %6801 = vmatpush1.bf16.msra.mxu0 %v6672
    %6802 = vmatprep.subr.bf16.mxu0 %v6675
    %6803 = vmatpush1.bf16.msra.mxu0 %v6674
    %6804 = vmatprep.subr.bf16.mxu0 %v6677
    %6805 = vmatpush1.bf16.msra.mxu0 %v6676
    %6806 = vmatprep.subr.bf16.mxu0 %v6679
    %6807 = vmatpush1.bf16.msra.mxu0 %v6678
    %6808 = vmatprep.subr.bf16.mxu0 %v6681
    %6809 = vmatpush1.bf16.msra.mxu0 %v6680
    %6810 = vmatprep.subr.bf16.mxu0 %v6683
    %6811 = vmatpush1.bf16.msra.mxu0 %v6682
    %6812 = vmatprep.subr.bf16.mxu0 %v6685
    %6813 = vmatpush1.bf16.msra.mxu0 %v6684
    %6814 = vmatprep.subr.bf16.mxu0 %v6687
    %6815 = vmatpush1.bf16.msra.mxu0 %v6686
    %6816 = vmatprep.subr.bf16.mxu0 %v6689
    %6817 = vmatpush1.bf16.msra.mxu0 %v6688
    %6818 = vmatprep.mubr.bf16.mxu0 %v6387
    %6819 = vmatmul.mubr.bf16.gmra.mrb[0].mxu0 %v6386
    %v6820 = vpop.f32.mrb[0].mxu0
    %v6821 = vadd.f32 %v6459, %v6820
    %v6822 = vpop.f32.mrb[0].mxu0
    %v6823 = vadd.f32 %v6463, %v6822
    %v6824 = vpop.f32.mrb[0].mxu0
    %v6825 = vadd.f32 %v6459, %v6824
    %v6826 = vpop.f32.mrb[0].mxu0
    %v6827 = vadd.f32 %v6463, %v6826
    %6828 = vdwg.mxu0
    %6829 = vmatprep.subr.bf16.mxu0 %v6691
    %6830 = vmatpush1.bf16.msra.mxu0 %v6690
    %6831 = vmatprep.subr.bf16.mxu0 %v6693
    %6832 = vmatpush1.bf16.msra.mxu0 %v6692
    %6833 = vmatprep.subr.bf16.mxu0 %v6695
    %6834 = vmatpush1.bf16.msra.mxu0 %v6694
    %6835 = vmatprep.subr.bf16.mxu0 %v6697
    %6836 = vmatpush1.bf16.msra.mxu0 %v6696
    %6837 = vmatprep.subr.bf16.mxu0 %v6699
    %6838 = vmatpush1.bf16.msra.mxu0 %v6698
    %6839 = vmatprep.subr.bf16.mxu0 %v6701
    %6840 = vmatpush1.bf16.msra.mxu0 %v6700
    %6841 = vmatprep.subr.bf16.mxu0 %v6703
    %6842 = vmatpush1.bf16.msra.mxu0 %v6702
    %6843 = vmatprep.subr.bf16.mxu0 %v6705
    %6844 = vmatpush1.bf16.msra.mxu0 %v6704
    %6845 = vmatprep.subr.bf16.mxu0 %v6707
    %6846 = vmatpush1.bf16.msra.mxu0 %v6706
    %6847 = vmatprep.subr.bf16.mxu0 %v6709
    %6848 = vmatpush1.bf16.msra.mxu0 %v6708
    %6849 = vmatprep.subr.bf16.mxu0 %v6711
    %6850 = vmatpush1.bf16.msra.mxu0 %v6710
    %6851 = vmatprep.subr.bf16.mxu0 %v6713
    %6852 = vmatpush1.bf16.msra.mxu0 %v6712
    %6853 = vmatprep.subr.bf16.mxu0 %v6715
    %6854 = vmatpush1.bf16.msra.mxu0 %v6714
    %6855 = vmatprep.subr.bf16.mxu0 %v6717
    %6856 = vmatpush1.bf16.msra.mxu0 %v6716
    %6857 = vmatprep.subr.bf16.mxu0 %v6719
    %6858 = vmatpush1.bf16.msra.mxu0 %v6718
    %6859 = vmatprep.subr.bf16.mxu0 %v6721
    %6860 = vmatpush1.bf16.msra.mxu0 %v6720
    %6861 = vmatprep.mubr.bf16.mxu0 %v6389
    %6862 = vmatmul.mubr.bf16.gmra.mrb[0].mxu0 %v6388
    %v6863 = vpop.f32.mrb[0].mxu0
    %v6864 = vadd.f32 %v6821, %v6863
    %v6865 = vpop.f32.mrb[0].mxu0
    %v6866 = vadd.f32 %v6823, %v6865
    %v6867 = vpop.f32.mrb[0].mxu0
    %v6868 = vadd.f32 %v6825, %v6867
    %v6869 = vpop.f32.mrb[0].mxu0
    %v6870 = vadd.f32 %v6827, %v6869
    %6871 = vdwg.mxu0
    %v6872 = vadd.f32 %v5401, %v5404
    %v6873 = vmul.f32 %v6872, 0.5
    %v6874 = vmax.f32 %v3243, 0.0
    %v6875 = vpack.c.bf16 %v6874, %v6874
    %v6876 = vld [vmem:[%s18] sm:$0xf]
    %v6877 = vld [vmem:[%s18 + $0x4] sm:$0xf]
    %v6878 = vld [vmem:[%s18 + $0x8] sm:$0xf]
    %v6879 = vld [vmem:[%s18 + $0xc] sm:$0xf]
    %v6880 = vld [vmem:[%s18 + $0x10] sm:$0xf]
    %v6881 = vld [vmem:[%s18 + $0x14] sm:$0xf]
    %v6882 = vld [vmem:[%s18 + $0x18] sm:$0xf]
    %v6883 = vld [vmem:[%s18 + $0x1c] sm:$0xf]
    %v6884 = vld [vmem:[%s18 + $0x20] sm:$0xf]
    %v6885 = vld [vmem:[%s18 + $0x24] sm:$0xf]
    %v6886 = vld [vmem:[%s18 + $0x28] sm:$0xf]
    %v6887 = vld [vmem:[%s18 + $0x2c] sm:$0xf]
    %v6888 = vld [vmem:[%s18 + $0x30] sm:$0xf]
    %v6889 = vld [vmem:[%s18 + $0x34] sm:$0xf]
    %v6890 = vld [vmem:[%s18 + $0x38] sm:$0xf]
    %v6891 = vld [vmem:[%s18 + $0x3c] sm:$0xf]
    %v6892 = vmax.f32 %v6873, 0.0
    %v6893 = vpack.c.bf16 %v6892, %v6892
    %v6894 = vld [vmem:[%s19] sm:$0xf]
    %v6895 = vld [vmem:[%s19 + $0x4] sm:$0xf]
    %v6896 = vld [vmem:[%s19 + $0x8] sm:$0xf]
    %v6897 = vld [vmem:[%s19 + $0xc] sm:$0xf]
    %v6898 = vld [vmem:[%s19 + $0x10] sm:$0xf]
    %v6899 = vld [vmem:[%s19 + $0x14] sm:$0xf]
    %v6900 = vld [vmem:[%s19 + $0x18] sm:$0xf]
    %v6901 = vld [vmem:[%s19 + $0x1c] sm:$0xf]
    %v6902 = vld [vmem:[%s19 + $0x20] sm:$0xf]
    %v6903 = vld [vmem:[%s19 + $0x24] sm:$0xf]
    %v6904 = vld [vmem:[%s19 + $0x28] sm:$0xf]
    %v6905 = vld [vmem:[%s19 + $0x2c] sm:$0xf]
    %v6906 = vld [vmem:[%s19 + $0x30] sm:$0xf]
    %v6907 = vld [vmem:[%s19 + $0x34] sm:$0xf]
    %v6908 = vld [vmem:[%s19 + $0x38] sm:$0xf]
    %v6909 = vld [vmem:[%s19 + $0x3c] sm:$0xf]
    %v6926 = vunpack.c.l.b16 %v6894
    %v6927 = vunpack.c.l.b16 %v6895
    %v6928 = vunpack.c.l.b16 %v6896
    %v6929 = vunpack.c.l.b16 %v6897
    %v6930 = vunpack.c.l.b16 %v6898
    %v6931 = vunpack.c.l.b16 %v6899
    %v6932 = vunpack.c.l.b16 %v6900
    %v6933 = vunpack.c.l.b16 %v6901
    %v6934 = vunpack.c.l.b16 %v6902
    %v6935 = vunpack.c.l.b16 %v6903
    %v6936 = vunpack.c.l.b16 %v6904
    %v6937 = vunpack.c.l.b16 %v6905
    %v6938 = vunpack.c.l.b16 %v6906
    %v6939 = vunpack.c.l.b16 %v6907
    %v6940 = vunpack.c.l.b16 %v6908
    %v6941 = vunpack.c.l.b16 %v6909
    %v6942 = vpack.c.b16 %v6927, %v6926
    %v6943 = vpack.c.b16 %v6929, %v6928
    %v6944 = vpack.c.b16 %v6931, %v6930
    %v6945 = vpack.c.b16 %v6933, %v6932
    %v6946 = vpack.c.b16 %v6935, %v6934
    %v6947 = vpack.c.b16 %v6937, %v6936
    %v6948 = vpack.c.b16 %v6939, %v6938
    %v6949 = vpack.c.b16 %v6941, %v6940
    %6958 = vmatprep.subr.bf16.mxu0 0
    %6959 = vmatpush1.bf16.msra.mxu0 %v6942
    %6960 = vmatprep.subr.bf16.mxu0 0
    %6961 = vmatpush1.bf16.msra.mxu0 %v6943
    %6962 = vmatprep.subr.bf16.mxu0 0
    %6963 = vmatpush1.bf16.msra.mxu0 %v6944
    %6964 = vmatprep.subr.bf16.mxu0 0
    %6965 = vmatpush1.bf16.msra.mxu0 %v6945
    %6966 = vmatprep.subr.bf16.mxu0 0
    %6967 = vmatpush1.bf16.msra.mxu0 %v6946
    %6968 = vmatprep.subr.bf16.mxu0 0
    %6969 = vmatpush1.bf16.msra.mxu0 %v6947
    %6970 = vmatprep.subr.bf16.mxu0 0
    %6971 = vmatpush1.bf16.msra.mxu0 %v6948
    %6972 = vmatprep.subr.bf16.mxu0 0
    %6973 = vmatpush1.bf16.msra.mxu0 %v6949
    %6974 = vmatprep.subr.bf16.mxu0 0
    %6975 = vmatpush1.bf16.msra.mxu0 0
    %6976 = vmatprep.subr.bf16.mxu0 0
    %6977 = vmatpush1.bf16.msra.mxu0 0
    %6978 = vmatprep.subr.bf16.mxu0 0
    %6979 = vmatpush1.bf16.msra.mxu0 0
    %6980 = vmatprep.subr.bf16.mxu0 0
    %6981 = vmatpush1.bf16.msra.mxu0 0
    %6982 = vmatprep.subr.bf16.mxu0 0
    %6983 = vmatpush1.bf16.msra.mxu0 0
    %6984 = vmatprep.subr.bf16.mxu0 0
    %6985 = vmatpush1.bf16.msra.mxu0 0
    %6986 = vmatprep.subr.bf16.mxu0 0
    %6987 = vmatpush1.bf16.msra.mxu0 0
    %6988 = vmatprep.subr.bf16.mxu0 0
    %6989 = vmatpush1.bf16.msra.mxu0 0
    %6990 = vmatprep.mubr.bf16.mxu0 0
    %6991 = vmatmul.mubr.bf16.gmra.mrb[0].mxu0 %v6893
    %v6992 = vpop.f32.mrb[0].mxu0
    %v6993 = vadd.f32 0.0, %v6992
    %v6994 = vpop.f32.mrb[0].mxu0
    %v6995 = vpop.f32.mrb[0].mxu0
    %v6996 = vpop.f32.mrb[0].mxu0
    %6997 = vdwg.mxu0
    %v7014 = vunpack.c.l.b16 %v6876
    %v7015 = vunpack.c.l.b16 %v6877
    %v7016 = vunpack.c.l.b16 %v6878
    %v7017 = vunpack.c.l.b16 %v6879
    %v7018 = vunpack.c.l.b16 %v6880
    %v7019 = vunpack.c.l.b16 %v6881
    %v7020 = vunpack.c.l.b16 %v6882
    %v7021 = vunpack.c.l.b16 %v6883
    %v7022 = vunpack.c.l.b16 %v6884
    %v7023 = vunpack.c.l.b16 %v6885
    %v7024 = vunpack.c.l.b16 %v6886
    %v7025 = vunpack.c.l.b16 %v6887
    %v7026 = vunpack.c.l.b16 %v6888
    %v7027 = vunpack.c.l.b16 %v6889
    %v7028 = vunpack.c.l.b16 %v6890
    %v7029 = vunpack.c.l.b16 %v6891
    %v7030 = vpack.c.b16 %v7015, %v7014
    %v7031 = vpack.c.b16 %v7017, %v7016
    %v7032 = vpack.c.b16 %v7019, %v7018
    %v7033 = vpack.c.b16 %v7021, %v7020
    %v7034 = vpack.c.b16 %v7023, %v7022
    %v7035 = vpack.c.b16 %v7025, %v7024
    %v7036 = vpack.c.b16 %v7027, %v7026
    %v7037 = vpack.c.b16 %v7029, %v7028
    %7046 = vmatprep.subr.bf16.mxu0 0
    %7047 = vmatpush1.bf16.msra.mxu0 %v7030
    %7048 = vmatprep.subr.bf16.mxu0 0
    %7049 = vmatpush1.bf16.msra.mxu0 %v7031
    %7050 = vmatprep.subr.bf16.mxu0 0
    %7051 = vmatpush1.bf16.msra.mxu0 %v7032
    %7052 = vmatprep.subr.bf16.mxu0 0
    %7053 = vmatpush1.bf16.msra.mxu0 %v7033
    %7054 = vmatprep.subr.bf16.mxu0 0
    %7055 = vmatpush1.bf16.msra.mxu0 %v7034
    %7056 = vmatprep.subr.bf16.mxu0 0
    %7057 = vmatpush1.bf16.msra.mxu0 %v7035
    %7058 = vmatprep.subr.bf16.mxu0 0
    %7059 = vmatpush1.bf16.msra.mxu0 %v7036
    %7060 = vmatprep.subr.bf16.mxu0 0
    %7061 = vmatpush1.bf16.msra.mxu0 %v7037
    %7062 = vmatprep.subr.bf16.mxu0 0
    %7063 = vmatpush1.bf16.msra.mxu0 0
    %7064 = vmatprep.subr.bf16.mxu0 0
    %7065 = vmatpush1.bf16.msra.mxu0 0
    %7066 = vmatprep.subr.bf16.mxu0 0
    %7067 = vmatpush1.bf16.msra.mxu0 0
    %7068 = vmatprep.subr.bf16.mxu0 0
    %7069 = vmatpush1.bf16.msra.mxu0 0
    %7070 = vmatprep.subr.bf16.mxu0 0
    %7071 = vmatpush1.bf16.msra.mxu0 0
    %7072 = vmatprep.subr.bf16.mxu0 0
    %7073 = vmatpush1.bf16.msra.mxu0 0
    %7074 = vmatprep.subr.bf16.mxu0 0
    %7075 = vmatpush1.bf16.msra.mxu0 0
    %7076 = vmatprep.subr.bf16.mxu0 0
    %7077 = vmatpush1.bf16.msra.mxu0 0
    %7078 = vmatprep.mubr.bf16.mxu0 0
    %7079 = vmatmul.mubr.bf16.gmra.mrb[0].mxu0 %v6875
    %v7080 = vpop.f32.mrb[0].mxu0
    %v7081 = vadd.f32 %v6993, %v7080
    %v7082 = vpop.f32.mrb[0].mxu0
    %v7083 = vpop.f32.mrb[0].mxu0
    %v7084 = vpop.f32.mrb[0].mxu0
    %7085 = vdwg.mxu0
    %v7086 = vld [vmem:[%s20] sm:$0x1]
    %v7088 = vlaneseq
    %v7089 = vshrl.u32 %v7088, 7
    %v7090 = vsub.s32 0, %v7089
    %v7091 = vrot.slane %v7086, %v7090
    %v7093 = vadd.f32 %v7081, %v7091
    %7094 = vst [vmem:[%s21] sm:$0xff] %v7093
    %7095 = vst [vmem:[%s22] sm:$0xff] %v6864
    %7096 = vst [vmem:[%s22 + $0x8] sm:$0xff] %v6866
    %7097 = vst [vmem:[%s22 + $0x10] sm:$0xff] %v6868
    %7098 = vst [vmem:[%s22 + $0x18] sm:$0xff] %v6870
    // Predicated region
    $region110: #{joint_tsn_forward.1} parent=1 // pred_check
      _
    $region111: #{joint_tsn_forward.1} parent=1 // pred_check_branch
      %7100 = sbr.rel (0) target = $region113
    $region112: #{joint_tsn_forward.1} parent=1 // pred_region
      _
    $region113: #{joint_tsn_forward.1} parent=1 // pred_fallthru
      _
    // Predicated region
    $region114: #{joint_tsn_forward.1} parent=1 // pred_check
      _
    $region115: #{joint_tsn_forward.1} parent=1 // pred_check_branch
      %7102 = sbr.rel (0) target = $region117
    $region116: #{joint_tsn_forward.1} parent=1 // pred_region
      _
    $region117: #{joint_tsn_forward.1} parent=1 // pred_fallthru
      _
    // Predicated region
    $region118: #{joint_tsn_forward.1} parent=1 // pred_check
      _
    $region119: #{joint_tsn_forward.1} parent=1 // pred_check_branch
      %7104 = sbr.rel (0) target = $region121
    $region120: #{joint_tsn_forward.1} parent=1 // pred_region
      _
    $region121: #{joint_tsn_forward.1} parent=1 // pred_fallthru
      _
    // Predicated region
    $region122: #{joint_tsn_forward.1} parent=1 // pred_check
      _
    $region123: #{joint_tsn_forward.1} parent=1 // pred_check_branch
      %7106 = sbr.rel (0) target = $region125
    $region124: #{joint_tsn_forward.1} parent=1 // pred_region
      _
    $region125: #{joint_tsn_forward.1} parent=1 // pred_fallthru
      _
    %7107 = vsyncpa [#allocation3], 1
    %7108 = vsyncpa [#allocation5], 1
    %7109 = vsyncpa [#allocation8], 1
    %7110 = vsyncpa [#allocation11], 1

</llo_original>
